<compile_context>
chip_gen: v5e
topology: v5e:2x2
jax: 0.10.0
libtpu: 0.0.40
codegen_flags: <defaults>
</compile_context>

<pallas_src>
import functools

import jax
import jax.numpy as jnp
from jax.experimental import pallas as pl
from jax.experimental.pallas import tpu as pltpu


# ----------------------------------------------------------------------------
# Generation-aware VMEM budget (~75% of physical: 48 MiB v7x, 96 MiB v5e/v6e)
# ----------------------------------------------------------------------------
def _vmem_limit_bytes():
    cap = 64 * 1024 * 1024
    try:
        cap = int(pltpu.get_tpu_info().vmem_capacity_bytes)
    except Exception:
        pass
    return (cap * 3) // 4


def _round_up(x, m):
    return ((x + m - 1) // m) * m


# ----------------------------------------------------------------------------
# Fused single-pass kernel: means -> gates -> cross gating -> concat conv
# (per-batch (C, HWp) slab resident in VMEM; x and y read from HBM once)
# ----------------------------------------------------------------------------
def _fused_kernel(x_ref, y_ref,            # (C, HWp) f32 per-batch blocks
                  ax_ref, cx_ref,           # fused gate weights, x path: (C,C),(C,1)
                  ay_ref, cy_ref,           # fused gate weights, y path
                  wcx_ref, wcy_ref,         # (C, C) bf16 halves of concat-conv weight
                  bc_ref,                   # (C, 1) f32 bias
                  o_ref,                    # (C, HWp) f32 output
                  *, inv_hw):
    x = x_ref[...]
    y = y_ref[...]
    # Channel means over the spatial (lane) axis.  Padded columns are zero,
    # so dividing by the true HW is exact.
    x_mean = jnp.sum(x, axis=-1, keepdims=True) * inv_hw
    y_mean = jnp.sum(y, axis=-1, keepdims=True) * inv_hw
    # fc(mean(conv(x))) collapsed into one tiny (C,C)@(C,1) matmul + bias.
    zx = jnp.dot(ax_ref[...], x_mean, preferred_element_type=jnp.float32) + cx_ref[...]
    zy = jnp.dot(ay_ref[...], y_mean, preferred_element_type=jnp.float32) + cy_ref[...]
    # Exact sigmoid (runs once per batch; approx reciprocal buys nothing here).
    x_sig = 1.0 / (1.0 + jnp.exp(-zx))
    y_sig = 1.0 / (1.0 + jnp.exp(-zy))
    # Cross gating; bf16 for the MXU (f32 accumulate).
    x_att = (x * y_sig).astype(jnp.bfloat16)
    y_att = (y * x_sig).astype(jnp.bfloat16)
    # concat along channels + 1x1 conv == sum of two (C,C)@(C,HWp) matmuls.
    out = (jnp.dot(wcx_ref[...], x_att, preferred_element_type=jnp.float32)
           + jnp.dot(wcy_ref[...], y_att, preferred_element_type=jnp.float32)
           + bc_ref[...])
    o_ref[...] = out.astype(o_ref.dtype)


# ----------------------------------------------------------------------------
# Fallback pass 1: per-batch channel sums (gate math happens in plain JAX)
# ----------------------------------------------------------------------------
def _sums_kernel(x_ref, y_ref, xs_ref, ys_ref):
    t = pl.program_id(1)

    @pl.when(t == 0)
    def _init():
        xs_ref[...] = jnp.zeros_like(xs_ref)
        ys_ref[...] = jnp.zeros_like(ys_ref)

    xs_ref[...] += jnp.sum(x_ref[...], axis=-1, keepdims=True)
    ys_ref[...] += jnp.sum(y_ref[...], axis=-1, keepdims=True)


# ----------------------------------------------------------------------------
# Fallback pass 2: streaming cross gating + concat + 1x1 conv over HW tiles
# ----------------------------------------------------------------------------
def _gated_conv_kernel(x_ref, y_ref,          # (C, T) f32 tiles
                       xsig_ref, ysig_ref,    # (C, 1) f32 gates
                       wcx_ref, wcy_ref,      # (C, C) bf16
                       bc_ref,                # (C, 1) f32
                       o_ref):                # (C, T) f32
    x_att = (x_ref[...] * ysig_ref[...]).astype(jnp.bfloat16)
    y_att = (y_ref[...] * xsig_ref[...]).astype(jnp.bfloat16)
    out = (jnp.dot(wcx_ref[...], x_att, preferred_element_type=jnp.float32)
           + jnp.dot(wcy_ref[...], y_att, preferred_element_type=jnp.float32)
           + bc_ref[...])
    o_ref[...] = out.astype(o_ref.dtype)


# ----------------------------------------------------------------------------
# Tile selection for the two-pass fallback: VMEM-budget derived
# ----------------------------------------------------------------------------
def _pick_hw_tile(hw, C, vmem_limit, max_hw_tile=None):
    # Double-buffered x/y/out blocks (6 slabs) + in-kernel temporaries
    # (~2 more f32-equivalent slabs) must stay under ~half the VMEM budget.
    budget_cols = (vmem_limit // 2) // (8 * C * 4)
    t = max(128, (budget_cols // 128) * 128)
    t = min(t, _round_up(hw, 128))
    if max_hw_tile is not None:
        t = min(t, max(128, (max_hw_tile // 128) * 128))
    return t


# ----------------------------------------------------------------------------
# Wrapper
# ----------------------------------------------------------------------------
def cross_attention_pallas(x_nchw, y_nchw, params, *,
                           force_two_pass=False, max_hw_tile=None):
    """x_nchw, y_nchw: (B, C, H, W) float32. Returns (B, C, H, W) float32."""
    B, C, H, W = x_nchw.shape
    HW = H * W
    # NCHW -> (B, C, HW): pure reshape, no transpose / extra HBM pass.
    x = x_nchw.reshape(B, C, HW)
    y = y_nchw.reshape(B, C, HW)

    (wx, bx, wy, by, fwx, fbx, fwy, fby, wcx, wcy, bc) = params

    # Linearity rewrites, done once outside the kernels:
    #   mean(conv1x1(x))      == convW @ mean(x) + convb
    #   fc(mean(conv1x1(x)))  == (fcW@convW) @ mean(x) + (fcW@convb + fcb)
    hi = jax.lax.Precision.HIGHEST
    ax = jnp.dot(fwx, wx, precision=hi)
    cx = jnp.dot(fwx, bx, precision=hi) + fbx
    ay = jnp.dot(fwy, wy, precision=hi)
    cy = jnp.dot(fwy, by, precision=hi) + fby
    wcx_bf16 = wcx.astype(jnp.bfloat16)
    wcy_bf16 = wcy.astype(jnp.bfloat16)

    vmem_limit = _vmem_limit_bytes()
    inv_hw = 1.0 / float(HW)

    hw128 = _round_up(HW, 128)
    # Fused-path VMEM estimate: double-buffered x/y/out blocks (6 slabs) plus
    # in-kernel temporaries (x_att/y_att bf16, matmul f32 temp, ...) plus the
    # (small) double-buffered weights.  Conservative factor of 12 slabs.
    weight_bytes = 2 * (2 * C * C * 4 + 2 * C * C * 2 + 3 * C * 4)
    fused_bytes = 12 * C * hw128 * 4 + weight_bytes
    use_fused = (not force_two_pass) and (fused_bytes <= vmem_limit)

    if use_fused:
        # ---- single fused pass: grid (B,), whole (C, HWp) slab per batch ----
        HWp = hw128
        if HWp != HW:
            pad = HWp - HW
            x = jnp.pad(x, ((0, 0), (0, 0), (0, pad)))
            y = jnp.pad(y, ((0, 0), (0, 0), (0, pad)))

        img_spec = pl.BlockSpec((None, C, HWp), lambda b: (b, 0, 0))
        mat_spec = pl.BlockSpec((C, C), lambda b: (0, 0))
        col_spec = pl.BlockSpec((C, 1), lambda b: (0, 0))

        out = pl.pallas_call(
            functools.partial(_fused_kernel, inv_hw=inv_hw),
            out_shape=jax.ShapeDtypeStruct((B, C, HWp), jnp.float32),
            grid=(B,),
            in_specs=[img_spec, img_spec,
                      mat_spec, col_spec, mat_spec, col_spec,
                      mat_spec, mat_spec, col_spec],
            out_specs=img_spec,
            compiler_params=pltpu.CompilerParams(
                dimension_semantics=("parallel",),
                vmem_limit_bytes=vmem_limit),
        )(x, y, ax, cx, ay, cy, wcx_bf16, wcy_bf16, bc)
    else:
        # ---- two-pass fallback for slabs that do not fit VMEM --------------
        tile = _pick_hw_tile(HW, C, vmem_limit, max_hw_tile)
        HWp = _round_up(HW, tile)
        if HWp != HW:
            pad = HWp - HW
            x = jnp.pad(x, ((0, 0), (0, 0), (0, pad)))
            y = jnp.pad(y, ((0, 0), (0, 0), (0, pad)))
        n_t = HWp // tile

        img_spec = pl.BlockSpec((None, C, tile), lambda b, t: (b, 0, t))
        mat_spec = pl.BlockSpec((C, C), lambda b, t: (0, 0))
        col_spec = pl.BlockSpec((C, 1), lambda b, t: (0, 0))
        gate_spec = pl.BlockSpec((None, C, 1), lambda b, t: (b, 0, 0))

        # Pass 1: channel sums only (no weights in-kernel).
        # (On v7x with B==1 this keeps one TensorCore idle; splitting HW into
        #  two parallel super-chunks would recover it — second-order here.)
        x_sum, y_sum = pl.pallas_call(
            _sums_kernel,
            out_shape=(jax.ShapeDtypeStruct((B, C, 1), jnp.float32),
                       jax.ShapeDtypeStruct((B, C, 1), jnp.float32)),
            grid=(B, n_t),
            in_specs=[img_spec, img_spec],
            out_specs=(gate_spec, gate_spec),
            compiler_params=pltpu.CompilerParams(
                dimension_semantics=("parallel", "arbitrary"),
                vmem_limit_bytes=vmem_limit),
        )(x, y)

        # Tiny gate math in plain JAX (O(B*C^2) flops, negligible).
        x_fc = jnp.einsum('oi,bis->bos', ax, x_sum * inv_hw, precision=hi) + cx[None]
        y_fc = jnp.einsum('oi,bis->bos', ay, y_sum * inv_hw, precision=hi) + cy[None]
        x_sig = jax.nn.sigmoid(x_fc)
        y_sig = jax.nn.sigmoid(y_fc)

        # Pass 2: streaming gated concat-conv over big VMEM-derived tiles.
        out = pl.pallas_call(
            _gated_conv_kernel,
            out_shape=jax.ShapeDtypeStruct((B, C, HWp), jnp.float32),
            grid=(B, n_t),
            in_specs=[img_spec, img_spec,
                      gate_spec, gate_spec,
                      mat_spec, mat_spec, col_spec],
            out_specs=img_spec,
            compiler_params=pltpu.CompilerParams(
                dimension_semantics=("parallel", "parallel"),
                vmem_limit_bytes=vmem_limit),
        )(x, y, x_sig, y_sig, wcx_bf16, wcy_bf16, bc)

    if HWp != HW:
        out = out[:, :, :HW]
    return out.reshape(B, C, H, W)


# ----------------------------------------------------------------------------
# Deterministic synthetic parameters (the PyTorch module builds them lazily)
# ----------------------------------------------------------------------------
def init_params(key, C):
    """PyTorch-layout parameters:
      conv1x1_x/y weight (C_out, C_in), bias (C, 1)
      fc_x/y     weight (out, in),      bias (C, 1)
      conv1x1_concat weight (C_out, 2*C_in) split into two (C, C) halves.
    """
    ks = jax.random.split(key, 10)
    s = 0.1
    wx = s * jax.random.normal(ks[0], (C, C), jnp.float32)
    bx = s * jax.random.normal(ks[1], (C, 1), jnp.float32)
    wy = s * jax.random.normal(ks[2], (C, C), jnp.float32)
    by = s * jax.random.normal(ks[3], (C, 1), jnp.float32)
    fwx = s * jax.random.normal(ks[4], (C, C), jnp.float32)
    fbx = s * jax.random.normal(ks[5], (C, 1), jnp.float32)
    fwy = s * jax.random.normal(ks[6], (C, C), jnp.float32)
    fby = s * jax.random.normal(ks[7], (C, 1), jnp.float32)
    wc = s * jax.random.normal(ks[8], (C, 2 * C), jnp.float32)
    bc = s * jax.random.normal(ks[9], (C, 1), jnp.float32)
    wcx = wc[:, :C]   # multiplies the x_attention half of the concat
    wcy = wc[:, C:]   # multiplies the y_attention half
    return (wx, bx, wy, by, fwx, fbx, fwy, fby, wcx, wcy, bc)


# ----------------------------------------------------------------------------
# Pure-JAX f32 reference in the exact PyTorch op order (conv -> pool -> fc ...)
# ----------------------------------------------------------------------------
def cross_attention_reference(x_nchw, y_nchw, params):
    (wx, bx, wy, by, fwx, fbx, fwy, fby, wcx, wcy, bc) = params
    B, C, H, W = x_nchw.shape
    xf = x_nchw.reshape(B, C, H * W)
    yf = y_nchw.reshape(B, C, H * W)
    x_conv = jnp.einsum('oi,bip->bop', wx, xf) + bx[None]
    y_conv = jnp.einsum('oi,bip->bop', wy, yf) + by[None]
    x_pool = jnp.mean(x_conv, axis=-1, keepdims=True)            # (B, C, 1)
    y_pool = jnp.mean(y_conv, axis=-1, keepdims=True)
    x_sig = jax.nn.sigmoid(jnp.einsum('oi,bip->bop', fwx, x_pool) + fbx[None])
    y_sig = jax.nn.sigmoid(jnp.einsum('oi,bip->bop', fwy, y_pool) + fby[None])
    x_att = xf * y_sig
    y_att = yf * x_sig
    out = (jnp.einsum('oi,bip->bop', wcx, x_att)
           + jnp.einsum('oi,bip->bop', wcy, y_att) + bc[None])
    return out.reshape(B, C, H, W)


if __name__ == "__main__":
    key = jax.random.PRNGKey(0)
    k_x, k_y, k_p, k_x3, k_y3, k_p3 = jax.random.split(key, 6)

    # Case 1: fused single-pass path (TPU-shaped: C mult of 8, HW mult of 128).
    B, C, H, W = 2, 128, 32, 32
    x = jax.random.normal(k_x, (B, C, H, W), jnp.float32)
    y = jax.random.normal(k_y, (B, C, H, W), jnp.float32)
    params = init_params(k_p, C)

    fused_fn = jax.jit(cross_attention_pallas)
    out = jax.block_until_ready(fused_fn(x, y, params))
    ref = cross_attention_reference(x, y, params)
    assert out.shape == (B, C, H, W)
    err = float(jnp.max(jnp.abs(out - ref)))
    # bf16 MXU inputs in the concat-conv only (exact sigmoid) -> tighter tol.
    assert jnp.allclose(out, ref, atol=2e-2, rtol=2e-2), err

    # Case 2: forced two-pass fallback with a small tile to exercise the
    # multi-tile channel-sum accumulation and the streaming gated conv.
    two_pass_fn = jax.jit(functools.partial(
        cross_attention_pallas, force_two_pass=True, max_hw_tile=256))
    out2 = jax.block_until_ready(two_pass_fn(x, y, params))
    err2 = float(jnp.max(jnp.abs(out2 - ref)))
    assert jnp.allclose(out2, ref, atol=2e-2, rtol=2e-2), err2

    # Case 3: fused path with HW not a multiple of 128 (30*30=900 -> pad 1024).
    B3, C3, H3, W3 = 1, 64, 30, 30
    x3 = jax.random.normal(k_x3, (B3, C3, H3, W3), jnp.float32)
    y3 = jax.random.normal(k_y3, (B3, C3, H3, W3), jnp.float32)
    params3 = init_params(k_p3, C3)
    out3 = jax.block_until_ready(fused_fn(x3, y3, params3))
    ref3 = cross_attention_reference(x3, y3, params3)
    err3 = float(jnp.max(jnp.abs(out3 - ref3)))
    assert jnp.allclose(out3, ref3, atol=2e-2, rtol=2e-2), err3

    print("KERNEL_OK")
</pallas_src>

<mosaic_0001>
module attributes {stable_mosaic.version = 11 : i64} {
  func.func @_fused_kernel(%arg0: i32, %arg1: memref<1x128x1024xf32, #tpu.memory_space<vmem>>, %arg2: memref<1x128x1024xf32, #tpu.memory_space<vmem>>, %arg3: memref<128x128xf32, #tpu.memory_space<vmem>>, %arg4: memref<128x1xf32, #tpu.memory_space<vmem>>, %arg5: memref<128x128xf32, #tpu.memory_space<vmem>>, %arg6: memref<128x1xf32, #tpu.memory_space<vmem>>, %arg7: memref<128x128xbf16, #tpu.memory_space<vmem>>, %arg8: memref<128x128xbf16, #tpu.memory_space<vmem>>, %arg9: memref<128x1xf32, #tpu.memory_space<vmem>>, %arg10: memref<1x128x1024xf32, #tpu.memory_space<vmem>>) attributes {dimension_semantics = [#tpu.dimension_semantics<parallel>], iteration_bounds = array<i64: 2>, scalar_prefetch = 0 : i64, scratch_operands = 0 : i64, tpu.core_type = #tpu.core_type<tc>, window_params = [{transform_indices = @transform_0, window_bounds = array<i64: 1, 128, 1024>}, {transform_indices = @transform_1, window_bounds = array<i64: 1, 128, 1024>}, {pipeline_mode = #tpu.pipeline_mode<synchronous>, transform_indices = @transform_2, window_bounds = array<i64: 128, 128>}, {pipeline_mode = #tpu.pipeline_mode<synchronous>, transform_indices = @transform_3, window_bounds = array<i64: 128, 1>}, {pipeline_mode = #tpu.pipeline_mode<synchronous>, transform_indices = @transform_4, window_bounds = array<i64: 128, 128>}, {pipeline_mode = #tpu.pipeline_mode<synchronous>, transform_indices = @transform_5, window_bounds = array<i64: 128, 1>}, {pipeline_mode = #tpu.pipeline_mode<synchronous>, transform_indices = @transform_6, window_bounds = array<i64: 128, 128>}, {pipeline_mode = #tpu.pipeline_mode<synchronous>, transform_indices = @transform_7, window_bounds = array<i64: 128, 128>}, {pipeline_mode = #tpu.pipeline_mode<synchronous>, transform_indices = @transform_8, window_bounds = array<i64: 128, 1>}, {transform_indices = @transform_9, window_bounds = array<i64: 1, 128, 1024>}]} {
    %c0 = arith.constant 0 : index
    %c0_0 = arith.constant 0 : index
    %c0_1 = arith.constant 0 : index
    %0 = vector.load %arg1[%c0, %c0_0, %c0_1] : memref<1x128x1024xf32, #tpu.memory_space<vmem>>, vector<1x128x1024xf32>
    %1 = vector.shape_cast %0 : vector<1x128x1024xf32> to vector<128x1024xf32>
    %c0_2 = arith.constant 0 : index
    %c0_3 = arith.constant 0 : index
    %c0_4 = arith.constant 0 : index
    %2 = vector.load %arg2[%c0_2, %c0_3, %c0_4] : memref<1x128x1024xf32, #tpu.memory_space<vmem>>, vector<1x128x1024xf32>
    %3 = vector.shape_cast %2 : vector<1x128x1024xf32> to vector<128x1024xf32>
    %cst = arith.constant dense<0.000000e+00> : vector<128xf32>
    %4 = vector.multi_reduction <add>, %1, %cst [1] : vector<128x1024xf32> to vector<128xf32>
    %5 = vector.shape_cast %4 : vector<128xf32> to vector<128x1xf32>
    %cst_5 = arith.constant 9.765625E-4 : f32
    %6 = vector.broadcast %cst_5 : f32 to vector<128x1xf32>
    %7 = arith.mulf %5, %6 : vector<128x1xf32>
    %cst_6 = arith.constant dense<0.000000e+00> : vector<128xf32>
    %8 = vector.multi_reduction <add>, %3, %cst_6 [1] : vector<128x1024xf32> to vector<128xf32>
    %9 = vector.shape_cast %8 : vector<128xf32> to vector<128x1xf32>
    %cst_7 = arith.constant 9.765625E-4 : f32
    %10 = vector.broadcast %cst_7 : f32 to vector<128x1xf32>
    %11 = arith.mulf %9, %10 : vector<128x1xf32>
    %c0_8 = arith.constant 0 : index
    %c0_9 = arith.constant 0 : index
    %12 = vector.load %arg3[%c0_8, %c0_9] : memref<128x128xf32, #tpu.memory_space<vmem>>, vector<128x128xf32>
    %cst_10 = arith.constant dense<0.000000e+00> : vector<128x1xf32>
    %13 = tpu.matmul %12, %7, %cst_10 {dimension_numbers = #tpu.dot_dimension_numbers<[1], [0], [0], [1], [0, 0, 1, 1], [], []>} : vector<128x128xf32>, vector<128x1xf32>, vector<128x1xf32> -> vector<128x1xf32>
    %c0_11 = arith.constant 0 : index
    %c0_12 = arith.constant 0 : index
    %14 = vector.load %arg4[%c0_11, %c0_12] : memref<128x1xf32, #tpu.memory_space<vmem>>, vector<128x1xf32>
    %15 = arith.addf %13, %14 : vector<128x1xf32>
    %c0_13 = arith.constant 0 : index
    %c0_14 = arith.constant 0 : index
    %16 = vector.load %arg5[%c0_13, %c0_14] : memref<128x128xf32, #tpu.memory_space<vmem>>, vector<128x128xf32>
    %cst_15 = arith.constant dense<0.000000e+00> : vector<128x1xf32>
    %17 = tpu.matmul %16, %11, %cst_15 {dimension_numbers = #tpu.dot_dimension_numbers<[1], [0], [0], [1], [0, 0, 1, 1], [], []>} : vector<128x128xf32>, vector<128x1xf32>, vector<128x1xf32> -> vector<128x1xf32>
    %c0_16 = arith.constant 0 : index
    %c0_17 = arith.constant 0 : index
    %18 = vector.load %arg6[%c0_16, %c0_17] : memref<128x1xf32, #tpu.memory_space<vmem>>, vector<128x1xf32>
    %19 = arith.addf %17, %18 : vector<128x1xf32>
    %cst_18 = arith.constant 0.000000e+00 : f32
    %20 = vector.broadcast %cst_18 : f32 to vector<128x1xf32>
    %21 = arith.subf %20, %15 : vector<128x1xf32>
    %22 = math.exp %21 : vector<128x1xf32>
    %cst_19 = arith.constant 1.000000e+00 : f32
    %23 = vector.broadcast %cst_19 : f32 to vector<128x1xf32>
    %24 = arith.addf %23, %22 : vector<128x1xf32>
    %cst_20 = arith.constant 1.000000e+00 : f32
    %25 = vector.broadcast %cst_20 : f32 to vector<128x1xf32>
    %26 = arith.divf %25, %24 : vector<128x1xf32>
    %cst_21 = arith.constant 0.000000e+00 : f32
    %27 = vector.broadcast %cst_21 : f32 to vector<128x1xf32>
    %28 = arith.subf %27, %19 : vector<128x1xf32>
    %29 = math.exp %28 : vector<128x1xf32>
    %cst_22 = arith.constant 1.000000e+00 : f32
    %30 = vector.broadcast %cst_22 : f32 to vector<128x1xf32>
    %31 = arith.addf %30, %29 : vector<128x1xf32>
    %cst_23 = arith.constant 1.000000e+00 : f32
    %32 = vector.broadcast %cst_23 : f32 to vector<128x1xf32>
    %33 = arith.divf %32, %31 : vector<128x1xf32>
    %34 = vector.broadcast %33 : vector<128x1xf32> to vector<128x1024xf32>
    %35 = arith.mulf %1, %34 : vector<128x1024xf32>
    %36 = arith.truncf %35 : vector<128x1024xf32> to vector<128x1024xbf16>
    %37 = vector.broadcast %26 : vector<128x1xf32> to vector<128x1024xf32>
    %38 = arith.mulf %3, %37 : vector<128x1024xf32>
    %39 = arith.truncf %38 : vector<128x1024xf32> to vector<128x1024xbf16>
    %c0_24 = arith.constant 0 : index
    %c0_25 = arith.constant 0 : index
    %40 = vector.load %arg7[%c0_24, %c0_25] : memref<128x128xbf16, #tpu.memory_space<vmem>>, vector<128x128xbf16>
    %cst_26 = arith.constant dense<0.000000e+00> : vector<128x1024xf32>
    %41 = tpu.matmul %40, %36, %cst_26 {dimension_numbers = #tpu.dot_dimension_numbers<[1], [0], [0], [1], [0, 0, 1, 1], [], []>} : vector<128x128xbf16>, vector<128x1024xbf16>, vector<128x1024xf32> -> vector<128x1024xf32>
    %c0_27 = arith.constant 0 : index
    %c0_28 = arith.constant 0 : index
    %42 = vector.load %arg8[%c0_27, %c0_28] : memref<128x128xbf16, #tpu.memory_space<vmem>>, vector<128x128xbf16>
    %cst_29 = arith.constant dense<0.000000e+00> : vector<128x1024xf32>
    %43 = tpu.matmul %42, %39, %cst_29 {dimension_numbers = #tpu.dot_dimension_numbers<[1], [0], [0], [1], [0, 0, 1, 1], [], []>} : vector<128x128xbf16>, vector<128x1024xbf16>, vector<128x1024xf32> -> vector<128x1024xf32>
    %44 = arith.addf %41, %43 : vector<128x1024xf32>
    %c0_30 = arith.constant 0 : index
    %c0_31 = arith.constant 0 : index
    %45 = vector.load %arg9[%c0_30, %c0_31] : memref<128x1xf32, #tpu.memory_space<vmem>>, vector<128x1xf32>
    %46 = vector.broadcast %45 : vector<128x1xf32> to vector<128x1024xf32>
    %47 = arith.addf %44, %46 : vector<128x1024xf32>
    %c0_32 = arith.constant 0 : index
    %c0_33 = arith.constant 0 : index
    %c0_34 = arith.constant 0 : index
    %48 = vector.load %arg10[%c0_32, %c0_33, %c0_34] : memref<1x128x1024xf32, #tpu.memory_space<vmem>>, vector<1x128x1024xf32>
    %49 = vector.shape_cast %48 : vector<1x128x1024xf32> to vector<128x1024xf32>
    %50 = vector.shape_cast %47 : vector<128x1024xf32> to vector<1x128x1024xf32>
    tpu.vector_store %arg10[%c0_32, %c0_33, %c0_34], %50 {strides = array<i32>} : memref<1x128x1024xf32, #tpu.memory_space<vmem>>, vector<1x128x1024xf32>,
    return
  }
  func.func @transform_0(%arg0: i32) -> (i32, i32, i32) {
    %c0_i32 = arith.constant 0 : i32
    %c0_i32_0 = arith.constant 0 : i32
    %c0_i32_1 = arith.constant 0 : i32
    return %arg0, %c0_i32, %c0_i32_0 : i32, i32, i32
  }
  func.func @transform_1(%arg0: i32) -> (i32, i32, i32) {
    %c0_i32 = arith.constant 0 : i32
    %c0_i32_0 = arith.constant 0 : i32
    %c0_i32_1 = arith.constant 0 : i32
    return %arg0, %c0_i32, %c0_i32_0 : i32, i32, i32
  }
  func.func @transform_2(%arg0: i32) -> (i32, i32) {
    %c0_i32 = arith.constant 0 : i32
    %c0_i32_0 = arith.constant 0 : i32
    %c0_i32_1 = arith.constant 0 : i32
    return %c0_i32, %c0_i32_0 : i32, i32
  }
  func.func @transform_3(%arg0: i32) -> (i32, i32) {
    %c0_i32 = arith.constant 0 : i32
    %c0_i32_0 = arith.constant 0 : i32
    %c0_i32_1 = arith.constant 0 : i32
    return %c0_i32, %c0_i32_0 : i32, i32
  }
  func.func @transform_4(%arg0: i32) -> (i32, i32) {
    %c0_i32 = arith.constant 0 : i32
    %c0_i32_0 = arith.constant 0 : i32
    %c0_i32_1 = arith.constant 0 : i32
    return %c0_i32, %c0_i32_0 : i32, i32
  }
  func.func @transform_5(%arg0: i32) -> (i32, i32) {
    %c0_i32 = arith.constant 0 : i32
    %c0_i32_0 = arith.constant 0 : i32
    %c0_i32_1 = arith.constant 0 : i32
    return %c0_i32, %c0_i32_0 : i32, i32
  }
  func.func @transform_6(%arg0: i32) -> (i32, i32) {
    %c0_i32 = arith.constant 0 : i32
    %c0_i32_0 = arith.constant 0 : i32
    %c0_i32_1 = arith.constant 0 : i32
    return %c0_i32, %c0_i32_0 : i32, i32
  }
  func.func @transform_7(%arg0: i32) -> (i32, i32) {
    %c0_i32 = arith.constant 0 : i32
    %c0_i32_0 = arith.constant 0 : i32
    %c0_i32_1 = arith.constant 0 : i32
    return %c0_i32, %c0_i32_0 : i32, i32
  }
  func.func @transform_8(%arg0: i32) -> (i32, i32) {
    %c0_i32 = arith.constant 0 : i32
    %c0_i32_0 = arith.constant 0 : i32
    %c0_i32_1 = arith.constant 0 : i32
    return %c0_i32, %c0_i32_0 : i32, i32
  }
  func.func @transform_9(%arg0: i32) -> (i32, i32, i32) {
    %c0_i32 = arith.constant 0 : i32
    %c0_i32_0 = arith.constant 0 : i32
    %c0_i32_1 = arith.constant 0 : i32
    return %arg0, %c0_i32, %c0_i32_0 : i32, i32, i32
  }
}

</mosaic_0001>

<llo_original>
// kernel: cross_attention_pallas.1
$region0: #{cross_attention_pallas.1}
  #allocation0 [shape = 'u32[]', space=smem, size = 0x4, offset = 0x4, fixed_abs, tag = 'smem constant byte address 0x4 - core index']
  #allocation1 [shape = 'u32[72,128]{1,0:T(1,128)}', space=vmem, size = 0x9000, scoped, tag = 'internal scratch']
  %s0 = inlined_call_operand.vmem [shape: f32[2,128,1024], index: 0, kind: input, shape index: {}]
  %s1 = inlined_call_operand.vmem [shape: f32[2,128,1024], index: 1, kind: input, shape index: {}]
  %s2 = inlined_call_operand.vmem [shape: f32[128,128], index: 2, kind: input, shape index: {}]
  %s3 = inlined_call_operand.vmem [shape: f32[128,1], index: 3, kind: input, shape index: {}]
  %s4 = inlined_call_operand.vmem [shape: f32[128,128], index: 4, kind: input, shape index: {}]
  %s5 = inlined_call_operand.vmem [shape: f32[128,1], index: 5, kind: input, shape index: {}]
  %s6 = inlined_call_operand.vmem [shape: bf16[128,128], index: 6, kind: input, shape index: {}]
  %s7 = inlined_call_operand.vmem [shape: bf16[128,128], index: 7, kind: input, shape index: {}]
  %s8 = inlined_call_operand.vmem [shape: f32[128,1], index: 8, kind: input, shape index: {}]
  %s9 = inlined_call_operand.vmem [shape: f32[2,128,1024], index: 9, kind: output, shape index: {}]
  %s10 = sld [smem:[#allocation0]]
  $region69: #{cross_attention_pallas.1} parent=0
    _
  %s12 = ssub.s32 1, %s10
  %s13 = scalar_select 0, %s12, %s10
  loop: start=0, step=1, limit=4
  $region2: #{cross_attention_pallas.1} parent=0 // loop_pre_header
    _
  $region3: #{cross_attention_pallas.1} parent=0 // loop_header
    %s15 = sphi 0, %s19
    %p16 = scmp.ge.s32.totalorder %s15, 4
    %s25 = sphi 0, %s27
    %s28 = sphi 0, %s25
    %s29 = sphi 0, %s28
    %s45 = sphi 0, %s29
    %s51 = sphi 0, %s53
    %s54 = sphi 0, %s51
    %s55 = sphi 0, %s54
    %s71 = sphi 0, %s55
    %s75 = sphi 0, %s75
    %s77 = sphi 0, %s75
    %s78 = sphi 0, %s77
    %s92 = sphi 0, %s78
    %s96 = sphi 0, %s96
    %s98 = sphi 0, %s96
    %s99 = sphi 0, %s98
    %s113 = sphi 0, %s99
    %s117 = sphi 0, %s117
    %s119 = sphi 0, %s117
    %s120 = sphi 0, %s119
    %s134 = sphi 0, %s120
    %s138 = sphi 0, %s138
    %s140 = sphi 0, %s138
    %s141 = sphi 0, %s140
    %s155 = sphi 0, %s141
    %s159 = sphi 0, %s159
    %s161 = sphi 0, %s159
    %s162 = sphi 0, %s161
    %s176 = sphi 0, %s162
    %s180 = sphi 0, %s180
    %s182 = sphi 0, %s180
    %s183 = sphi 0, %s182
    %s197 = sphi 0, %s183
    %s201 = sphi 0, %s201
    %s203 = sphi 0, %s201
    %s204 = sphi 0, %s203
    %s218 = sphi 0, %s204
    %s224 = sphi 0, %s226
    %s227 = sphi 0, %s224
    %s228 = sphi 0, %s227
    %s244 = sphi 0, %s228
  $region4: #{cross_attention_pallas.1} parent=0 // loop_header_branch
    %18 = sbr.rel (%p16) target = $region8
  $region5: #{cross_attention_pallas.1} parent=0 // loop_body
    %s20 = ssub.s32 %s15, 1
    %s21 = ssub.s32 %s15, 2
    %s22 = sadd.s32 %s15, 1
    %s23 = ssub.s32 %s15, %s22
    %p24 = scmp.eq.s32.totalorder %s23, 0
    %s26 = sadd.s32 %s25, 1
    %s27 = scalar_select %p24, %s25, %s26
    %p30 = pneg %p24
    %p31 = scmp.eq.s32.totalorder %s15, 1
    %p32 = por %p30, %p31
    %p33 = scmp.ne.s32.totalorder %s25, %s28
    %p34 = scmp.eq.s32.totalorder %s15, 0
    %p35 = por %p33, %p34
    %p36 = scmp.ne.s32.totalorder %s25, %s28
    %p37 = scmp.eq.s32.totalorder %s20, 1
    %p38 = por %p36, %p37
    %p39 = scmp.ne.s32.totalorder %s28, %s29
    %p40 = scmp.eq.s32.totalorder %s20, 0
    %p41 = por %p39, %p40
    %p42 = scmp.ne.s32.totalorder %s28, %s29
    %p43 = scmp.eq.s32.totalorder %s21, 1
    %p44 = por %p42, %p43
    %p46 = scmp.ne.s32.totalorder %s29, %s45
    %p47 = scmp.eq.s32.totalorder %s21, 0
    %p48 = por %p46, %p47
    %s49 = ssub.s32 %s15, %s22
    %p50 = scmp.eq.s32.totalorder %s49, 0
    %s52 = sadd.s32 %s51, 1
    %s53 = scalar_select %p50, %s51, %s52
    %p56 = pneg %p50
    %p57 = scmp.eq.s32.totalorder %s15, 1
    %p58 = por %p56, %p57
    %p59 = scmp.ne.s32.totalorder %s51, %s54
    %p60 = scmp.eq.s32.totalorder %s15, 0
    %p61 = por %p59, %p60
    %p62 = scmp.ne.s32.totalorder %s51, %s54
    %p63 = scmp.eq.s32.totalorder %s20, 1
    %p64 = por %p62, %p63
    %p65 = scmp.ne.s32.totalorder %s54, %s55
    %p66 = scmp.eq.s32.totalorder %s20, 0
    %p67 = por %p65, %p66
    %p68 = scmp.ne.s32.totalorder %s54, %s55
    %p69 = scmp.eq.s32.totalorder %s21, 1
    %p70 = por %p68, %p69
    %p72 = scmp.ne.s32.totalorder %s55, %s71
    %p73 = scmp.eq.s32.totalorder %s21, 0
    %p74 = por %p72, %p73
    %s76 = sadd.s32 %s75, 1
    %p79 = scmp.eq.s32.totalorder %s15, 1
    %p80 = scmp.ne.s32.totalorder %s75, %s77
    %p81 = scmp.eq.s32.totalorder %s15, 0
    %p82 = por %p80, %p81
    %p83 = scmp.ne.s32.totalorder %s75, %s77
    %p84 = scmp.eq.s32.totalorder %s20, 1
    %p85 = por %p83, %p84
    %p86 = scmp.ne.s32.totalorder %s77, %s78
    %p87 = scmp.eq.s32.totalorder %s20, 0
    %p88 = por %p86, %p87
    %p89 = scmp.ne.s32.totalorder %s77, %s78
    %p90 = scmp.eq.s32.totalorder %s21, 1
    %p91 = por %p89, %p90
    %p93 = scmp.ne.s32.totalorder %s78, %s92
    %p94 = scmp.eq.s32.totalorder %s21, 0
    %p95 = por %p93, %p94
    %s97 = sadd.s32 %s96, 1
    %p100 = scmp.eq.s32.totalorder %s15, 1
    %p101 = scmp.ne.s32.totalorder %s96, %s98
    %p102 = scmp.eq.s32.totalorder %s15, 0
    %p103 = por %p101, %p102
    %p104 = scmp.ne.s32.totalorder %s96, %s98
    %p105 = scmp.eq.s32.totalorder %s20, 1
    %p106 = por %p104, %p105
    %p107 = scmp.ne.s32.totalorder %s98, %s99
    %p108 = scmp.eq.s32.totalorder %s20, 0
    %p109 = por %p107, %p108
    %p110 = scmp.ne.s32.totalorder %s98, %s99
    %p111 = scmp.eq.s32.totalorder %s21, 1
    %p112 = por %p110, %p111
    %p114 = scmp.ne.s32.totalorder %s99, %s113
    %p115 = scmp.eq.s32.totalorder %s21, 0
    %p116 = por %p114, %p115
    %s118 = sadd.s32 %s117, 1
    %p121 = scmp.eq.s32.totalorder %s15, 1
    %p122 = scmp.ne.s32.totalorder %s117, %s119
    %p123 = scmp.eq.s32.totalorder %s15, 0
    %p124 = por %p122, %p123
    %p125 = scmp.ne.s32.totalorder %s117, %s119
    %p126 = scmp.eq.s32.totalorder %s20, 1
    %p127 = por %p125, %p126
    %p128 = scmp.ne.s32.totalorder %s119, %s120
    %p129 = scmp.eq.s32.totalorder %s20, 0
    %p130 = por %p128, %p129
    %p131 = scmp.ne.s32.totalorder %s119, %s120
    %p132 = scmp.eq.s32.totalorder %s21, 1
    %p133 = por %p131, %p132
    %p135 = scmp.ne.s32.totalorder %s120, %s134
    %p136 = scmp.eq.s32.totalorder %s21, 0
    %p137 = por %p135, %p136
    %s139 = sadd.s32 %s138, 1
    %p142 = scmp.eq.s32.totalorder %s15, 1
    %p143 = scmp.ne.s32.totalorder %s138, %s140
    %p144 = scmp.eq.s32.totalorder %s15, 0
    %p145 = por %p143, %p144
    %p146 = scmp.ne.s32.totalorder %s138, %s140
    %p147 = scmp.eq.s32.totalorder %s20, 1
    %p148 = por %p146, %p147
    %p149 = scmp.ne.s32.totalorder %s140, %s141
    %p150 = scmp.eq.s32.totalorder %s20, 0
    %p151 = por %p149, %p150
    %p152 = scmp.ne.s32.totalorder %s140, %s141
    %p153 = scmp.eq.s32.totalorder %s21, 1
    %p154 = por %p152, %p153
    %p156 = scmp.ne.s32.totalorder %s141, %s155
    %p157 = scmp.eq.s32.totalorder %s21, 0
    %p158 = por %p156, %p157
    %s160 = sadd.s32 %s159, 1
    %p163 = scmp.eq.s32.totalorder %s15, 1
    %p164 = scmp.ne.s32.totalorder %s159, %s161
    %p165 = scmp.eq.s32.totalorder %s15, 0
    %p166 = por %p164, %p165
    %p167 = scmp.ne.s32.totalorder %s159, %s161
    %p168 = scmp.eq.s32.totalorder %s20, 1
    %p169 = por %p167, %p168
    %p170 = scmp.ne.s32.totalorder %s161, %s162
    %p171 = scmp.eq.s32.totalorder %s20, 0
    %p172 = por %p170, %p171
    %p173 = scmp.ne.s32.totalorder %s161, %s162
    %p174 = scmp.eq.s32.totalorder %s21, 1
    %p175 = por %p173, %p174
    %p177 = scmp.ne.s32.totalorder %s162, %s176
    %p178 = scmp.eq.s32.totalorder %s21, 0
    %p179 = por %p177, %p178
    %s181 = sadd.s32 %s180, 1
    %p184 = scmp.eq.s32.totalorder %s15, 1
    %p185 = scmp.ne.s32.totalorder %s180, %s182
    %p186 = scmp.eq.s32.totalorder %s15, 0
    %p187 = por %p185, %p186
    %p188 = scmp.ne.s32.totalorder %s180, %s182
    %p189 = scmp.eq.s32.totalorder %s20, 1
    %p190 = por %p188, %p189
    %p191 = scmp.ne.s32.totalorder %s182, %s183
    %p192 = scmp.eq.s32.totalorder %s20, 0
    %p193 = por %p191, %p192
    %p194 = scmp.ne.s32.totalorder %s182, %s183
    %p195 = scmp.eq.s32.totalorder %s21, 1
    %p196 = por %p194, %p195
    %p198 = scmp.ne.s32.totalorder %s183, %s197
    %p199 = scmp.eq.s32.totalorder %s21, 0
    %p200 = por %p198, %p199
    %s202 = sadd.s32 %s201, 1
    %p205 = scmp.eq.s32.totalorder %s15, 1
    %p206 = scmp.ne.s32.totalorder %s201, %s203
    %p207 = scmp.eq.s32.totalorder %s15, 0
    %p208 = por %p206, %p207
    %p209 = scmp.ne.s32.totalorder %s201, %s203
    %p210 = scmp.eq.s32.totalorder %s20, 1
    %p211 = por %p209, %p210
    %p212 = scmp.ne.s32.totalorder %s203, %s204
    %p213 = scmp.eq.s32.totalorder %s20, 0
    %p214 = por %p212, %p213
    %p215 = scmp.ne.s32.totalorder %s203, %s204
    %p216 = scmp.eq.s32.totalorder %s21, 1
    %p217 = por %p215, %p216
    %p219 = scmp.ne.s32.totalorder %s204, %s218
    %p220 = scmp.eq.s32.totalorder %s21, 0
    %p221 = por %p219, %p220
    %s222 = ssub.s32 %s15, %s22
    %p223 = scmp.eq.s32.totalorder %s222, 0
    %s225 = sadd.s32 %s224, 1
    %s226 = scalar_select %p223, %s224, %s225
    %p229 = pneg %p223
    %p230 = scmp.eq.s32.totalorder %s15, 1
    %p231 = por %p229, %p230
    %p232 = scmp.ne.s32.totalorder %s224, %s227
    %p233 = scmp.eq.s32.totalorder %s15, 0
    %p234 = por %p232, %p233
    %p235 = scmp.ne.s32.totalorder %s224, %s227
    %p236 = scmp.eq.s32.totalorder %s20, 1
    %p237 = por %p235, %p236
    %p238 = scmp.ne.s32.totalorder %s227, %s228
    %p239 = scmp.eq.s32.totalorder %s20, 0
    %p240 = por %p238, %p239
    %p241 = scmp.ne.s32.totalorder %s227, %s228
    %p242 = scmp.eq.s32.totalorder %s21, 1
    %p243 = por %p241, %p242
    %p245 = scmp.ne.s32.totalorder %s228, %s244
    %p246 = scmp.eq.s32.totalorder %s21, 0
    %p247 = por %p245, %p246
    %p248 = scmp.le.s32.totalorder 1, %s15
    %p249 = scmp.lt.s32.totalorder %s15, 3
    %p250 = pnand %p248, %p249
    %p251 = pneg %p250
    // Predicated region
    $region9: #{cross_attention_pallas.1} parent=5 // pred_check
      _
    $region10: #{cross_attention_pallas.1} parent=5 // pred_check_branch
      %253 = sbr.rel (%p250) target = $region12
    $region11: #{cross_attention_pallas.1} parent=5 // pred_region
      %s254 = ssub.s32 %s15, 1
      // Predicated region
      $region13: #{cross_attention_pallas.1} parent=11 // pred_check
        %p255 = pneg %p88
      $region14: #{cross_attention_pallas.1} parent=11 // pred_check_branch
        %257 = sbr.rel (%p255) target = $region16
      $region15: #{cross_attention_pallas.1} parent=11 // pred_region
        _
      $region16: #{cross_attention_pallas.1} parent=11 // pred_fallthru
        _
      // Predicated region
      $region17: #{cross_attention_pallas.1} parent=11 // pred_check
        %p258 = pneg %p109
      $region18: #{cross_attention_pallas.1} parent=11 // pred_check_branch
        %260 = sbr.rel (%p258) target = $region20
      $region19: #{cross_attention_pallas.1} parent=11 // pred_region
        _
      $region20: #{cross_attention_pallas.1} parent=11 // pred_fallthru
        _
      // Predicated region
      $region21: #{cross_attention_pallas.1} parent=11 // pred_check
        %p261 = pneg %p130
      $region22: #{cross_attention_pallas.1} parent=11 // pred_check_branch
        %263 = sbr.rel (%p261) target = $region24
      $region23: #{cross_attention_pallas.1} parent=11 // pred_region
        _
      $region24: #{cross_attention_pallas.1} parent=11 // pred_fallthru
        _
      // Predicated region
      $region25: #{cross_attention_pallas.1} parent=11 // pred_check
        %p264 = pneg %p151
      $region26: #{cross_attention_pallas.1} parent=11 // pred_check_branch
        %266 = sbr.rel (%p264) target = $region28
      $region27: #{cross_attention_pallas.1} parent=11 // pred_region
        _
      $region28: #{cross_attention_pallas.1} parent=11 // pred_fallthru
        _
      // Predicated region
      $region29: #{cross_attention_pallas.1} parent=11 // pred_check
        %p267 = pneg %p172
      $region30: #{cross_attention_pallas.1} parent=11 // pred_check_branch
        %269 = sbr.rel (%p267) target = $region32
      $region31: #{cross_attention_pallas.1} parent=11 // pred_region
        _
      $region32: #{cross_attention_pallas.1} parent=11 // pred_fallthru
        _
      // Predicated region
      $region33: #{cross_attention_pallas.1} parent=11 // pred_check
        %p270 = pneg %p193
      $region34: #{cross_attention_pallas.1} parent=11 // pred_check_branch
        %272 = sbr.rel (%p270) target = $region36
      $region35: #{cross_attention_pallas.1} parent=11 // pred_region
        _
      $region36: #{cross_attention_pallas.1} parent=11 // pred_fallthru
        _
      // Predicated region
      $region37: #{cross_attention_pallas.1} parent=11 // pred_check
        %p273 = pneg %p214
      $region38: #{cross_attention_pallas.1} parent=11 // pred_check_branch
        %275 = sbr.rel (%p273) target = $region40
      $region39: #{cross_attention_pallas.1} parent=11 // pred_region
        _
      $region40: #{cross_attention_pallas.1} parent=11 // pred_fallthru
        _
    $region12: #{cross_attention_pallas.1} parent=5 // pred_fallthru
      _
    %p276 = scmp.lt.s32.totalorder %s15, 2
    // Predicated region
    $region41: #{cross_attention_pallas.1} parent=5 // pred_check
      %p277 = pneg %p276
    $region42: #{cross_attention_pallas.1} parent=5 // pred_check_branch
      %279 = sbr.rel (%p277) target = $region44
    $region43: #{cross_attention_pallas.1} parent=5 // pred_region
      // Predicated region
      $region45: #{cross_attention_pallas.1} parent=43 // pred_check
        %p280 = pneg %p35
      $region46: #{cross_attention_pallas.1} parent=43 // pred_check_branch
        %282 = sbr.rel (%p280) target = $region48
      $region47: #{cross_attention_pallas.1} parent=43 // pred_region
        %p283 = scmp.lt.s32.totalorder %s15, 1
        %s284 = scalar_select %p283, %s15, 1
        %s285 = smul.addr %s284, 128
        %s286 = smul.addr %s285, 8
        %s287 = scalar_lea.vmem %s0, %s286
      $region48: #{cross_attention_pallas.1} parent=43 // pred_fallthru
        _
      // Predicated region
      $region49: #{cross_attention_pallas.1} parent=43 // pred_check
        %p288 = pneg %p61
      $region50: #{cross_attention_pallas.1} parent=43 // pred_check_branch
        %290 = sbr.rel (%p288) target = $region52
      $region51: #{cross_attention_pallas.1} parent=43 // pred_region
        %p291 = scmp.lt.s32.totalorder %s15, 1
        %s292 = scalar_select %p291, %s15, 1
        %s293 = smul.addr %s292, 128
        %s294 = smul.addr %s293, 8
        %s295 = scalar_lea.vmem %s1, %s294
      $region52: #{cross_attention_pallas.1} parent=43 // pred_fallthru
        _
    $region44: #{cross_attention_pallas.1} parent=5 // pred_fallthru
      _
    %p296 = scmp.le.s32.totalorder 1, %s15
    %p297 = scmp.lt.s32.totalorder %s15, 3
    %p298 = pnand %p296, %p297
    %p299 = pneg %p298
    // Predicated region
    $region53: #{cross_attention_pallas.1} parent=5 // pred_check
      _
    $region54: #{cross_attention_pallas.1} parent=5 // pred_check_branch
      %301 = sbr.rel (%p298) target = $region56
    $region55: #{cross_attention_pallas.1} parent=5 // pred_region
      %s302 = ssub.s32 %s15, 1
      %p303 = scmp.lt.s32.totalorder %s20, 1
      %s304 = scalar_select %p303, %s20, 1
      %s305 = smul.addr %s304, 128
      %s306 = smul.addr %s305, 8
      %s307 = scalar_lea.vmem %s0, %s306
      %p308 = pneg %p41
      %p309 = pneg %p38
      %p310 = scmp.lt.s32.totalorder %s20, 1
      %s311 = scalar_select %p310, %s20, 1
      %s312 = smul.addr %s311, 128
      %s313 = smul.addr %s312, 8
      %s314 = scalar_lea.vmem %s1, %s313
      %p315 = pneg %p67
      %p316 = pneg %p64
      %p317 = pneg %p88
      %p318 = pneg %p85
      %p319 = pneg %p109
      %p320 = pneg %p106
      %p321 = pneg %p130
      %p322 = pneg %p127
      %p323 = pneg %p151
      %p324 = pneg %p148
      %p325 = pneg %p172
      %p326 = pneg %p169
      %p327 = pneg %p193
      %p328 = pneg %p190
      %p329 = pneg %p214
      %p330 = pneg %p211
      %p331 = pneg %p240
      %p332 = pneg %p237
      %p333 = scmp.lt.s32.totalorder %s20, 1
      %s334 = scalar_select %p333, %s20, 1
      %s335 = smul.addr %s334, 128
      %s336 = smul.addr %s335, 8
      %s337 = scalar_lea.vmem %s9, %s336
      %p338 = scmp.lt.s32.totalorder %s20, 1
      %s339 = scalar_select %p338, %s20, 1
      %s340 = smul.addr %s339, 128
      %s341 = smul.addr %s340, 8
      %s342 = scalar_lea.vmem %s0, %s341
      %p343 = scmp.lt.s32.totalorder %s20, 1
      %s344 = scalar_select %p343, %s20, 1
      %s345 = smul.addr %s344, 128
      %s346 = smul.addr %s345, 8
      %s347 = scalar_lea.vmem %s1, %s346
      %p348 = scmp.lt.s32.totalorder %s20, 1
      %s349 = scalar_select %p348, %s20, 1
      %s350 = smul.addr %s349, 128
      %s351 = smul.addr %s350, 8
      %s352 = scalar_lea.vmem %s9, %s351
      %v353 = vld [vmem:[%s342] sm:$0xff]
      %v354 = vld [vmem:[%s342 + $0x8] sm:$0xff]
      %v355 = vld [vmem:[%s342 + $0x10] sm:$0xff]
      %v356 = vld [vmem:[%s342 + $0x18] sm:$0xff]
      %v357 = vld [vmem:[%s342 + $0x20] sm:$0xff]
      %v358 = vld [vmem:[%s342 + $0x28] sm:$0xff]
      %v359 = vld [vmem:[%s342 + $0x30] sm:$0xff]
      %v360 = vld [vmem:[%s342 + $0x38] sm:$0xff]
      %v361 = vld [vmem:[%s342 + $0x40] sm:$0xff]
      %v362 = vld [vmem:[%s342 + $0x48] sm:$0xff]
      %v363 = vld [vmem:[%s342 + $0x50] sm:$0xff]
      %v364 = vld [vmem:[%s342 + $0x58] sm:$0xff]
      %v365 = vld [vmem:[%s342 + $0x60] sm:$0xff]
      %v366 = vld [vmem:[%s342 + $0x68] sm:$0xff]
      %v367 = vld [vmem:[%s342 + $0x70] sm:$0xff]
      %v368 = vld [vmem:[%s342 + $0x78] sm:$0xff]
      %v369 = vld [vmem:[%s342 + $0x80] sm:$0xff]
      %v370 = vld [vmem:[%s342 + $0x88] sm:$0xff]
      %v371 = vld [vmem:[%s342 + $0x90] sm:$0xff]
      %v372 = vld [vmem:[%s342 + $0x98] sm:$0xff]
      %v373 = vld [vmem:[%s342 + $0xa0] sm:$0xff]
      %v374 = vld [vmem:[%s342 + $0xa8] sm:$0xff]
      %v375 = vld [vmem:[%s342 + $0xb0] sm:$0xff]
      %v376 = vld [vmem:[%s342 + $0xb8] sm:$0xff]
      %v377 = vld [vmem:[%s342 + $0xc0] sm:$0xff]
      %v378 = vld [vmem:[%s342 + $0xc8] sm:$0xff]
      %v379 = vld [vmem:[%s342 + $0xd0] sm:$0xff]
      %v380 = vld [vmem:[%s342 + $0xd8] sm:$0xff]
      %v381 = vld [vmem:[%s342 + $0xe0] sm:$0xff]
      %v382 = vld [vmem:[%s342 + $0xe8] sm:$0xff]
      %v383 = vld [vmem:[%s342 + $0xf0] sm:$0xff]
      %v384 = vld [vmem:[%s342 + $0xf8] sm:$0xff]
      %v385 = vld [vmem:[%s342 + $0x100] sm:$0xff]
      %v386 = vld [vmem:[%s342 + $0x108] sm:$0xff]
      %v387 = vld [vmem:[%s342 + $0x110] sm:$0xff]
      %v388 = vld [vmem:[%s342 + $0x118] sm:$0xff]
      %v389 = vld [vmem:[%s342 + $0x120] sm:$0xff]
      %v390 = vld [vmem:[%s342 + $0x128] sm:$0xff]
      %v391 = vld [vmem:[%s342 + $0x130] sm:$0xff]
      %v392 = vld [vmem:[%s342 + $0x138] sm:$0xff]
      %v393 = vld [vmem:[%s342 + $0x140] sm:$0xff]
      %v394 = vld [vmem:[%s342 + $0x148] sm:$0xff]
      %v395 = vld [vmem:[%s342 + $0x150] sm:$0xff]
      %v396 = vld [vmem:[%s342 + $0x158] sm:$0xff]
      %v397 = vld [vmem:[%s342 + $0x160] sm:$0xff]
      %v398 = vld [vmem:[%s342 + $0x168] sm:$0xff]
      %v399 = vld [vmem:[%s342 + $0x170] sm:$0xff]
      %v400 = vld [vmem:[%s342 + $0x178] sm:$0xff]
      %v401 = vld [vmem:[%s342 + $0x180] sm:$0xff]
      %v402 = vld [vmem:[%s342 + $0x188] sm:$0xff]
      %v403 = vld [vmem:[%s342 + $0x190] sm:$0xff]
      %v404 = vld [vmem:[%s342 + $0x198] sm:$0xff]
      %v405 = vld [vmem:[%s342 + $0x1a0] sm:$0xff]
      %v406 = vld [vmem:[%s342 + $0x1a8] sm:$0xff]
      %v407 = vld [vmem:[%s342 + $0x1b0] sm:$0xff]
      %v408 = vld [vmem:[%s342 + $0x1b8] sm:$0xff]
      %v409 = vld [vmem:[%s342 + $0x1c0] sm:$0xff]
      %v410 = vld [vmem:[%s342 + $0x1c8] sm:$0xff]
      %v411 = vld [vmem:[%s342 + $0x1d0] sm:$0xff]
      %v412 = vld [vmem:[%s342 + $0x1d8] sm:$0xff]
      %v413 = vld [vmem:[%s342 + $0x1e0] sm:$0xff]
      %v414 = vld [vmem:[%s342 + $0x1e8] sm:$0xff]
      %v415 = vld [vmem:[%s342 + $0x1f0] sm:$0xff]
      %v416 = vld [vmem:[%s342 + $0x1f8] sm:$0xff]
      %v417 = vld [vmem:[%s342 + $0x200] sm:$0xff]
      %v418 = vld [vmem:[%s342 + $0x208] sm:$0xff]
      %v419 = vld [vmem:[%s342 + $0x210] sm:$0xff]
      %v420 = vld [vmem:[%s342 + $0x218] sm:$0xff]
      %v421 = vld [vmem:[%s342 + $0x220] sm:$0xff]
      %v422 = vld [vmem:[%s342 + $0x228] sm:$0xff]
      %v423 = vld [vmem:[%s342 + $0x230] sm:$0xff]
      %v424 = vld [vmem:[%s342 + $0x238] sm:$0xff]
      %v425 = vld [vmem:[%s342 + $0x240] sm:$0xff]
      %v426 = vld [vmem:[%s342 + $0x248] sm:$0xff]
      %v427 = vld [vmem:[%s342 + $0x250] sm:$0xff]
      %v428 = vld [vmem:[%s342 + $0x258] sm:$0xff]
      %v429 = vld [vmem:[%s342 + $0x260] sm:$0xff]
      %v430 = vld [vmem:[%s342 + $0x268] sm:$0xff]
      %v431 = vld [vmem:[%s342 + $0x270] sm:$0xff]
      %v432 = vld [vmem:[%s342 + $0x278] sm:$0xff]
      %v433 = vld [vmem:[%s342 + $0x280] sm:$0xff]
      %v434 = vld [vmem:[%s342 + $0x288] sm:$0xff]
      %v435 = vld [vmem:[%s342 + $0x290] sm:$0xff]
      %v436 = vld [vmem:[%s342 + $0x298] sm:$0xff]
      %v437 = vld [vmem:[%s342 + $0x2a0] sm:$0xff]
      %v438 = vld [vmem:[%s342 + $0x2a8] sm:$0xff]
      %v439 = vld [vmem:[%s342 + $0x2b0] sm:$0xff]
      %v440 = vld [vmem:[%s342 + $0x2b8] sm:$0xff]
      %v441 = vld [vmem:[%s342 + $0x2c0] sm:$0xff]
      %v442 = vld [vmem:[%s342 + $0x2c8] sm:$0xff]
      %v443 = vld [vmem:[%s342 + $0x2d0] sm:$0xff]
      %v444 = vld [vmem:[%s342 + $0x2d8] sm:$0xff]
      %v445 = vld [vmem:[%s342 + $0x2e0] sm:$0xff]
      %v446 = vld [vmem:[%s342 + $0x2e8] sm:$0xff]
      %v447 = vld [vmem:[%s342 + $0x2f0] sm:$0xff]
      %v448 = vld [vmem:[%s342 + $0x2f8] sm:$0xff]
      %v449 = vld [vmem:[%s342 + $0x300] sm:$0xff]
      %v450 = vld [vmem:[%s342 + $0x308] sm:$0xff]
      %v451 = vld [vmem:[%s342 + $0x310] sm:$0xff]
      %v452 = vld [vmem:[%s342 + $0x318] sm:$0xff]
      %v453 = vld [vmem:[%s342 + $0x320] sm:$0xff]
      %v454 = vld [vmem:[%s342 + $0x328] sm:$0xff]
      %v455 = vld [vmem:[%s342 + $0x330] sm:$0xff]
      %v456 = vld [vmem:[%s342 + $0x338] sm:$0xff]
      %v457 = vld [vmem:[%s342 + $0x340] sm:$0xff]
      %v458 = vld [vmem:[%s342 + $0x348] sm:$0xff]
      %v459 = vld [vmem:[%s342 + $0x350] sm:$0xff]
      %v460 = vld [vmem:[%s342 + $0x358] sm:$0xff]
      %v461 = vld [vmem:[%s342 + $0x360] sm:$0xff]
      %v462 = vld [vmem:[%s342 + $0x368] sm:$0xff]
      %v463 = vld [vmem:[%s342 + $0x370] sm:$0xff]
      %v464 = vld [vmem:[%s342 + $0x378] sm:$0xff]
      %v465 = vld [vmem:[%s342 + $0x380] sm:$0xff]
      %v466 = vld [vmem:[%s342 + $0x388] sm:$0xff]
      %v467 = vld [vmem:[%s342 + $0x390] sm:$0xff]
      %v468 = vld [vmem:[%s342 + $0x398] sm:$0xff]
      %v469 = vld [vmem:[%s342 + $0x3a0] sm:$0xff]
      %v470 = vld [vmem:[%s342 + $0x3a8] sm:$0xff]
      %v471 = vld [vmem:[%s342 + $0x3b0] sm:$0xff]
      %v472 = vld [vmem:[%s342 + $0x3b8] sm:$0xff]
      %v473 = vld [vmem:[%s342 + $0x3c0] sm:$0xff]
      %v474 = vld [vmem:[%s342 + $0x3c8] sm:$0xff]
      %v475 = vld [vmem:[%s342 + $0x3d0] sm:$0xff]
      %v476 = vld [vmem:[%s342 + $0x3d8] sm:$0xff]
      %v477 = vld [vmem:[%s342 + $0x3e0] sm:$0xff]
      %v478 = vld [vmem:[%s342 + $0x3e8] sm:$0xff]
      %v479 = vld [vmem:[%s342 + $0x3f0] sm:$0xff]
      %v480 = vld [vmem:[%s342 + $0x3f8] sm:$0xff]
      %v481 = vld [vmem:[%s347] sm:$0xff]
      %v482 = vld [vmem:[%s347 + $0x8] sm:$0xff]
      %v483 = vld [vmem:[%s347 + $0x10] sm:$0xff]
      %v484 = vld [vmem:[%s347 + $0x18] sm:$0xff]
      %v485 = vld [vmem:[%s347 + $0x20] sm:$0xff]
      %v486 = vld [vmem:[%s347 + $0x28] sm:$0xff]
      %v487 = vld [vmem:[%s347 + $0x30] sm:$0xff]
      %v488 = vld [vmem:[%s347 + $0x38] sm:$0xff]
      %v489 = vld [vmem:[%s347 + $0x40] sm:$0xff]
      %v490 = vld [vmem:[%s347 + $0x48] sm:$0xff]
      %v491 = vld [vmem:[%s347 + $0x50] sm:$0xff]
      %v492 = vld [vmem:[%s347 + $0x58] sm:$0xff]
      %v493 = vld [vmem:[%s347 + $0x60] sm:$0xff]
      %v494 = vld [vmem:[%s347 + $0x68] sm:$0xff]
      %v495 = vld [vmem:[%s347 + $0x70] sm:$0xff]
      %v496 = vld [vmem:[%s347 + $0x78] sm:$0xff]
      %v497 = vld [vmem:[%s347 + $0x80] sm:$0xff]
      %v498 = vld [vmem:[%s347 + $0x88] sm:$0xff]
      %v499 = vld [vmem:[%s347 + $0x90] sm:$0xff]
      %v500 = vld [vmem:[%s347 + $0x98] sm:$0xff]
      %v501 = vld [vmem:[%s347 + $0xa0] sm:$0xff]
      %v502 = vld [vmem:[%s347 + $0xa8] sm:$0xff]
      %v503 = vld [vmem:[%s347 + $0xb0] sm:$0xff]
      %v504 = vld [vmem:[%s347 + $0xb8] sm:$0xff]
      %v505 = vld [vmem:[%s347 + $0xc0] sm:$0xff]
      %v506 = vld [vmem:[%s347 + $0xc8] sm:$0xff]
      %v507 = vld [vmem:[%s347 + $0xd0] sm:$0xff]
      %v508 = vld [vmem:[%s347 + $0xd8] sm:$0xff]
      %v509 = vld [vmem:[%s347 + $0xe0] sm:$0xff]
      %v510 = vld [vmem:[%s347 + $0xe8] sm:$0xff]
      %v511 = vld [vmem:[%s347 + $0xf0] sm:$0xff]
      %v512 = vld [vmem:[%s347 + $0xf8] sm:$0xff]
      %v513 = vld [vmem:[%s347 + $0x100] sm:$0xff]
      %v514 = vld [vmem:[%s347 + $0x108] sm:$0xff]
      %v515 = vld [vmem:[%s347 + $0x110] sm:$0xff]
      %v516 = vld [vmem:[%s347 + $0x118] sm:$0xff]
      %v517 = vld [vmem:[%s347 + $0x120] sm:$0xff]
      %v518 = vld [vmem:[%s347 + $0x128] sm:$0xff]
      %v519 = vld [vmem:[%s347 + $0x130] sm:$0xff]
      %v520 = vld [vmem:[%s347 + $0x138] sm:$0xff]
      %v521 = vld [vmem:[%s347 + $0x140] sm:$0xff]
      %v522 = vld [vmem:[%s347 + $0x148] sm:$0xff]
      %v523 = vld [vmem:[%s347 + $0x150] sm:$0xff]
      %v524 = vld [vmem:[%s347 + $0x158] sm:$0xff]
      %v525 = vld [vmem:[%s347 + $0x160] sm:$0xff]
      %v526 = vld [vmem:[%s347 + $0x168] sm:$0xff]
      %v527 = vld [vmem:[%s347 + $0x170] sm:$0xff]
      %v528 = vld [vmem:[%s347 + $0x178] sm:$0xff]
      %v529 = vld [vmem:[%s347 + $0x180] sm:$0xff]
      %v530 = vld [vmem:[%s347 + $0x188] sm:$0xff]
      %v531 = vld [vmem:[%s347 + $0x190] sm:$0xff]
      %v532 = vld [vmem:[%s347 + $0x198] sm:$0xff]
      %v533 = vld [vmem:[%s347 + $0x1a0] sm:$0xff]
      %v534 = vld [vmem:[%s347 + $0x1a8] sm:$0xff]
      %v535 = vld [vmem:[%s347 + $0x1b0] sm:$0xff]
      %v536 = vld [vmem:[%s347 + $0x1b8] sm:$0xff]
      %v537 = vld [vmem:[%s347 + $0x1c0] sm:$0xff]
      %v538 = vld [vmem:[%s347 + $0x1c8] sm:$0xff]
      %v539 = vld [vmem:[%s347 + $0x1d0] sm:$0xff]
      %v540 = vld [vmem:[%s347 + $0x1d8] sm:$0xff]
      %v541 = vld [vmem:[%s347 + $0x1e0] sm:$0xff]
      %v542 = vld [vmem:[%s347 + $0x1e8] sm:$0xff]
      %v543 = vld [vmem:[%s347 + $0x1f0] sm:$0xff]
      %v544 = vld [vmem:[%s347 + $0x1f8] sm:$0xff]
      %v545 = vld [vmem:[%s347 + $0x200] sm:$0xff]
      %v546 = vld [vmem:[%s347 + $0x208] sm:$0xff]
      %v547 = vld [vmem:[%s347 + $0x210] sm:$0xff]
      %v548 = vld [vmem:[%s347 + $0x218] sm:$0xff]
      %v549 = vld [vmem:[%s347 + $0x220] sm:$0xff]
      %v550 = vld [vmem:[%s347 + $0x228] sm:$0xff]
      %v551 = vld [vmem:[%s347 + $0x230] sm:$0xff]
      %v552 = vld [vmem:[%s347 + $0x238] sm:$0xff]
      %v553 = vld [vmem:[%s347 + $0x240] sm:$0xff]
      %v554 = vld [vmem:[%s347 + $0x248] sm:$0xff]
      %v555 = vld [vmem:[%s347 + $0x250] sm:$0xff]
      %v556 = vld [vmem:[%s347 + $0x258] sm:$0xff]
      %v557 = vld [vmem:[%s347 + $0x260] sm:$0xff]
      %v558 = vld [vmem:[%s347 + $0x268] sm:$0xff]
      %v559 = vld [vmem:[%s347 + $0x270] sm:$0xff]
      %v560 = vld [vmem:[%s347 + $0x278] sm:$0xff]
      %v561 = vld [vmem:[%s347 + $0x280] sm:$0xff]
      %v562 = vld [vmem:[%s347 + $0x288] sm:$0xff]
      %v563 = vld [vmem:[%s347 + $0x290] sm:$0xff]
      %v564 = vld [vmem:[%s347 + $0x298] sm:$0xff]
      %v565 = vld [vmem:[%s347 + $0x2a0] sm:$0xff]
      %v566 = vld [vmem:[%s347 + $0x2a8] sm:$0xff]
      %v567 = vld [vmem:[%s347 + $0x2b0] sm:$0xff]
      %v568 = vld [vmem:[%s347 + $0x2b8] sm:$0xff]
      %v569 = vld [vmem:[%s347 + $0x2c0] sm:$0xff]
      %v570 = vld [vmem:[%s347 + $0x2c8] sm:$0xff]
      %v571 = vld [vmem:[%s347 + $0x2d0] sm:$0xff]
      %v572 = vld [vmem:[%s347 + $0x2d8] sm:$0xff]
      %v573 = vld [vmem:[%s347 + $0x2e0] sm:$0xff]
      %v574 = vld [vmem:[%s347 + $0x2e8] sm:$0xff]
      %v575 = vld [vmem:[%s347 + $0x2f0] sm:$0xff]
      %v576 = vld [vmem:[%s347 + $0x2f8] sm:$0xff]
      %v577 = vld [vmem:[%s347 + $0x300] sm:$0xff]
      %v578 = vld [vmem:[%s347 + $0x308] sm:$0xff]
      %v579 = vld [vmem:[%s347 + $0x310] sm:$0xff]
      %v580 = vld [vmem:[%s347 + $0x318] sm:$0xff]
      %v581 = vld [vmem:[%s347 + $0x320] sm:$0xff]
      %v582 = vld [vmem:[%s347 + $0x328] sm:$0xff]
      %v583 = vld [vmem:[%s347 + $0x330] sm:$0xff]
      %v584 = vld [vmem:[%s347 + $0x338] sm:$0xff]
      %v585 = vld [vmem:[%s347 + $0x340] sm:$0xff]
      %v586 = vld [vmem:[%s347 + $0x348] sm:$0xff]
      %v587 = vld [vmem:[%s347 + $0x350] sm:$0xff]
      %v588 = vld [vmem:[%s347 + $0x358] sm:$0xff]
      %v589 = vld [vmem:[%s347 + $0x360] sm:$0xff]
      %v590 = vld [vmem:[%s347 + $0x368] sm:$0xff]
      %v591 = vld [vmem:[%s347 + $0x370] sm:$0xff]
      %v592 = vld [vmem:[%s347 + $0x378] sm:$0xff]
      %v593 = vld [vmem:[%s347 + $0x380] sm:$0xff]
      %v594 = vld [vmem:[%s347 + $0x388] sm:$0xff]
      %v595 = vld [vmem:[%s347 + $0x390] sm:$0xff]
      %v596 = vld [vmem:[%s347 + $0x398] sm:$0xff]
      %v597 = vld [vmem:[%s347 + $0x3a0] sm:$0xff]
      %v598 = vld [vmem:[%s347 + $0x3a8] sm:$0xff]
      %v599 = vld [vmem:[%s347 + $0x3b0] sm:$0xff]
      %v600 = vld [vmem:[%s347 + $0x3b8] sm:$0xff]
      %v601 = vld [vmem:[%s347 + $0x3c0] sm:$0xff]
      %v602 = vld [vmem:[%s347 + $0x3c8] sm:$0xff]
      %v603 = vld [vmem:[%s347 + $0x3d0] sm:$0xff]
      %v604 = vld [vmem:[%s347 + $0x3d8] sm:$0xff]
      %v605 = vld [vmem:[%s347 + $0x3e0] sm:$0xff]
      %v606 = vld [vmem:[%s347 + $0x3e8] sm:$0xff]
      %v607 = vld [vmem:[%s347 + $0x3f0] sm:$0xff]
      %v608 = vld [vmem:[%s347 + $0x3f8] sm:$0xff]
      %v609 = vadd.f32 %v353, %v354
      %v610 = vadd.f32 %v609, %v355
      %v611 = vadd.f32 %v610, %v356
      %v612 = vadd.f32 %v611, %v357
      %v613 = vadd.f32 %v612, %v358
      %v614 = vadd.f32 %v613, %v359
      %v615 = vadd.f32 %v614, %v360
      %616 = vadd.xlane.f32.xlu0 %v615
      %v617 = vpop.xlane.xlu0 %616
      %v618 = vadd.f32 %v361, %v362
      %v619 = vadd.f32 %v618, %v363
      %v620 = vadd.f32 %v619, %v364
      %v621 = vadd.f32 %v620, %v365
      %v622 = vadd.f32 %v621, %v366
      %v623 = vadd.f32 %v622, %v367
      %v624 = vadd.f32 %v623, %v368
      %625 = vadd.xlane.f32.xlu0 %v624
      %v626 = vpop.xlane.xlu0 %625
      %v627 = vadd.f32 %v369, %v370
      %v628 = vadd.f32 %v627, %v371
      %v629 = vadd.f32 %v628, %v372
      %v630 = vadd.f32 %v629, %v373
      %v631 = vadd.f32 %v630, %v374
      %v632 = vadd.f32 %v631, %v375
      %v633 = vadd.f32 %v632, %v376
      %634 = vadd.xlane.f32.xlu0 %v633
      %v635 = vpop.xlane.xlu0 %634
      %v636 = vadd.f32 %v377, %v378
      %v637 = vadd.f32 %v636, %v379
      %v638 = vadd.f32 %v637, %v380
      %v639 = vadd.f32 %v638, %v381
      %v640 = vadd.f32 %v639, %v382
      %v641 = vadd.f32 %v640, %v383
      %v642 = vadd.f32 %v641, %v384
      %643 = vadd.xlane.f32.xlu0 %v642
      %v644 = vpop.xlane.xlu0 %643
      %v645 = vadd.f32 %v385, %v386
      %v646 = vadd.f32 %v645, %v387
      %v647 = vadd.f32 %v646, %v388
      %v648 = vadd.f32 %v647, %v389
      %v649 = vadd.f32 %v648, %v390
      %v650 = vadd.f32 %v649, %v391
      %v651 = vadd.f32 %v650, %v392
      %652 = vadd.xlane.f32.xlu0 %v651
      %v653 = vpop.xlane.xlu0 %652
      %v654 = vadd.f32 %v393, %v394
      %v655 = vadd.f32 %v654, %v395
      %v656 = vadd.f32 %v655, %v396
      %v657 = vadd.f32 %v656, %v397
      %v658 = vadd.f32 %v657, %v398
      %v659 = vadd.f32 %v658, %v399
      %v660 = vadd.f32 %v659, %v400
      %661 = vadd.xlane.f32.xlu0 %v660
      %v662 = vpop.xlane.xlu0 %661
      %v663 = vadd.f32 %v401, %v402
      %v664 = vadd.f32 %v663, %v403
      %v665 = vadd.f32 %v664, %v404
      %v666 = vadd.f32 %v665, %v405
      %v667 = vadd.f32 %v666, %v406
      %v668 = vadd.f32 %v667, %v407
      %v669 = vadd.f32 %v668, %v408
      %670 = vadd.xlane.f32.xlu0 %v669
      %v671 = vpop.xlane.xlu0 %670
      %v672 = vadd.f32 %v409, %v410
      %v673 = vadd.f32 %v672, %v411
      %v674 = vadd.f32 %v673, %v412
      %v675 = vadd.f32 %v674, %v413
      %v676 = vadd.f32 %v675, %v414
      %v677 = vadd.f32 %v676, %v415
      %v678 = vadd.f32 %v677, %v416
      %679 = vadd.xlane.f32.xlu0 %v678
      %v680 = vpop.xlane.xlu0 %679
      %v681 = vadd.f32 %v417, %v418
      %v682 = vadd.f32 %v681, %v419
      %v683 = vadd.f32 %v682, %v420
      %v684 = vadd.f32 %v683, %v421
      %v685 = vadd.f32 %v684, %v422
      %v686 = vadd.f32 %v685, %v423
      %v687 = vadd.f32 %v686, %v424
      %688 = vadd.xlane.f32.xlu0 %v687
      %v689 = vpop.xlane.xlu0 %688
      %v690 = vadd.f32 %v425, %v426
      %v691 = vadd.f32 %v690, %v427
      %v692 = vadd.f32 %v691, %v428
      %v693 = vadd.f32 %v692, %v429
      %v694 = vadd.f32 %v693, %v430
      %v695 = vadd.f32 %v694, %v431
      %v696 = vadd.f32 %v695, %v432
      %697 = vadd.xlane.f32.xlu0 %v696
      %v698 = vpop.xlane.xlu0 %697
      %v699 = vadd.f32 %v433, %v434
      %v700 = vadd.f32 %v699, %v435
      %v701 = vadd.f32 %v700, %v436
      %v702 = vadd.f32 %v701, %v437
      %v703 = vadd.f32 %v702, %v438
      %v704 = vadd.f32 %v703, %v439
      %v705 = vadd.f32 %v704, %v440
      %706 = vadd.xlane.f32.xlu0 %v705
      %v707 = vpop.xlane.xlu0 %706
      %v708 = vadd.f32 %v441, %v442
      %v709 = vadd.f32 %v708, %v443
      %v710 = vadd.f32 %v709, %v444
      %v711 = vadd.f32 %v710, %v445
      %v712 = vadd.f32 %v711, %v446
      %v713 = vadd.f32 %v712, %v447
      %v714 = vadd.f32 %v713, %v448
      %715 = vadd.xlane.f32.xlu0 %v714
      %v716 = vpop.xlane.xlu0 %715
      %v717 = vadd.f32 %v449, %v450
      %v718 = vadd.f32 %v717, %v451
      %v719 = vadd.f32 %v718, %v452
      %v720 = vadd.f32 %v719, %v453
      %v721 = vadd.f32 %v720, %v454
      %v722 = vadd.f32 %v721, %v455
      %v723 = vadd.f32 %v722, %v456
      %724 = vadd.xlane.f32.xlu0 %v723
      %v725 = vpop.xlane.xlu0 %724
      %v726 = vadd.f32 %v457, %v458
      %v727 = vadd.f32 %v726, %v459
      %v728 = vadd.f32 %v727, %v460
      %v729 = vadd.f32 %v728, %v461
      %v730 = vadd.f32 %v729, %v462
      %v731 = vadd.f32 %v730, %v463
      %v732 = vadd.f32 %v731, %v464
      %733 = vadd.xlane.f32.xlu0 %v732
      %v734 = vpop.xlane.xlu0 %733
      %v735 = vadd.f32 %v465, %v466
      %v736 = vadd.f32 %v735, %v467
      %v737 = vadd.f32 %v736, %v468
      %v738 = vadd.f32 %v737, %v469
      %v739 = vadd.f32 %v738, %v470
      %v740 = vadd.f32 %v739, %v471
      %v741 = vadd.f32 %v740, %v472
      %742 = vadd.xlane.f32.xlu0 %v741
      %v743 = vpop.xlane.xlu0 %742
      %v744 = vadd.f32 %v473, %v474
      %v745 = vadd.f32 %v744, %v475
      %v746 = vadd.f32 %v745, %v476
      %v747 = vadd.f32 %v746, %v477
      %v748 = vadd.f32 %v747, %v478
      %v749 = vadd.f32 %v748, %v479
      %v750 = vadd.f32 %v749, %v480
      %751 = vadd.xlane.f32.xlu0 %v750
      %v752 = vpop.xlane.xlu0 %751
      %v753 = vmul.f32 %v617, 0.0009765625
      %v754 = vmul.f32 %v626, 0.0009765625
      %v755 = vmul.f32 %v635, 0.0009765625
      %v756 = vmul.f32 %v644, 0.0009765625
      %v757 = vmul.f32 %v653, 0.0009765625
      %v758 = vmul.f32 %v662, 0.0009765625
      %v759 = vmul.f32 %v671, 0.0009765625
      %v760 = vmul.f32 %v680, 0.0009765625
      %v761 = vmul.f32 %v689, 0.0009765625
      %v762 = vmul.f32 %v698, 0.0009765625
      %v763 = vmul.f32 %v707, 0.0009765625
      %v764 = vmul.f32 %v716, 0.0009765625
      %v765 = vmul.f32 %v725, 0.0009765625
      %v766 = vmul.f32 %v734, 0.0009765625
      %v767 = vmul.f32 %v743, 0.0009765625
      %v768 = vmul.f32 %v752, 0.0009765625
      %v769 = vadd.f32 %v481, %v482
      %v770 = vadd.f32 %v769, %v483
      %v771 = vadd.f32 %v770, %v484
      %v772 = vadd.f32 %v771, %v485
      %v773 = vadd.f32 %v772, %v486
      %v774 = vadd.f32 %v773, %v487
      %v775 = vadd.f32 %v774, %v488
      %776 = vadd.xlane.f32.xlu0 %v775
      %v777 = vpop.xlane.xlu0 %776
      %v778 = vadd.f32 %v489, %v490
      %v779 = vadd.f32 %v778, %v491
      %v780 = vadd.f32 %v779, %v492
      %v781 = vadd.f32 %v780, %v493
      %v782 = vadd.f32 %v781, %v494
      %v783 = vadd.f32 %v782, %v495
      %v784 = vadd.f32 %v783, %v496
      %785 = vadd.xlane.f32.xlu0 %v784
      %v786 = vpop.xlane.xlu0 %785
      %v787 = vadd.f32 %v497, %v498
      %v788 = vadd.f32 %v787, %v499
      %v789 = vadd.f32 %v788, %v500
      %v790 = vadd.f32 %v789, %v501
      %v791 = vadd.f32 %v790, %v502
      %v792 = vadd.f32 %v791, %v503
      %v793 = vadd.f32 %v792, %v504
      %794 = vadd.xlane.f32.xlu0 %v793
      %v795 = vpop.xlane.xlu0 %794
      %v796 = vadd.f32 %v505, %v506
      %v797 = vadd.f32 %v796, %v507
      %v798 = vadd.f32 %v797, %v508
      %v799 = vadd.f32 %v798, %v509
      %v800 = vadd.f32 %v799, %v510
      %v801 = vadd.f32 %v800, %v511
      %v802 = vadd.f32 %v801, %v512
      %803 = vadd.xlane.f32.xlu0 %v802
      %v804 = vpop.xlane.xlu0 %803
      %v805 = vadd.f32 %v513, %v514
      %v806 = vadd.f32 %v805, %v515
      %v807 = vadd.f32 %v806, %v516
      %v808 = vadd.f32 %v807, %v517
      %v809 = vadd.f32 %v808, %v518
      %v810 = vadd.f32 %v809, %v519
      %v811 = vadd.f32 %v810, %v520
      %812 = vadd.xlane.f32.xlu0 %v811
      %v813 = vpop.xlane.xlu0 %812
      %v814 = vadd.f32 %v521, %v522
      %v815 = vadd.f32 %v814, %v523
      %v816 = vadd.f32 %v815, %v524
      %v817 = vadd.f32 %v816, %v525
      %v818 = vadd.f32 %v817, %v526
      %v819 = vadd.f32 %v818, %v527
      %v820 = vadd.f32 %v819, %v528
      %821 = vadd.xlane.f32.xlu0 %v820
      %v822 = vpop.xlane.xlu0 %821
      %v823 = vadd.f32 %v529, %v530
      %v824 = vadd.f32 %v823, %v531
      %v825 = vadd.f32 %v824, %v532
      %v826 = vadd.f32 %v825, %v533
      %v827 = vadd.f32 %v826, %v534
      %v828 = vadd.f32 %v827, %v535
      %v829 = vadd.f32 %v828, %v536
      %830 = vadd.xlane.f32.xlu0 %v829
      %v831 = vpop.xlane.xlu0 %830
      %v832 = vadd.f32 %v537, %v538
      %v833 = vadd.f32 %v832, %v539
      %v834 = vadd.f32 %v833, %v540
      %v835 = vadd.f32 %v834, %v541
      %v836 = vadd.f32 %v835, %v542
      %v837 = vadd.f32 %v836, %v543
      %v838 = vadd.f32 %v837, %v544
      %839 = vadd.xlane.f32.xlu0 %v838
      %v840 = vpop.xlane.xlu0 %839
      %v841 = vadd.f32 %v545, %v546
      %v842 = vadd.f32 %v841, %v547
      %v843 = vadd.f32 %v842, %v548
      %v844 = vadd.f32 %v843, %v549
      %v845 = vadd.f32 %v844, %v550
      %v846 = vadd.f32 %v845, %v551
      %v847 = vadd.f32 %v846, %v552
      %848 = vadd.xlane.f32.xlu0 %v847
      %v849 = vpop.xlane.xlu0 %848
      %v850 = vadd.f32 %v553, %v554
      %v851 = vadd.f32 %v850, %v555
      %v852 = vadd.f32 %v851, %v556
      %v853 = vadd.f32 %v852, %v557
      %v854 = vadd.f32 %v853, %v558
      %v855 = vadd.f32 %v854, %v559
      %v856 = vadd.f32 %v855, %v560
      %857 = vadd.xlane.f32.xlu0 %v856
      %v858 = vpop.xlane.xlu0 %857
      %v859 = vadd.f32 %v561, %v562
      %v860 = vadd.f32 %v859, %v563
      %v861 = vadd.f32 %v860, %v564
      %v862 = vadd.f32 %v861, %v565
      %v863 = vadd.f32 %v862, %v566
      %v864 = vadd.f32 %v863, %v567
      %v865 = vadd.f32 %v864, %v568
      %866 = vadd.xlane.f32.xlu0 %v865
      %v867 = vpop.xlane.xlu0 %866
      %v868 = vadd.f32 %v569, %v570
      %v869 = vadd.f32 %v868, %v571
      %v870 = vadd.f32 %v869, %v572
      %v871 = vadd.f32 %v870, %v573
      %v872 = vadd.f32 %v871, %v574
      %v873 = vadd.f32 %v872, %v575
      %v874 = vadd.f32 %v873, %v576
      %875 = vadd.xlane.f32.xlu0 %v874
      %v876 = vpop.xlane.xlu0 %875
      %v877 = vadd.f32 %v577, %v578
      %v878 = vadd.f32 %v877, %v579
      %v879 = vadd.f32 %v878, %v580
      %v880 = vadd.f32 %v879, %v581
      %v881 = vadd.f32 %v880, %v582
      %v882 = vadd.f32 %v881, %v583
      %v883 = vadd.f32 %v882, %v584
      %884 = vadd.xlane.f32.xlu0 %v883
      %v885 = vpop.xlane.xlu0 %884
      %v886 = vadd.f32 %v585, %v586
      %v887 = vadd.f32 %v886, %v587
      %v888 = vadd.f32 %v887, %v588
      %v889 = vadd.f32 %v888, %v589
      %v890 = vadd.f32 %v889, %v590
      %v891 = vadd.f32 %v890, %v591
      %v892 = vadd.f32 %v891, %v592
      %893 = vadd.xlane.f32.xlu0 %v892
      %v894 = vpop.xlane.xlu0 %893
      %v895 = vadd.f32 %v593, %v594
      %v896 = vadd.f32 %v895, %v595
      %v897 = vadd.f32 %v896, %v596
      %v898 = vadd.f32 %v897, %v597
      %v899 = vadd.f32 %v898, %v598
      %v900 = vadd.f32 %v899, %v599
      %v901 = vadd.f32 %v900, %v600
      %902 = vadd.xlane.f32.xlu0 %v901
      %v903 = vpop.xlane.xlu0 %902
      %v904 = vadd.f32 %v601, %v602
      %v905 = vadd.f32 %v904, %v603
      %v906 = vadd.f32 %v905, %v604
      %v907 = vadd.f32 %v906, %v605
      %v908 = vadd.f32 %v907, %v606
      %v909 = vadd.f32 %v908, %v607
      %v910 = vadd.f32 %v909, %v608
      %911 = vadd.xlane.f32.xlu0 %v910
      %v912 = vpop.xlane.xlu0 %911
      %v913 = vmul.f32 %v777, 0.0009765625
      %v914 = vmul.f32 %v786, 0.0009765625
      %v915 = vmul.f32 %v795, 0.0009765625
      %v916 = vmul.f32 %v804, 0.0009765625
      %v917 = vmul.f32 %v813, 0.0009765625
      %v918 = vmul.f32 %v822, 0.0009765625
      %v919 = vmul.f32 %v831, 0.0009765625
      %v920 = vmul.f32 %v840, 0.0009765625
      %v921 = vmul.f32 %v849, 0.0009765625
      %v922 = vmul.f32 %v858, 0.0009765625
      %v923 = vmul.f32 %v867, 0.0009765625
      %v924 = vmul.f32 %v876, 0.0009765625
      %v925 = vmul.f32 %v885, 0.0009765625
      %v926 = vmul.f32 %v894, 0.0009765625
      %v927 = vmul.f32 %v903, 0.0009765625
      %v928 = vmul.f32 %v912, 0.0009765625
      %v929 = vld [vmem:[%s2] sm:$0xff]
      %v930 = vld [vmem:[%s2 + $0x8] sm:$0xff]
      %v931 = vld [vmem:[%s2 + $0x10] sm:$0xff]
      %v932 = vld [vmem:[%s2 + $0x18] sm:$0xff]
      %v933 = vld [vmem:[%s2 + $0x20] sm:$0xff]
      %v934 = vld [vmem:[%s2 + $0x28] sm:$0xff]
      %v935 = vld [vmem:[%s2 + $0x30] sm:$0xff]
      %v936 = vld [vmem:[%s2 + $0x38] sm:$0xff]
      %v937 = vld [vmem:[%s2 + $0x40] sm:$0xff]
      %v938 = vld [vmem:[%s2 + $0x48] sm:$0xff]
      %v939 = vld [vmem:[%s2 + $0x50] sm:$0xff]
      %v940 = vld [vmem:[%s2 + $0x58] sm:$0xff]
      %v941 = vld [vmem:[%s2 + $0x60] sm:$0xff]
      %v942 = vld [vmem:[%s2 + $0x68] sm:$0xff]
      %v943 = vld [vmem:[%s2 + $0x70] sm:$0xff]
      %v944 = vld [vmem:[%s2 + $0x78] sm:$0xff]
      %v945 = vld [vmem:[%s3] sm:$0xff]
      %v946 = vld [vmem:[%s3 + $0x8] sm:$0xff]
      %v947 = vld [vmem:[%s3 + $0x10] sm:$0xff]
      %v948 = vld [vmem:[%s3 + $0x18] sm:$0xff]
      %v949 = vld [vmem:[%s3 + $0x20] sm:$0xff]
      %v950 = vld [vmem:[%s3 + $0x28] sm:$0xff]
      %v951 = vld [vmem:[%s3 + $0x30] sm:$0xff]
      %v952 = vld [vmem:[%s3 + $0x38] sm:$0xff]
      %v953 = vld [vmem:[%s3 + $0x40] sm:$0xff]
      %v954 = vld [vmem:[%s3 + $0x48] sm:$0xff]
      %v955 = vld [vmem:[%s3 + $0x50] sm:$0xff]
      %v956 = vld [vmem:[%s3 + $0x58] sm:$0xff]
      %v957 = vld [vmem:[%s3 + $0x60] sm:$0xff]
      %v958 = vld [vmem:[%s3 + $0x68] sm:$0xff]
      %v959 = vld [vmem:[%s3 + $0x70] sm:$0xff]
      %v960 = vld [vmem:[%s3 + $0x78] sm:$0xff]
      %961 = vmatpush.msra.mxu0 %v768
      %962 = vmatpush.msra.mxu0 %v767
      %963 = vmatpush.msra.mxu0 %v766
      %964 = vmatpush.msra.mxu0 %v765
      %965 = vmatpush.msra.mxu0 %v764
      %966 = vmatpush.msra.mxu0 %v763
      %967 = vmatpush.msra.mxu0 %v762
      %968 = vmatpush.msra.mxu0 %v761
      %969 = vmatpush.msra.mxu0 %v760
      %970 = vmatpush.msra.mxu0 %v759
      %971 = vmatpush.msra.mxu0 %v758
      %972 = vmatpush.msra.mxu0 %v757
      %973 = vmatpush.msra.mxu0 %v756
      %974 = vmatpush.msra.mxu0 %v755
      %975 = vmatpush.msra.mxu0 %v754
      %976 = vmatpush.msra.mxu0 %v753
      %977 = vmatmul.f32.gmra.mxu0 %v929
      %v978 = vpop.f32.mrf.mxu0
      %v979 = vadd.f32 %v945, %v978
      %980 = vmatmul.f32.gmra.mxu0 %v930
      %v981 = vpop.f32.mrf.mxu0
      %v982 = vadd.f32 %v946, %v981
      %983 = vmatmul.f32.gmra.mxu0 %v931
      %v984 = vpop.f32.mrf.mxu0
      %v985 = vadd.f32 %v947, %v984
      %986 = vmatmul.f32.gmra.mxu0 %v932
      %v987 = vpop.f32.mrf.mxu0
      %v988 = vadd.f32 %v948, %v987
      %989 = vmatmul.f32.gmra.mxu0 %v933
      %v990 = vpop.f32.mrf.mxu0
      %v991 = vadd.f32 %v949, %v990
      %992 = vmatmul.f32.gmra.mxu0 %v934
      %v993 = vpop.f32.mrf.mxu0
      %v994 = vadd.f32 %v950, %v993
      %995 = vmatmul.f32.gmra.mxu0 %v935
      %v996 = vpop.f32.mrf.mxu0
      %v997 = vadd.f32 %v951, %v996
      %998 = vmatmul.f32.gmra.mxu0 %v936
      %v999 = vpop.f32.mrf.mxu0
      %v1000 = vadd.f32 %v952, %v999
      %1001 = vmatmul.f32.gmra.mxu0 %v937
      %v1002 = vpop.f32.mrf.mxu0
      %v1003 = vadd.f32 %v953, %v1002
      %1004 = vmatmul.f32.gmra.mxu0 %v938
      %v1005 = vpop.f32.mrf.mxu0
      %v1006 = vadd.f32 %v954, %v1005
      %1007 = vmatmul.f32.gmra.mxu0 %v939
      %v1008 = vpop.f32.mrf.mxu0
      %v1009 = vadd.f32 %v955, %v1008
      %1010 = vmatmul.f32.gmra.mxu0 %v940
      %v1011 = vpop.f32.mrf.mxu0
      %v1012 = vadd.f32 %v956, %v1011
      %1013 = vmatmul.f32.gmra.mxu0 %v941
      %v1014 = vpop.f32.mrf.mxu0
      %v1015 = vadd.f32 %v957, %v1014
      %1016 = vmatmul.f32.gmra.mxu0 %v942
      %v1017 = vpop.f32.mrf.mxu0
      %v1018 = vadd.f32 %v958, %v1017
      %1019 = vmatmul.f32.gmra.mxu0 %v943
      %v1020 = vpop.f32.mrf.mxu0
      %v1021 = vadd.f32 %v959, %v1020
      %1022 = vmatmul.f32.gmra.mxu0 %v944
      %v1023 = vpop.f32.mrf.mxu0
      %v1024 = vadd.f32 %v960, %v1023
      %1025 = vdwg.mxu0
      %v1026 = vld [vmem:[%s4] sm:$0xff]
      %v1027 = vld [vmem:[%s4 + $0x8] sm:$0xff]
      %v1028 = vld [vmem:[%s4 + $0x10] sm:$0xff]
      %v1029 = vld [vmem:[%s4 + $0x18] sm:$0xff]
      %v1030 = vld [vmem:[%s4 + $0x20] sm:$0xff]
      %v1031 = vld [vmem:[%s4 + $0x28] sm:$0xff]
      %v1032 = vld [vmem:[%s4 + $0x30] sm:$0xff]
      %v1033 = vld [vmem:[%s4 + $0x38] sm:$0xff]
      %v1034 = vld [vmem:[%s4 + $0x40] sm:$0xff]
      %v1035 = vld [vmem:[%s4 + $0x48] sm:$0xff]
      %v1036 = vld [vmem:[%s4 + $0x50] sm:$0xff]
      %v1037 = vld [vmem:[%s4 + $0x58] sm:$0xff]
      %v1038 = vld [vmem:[%s4 + $0x60] sm:$0xff]
      %v1039 = vld [vmem:[%s4 + $0x68] sm:$0xff]
      %v1040 = vld [vmem:[%s4 + $0x70] sm:$0xff]
      %v1041 = vld [vmem:[%s4 + $0x78] sm:$0xff]
      %v1042 = vld [vmem:[%s5] sm:$0xff]
      %v1043 = vld [vmem:[%s5 + $0x8] sm:$0xff]
      %v1044 = vld [vmem:[%s5 + $0x10] sm:$0xff]
      %v1045 = vld [vmem:[%s5 + $0x18] sm:$0xff]
      %v1046 = vld [vmem:[%s5 + $0x20] sm:$0xff]
      %v1047 = vld [vmem:[%s5 + $0x28] sm:$0xff]
      %v1048 = vld [vmem:[%s5 + $0x30] sm:$0xff]
      %v1049 = vld [vmem:[%s5 + $0x38] sm:$0xff]
      %v1050 = vld [vmem:[%s5 + $0x40] sm:$0xff]
      %v1051 = vld [vmem:[%s5 + $0x48] sm:$0xff]
      %v1052 = vld [vmem:[%s5 + $0x50] sm:$0xff]
      %v1053 = vld [vmem:[%s5 + $0x58] sm:$0xff]
      %v1054 = vld [vmem:[%s5 + $0x60] sm:$0xff]
      %v1055 = vld [vmem:[%s5 + $0x68] sm:$0xff]
      %v1056 = vld [vmem:[%s5 + $0x70] sm:$0xff]
      %v1057 = vld [vmem:[%s5 + $0x78] sm:$0xff]
      %1058 = vmatpush.msra.mxu0 %v928
      %1059 = vmatpush.msra.mxu0 %v927
      %1060 = vmatpush.msra.mxu0 %v926
      %1061 = vmatpush.msra.mxu0 %v925
      %1062 = vmatpush.msra.mxu0 %v924
      %1063 = vmatpush.msra.mxu0 %v923
      %1064 = vmatpush.msra.mxu0 %v922
      %1065 = vmatpush.msra.mxu0 %v921
      %1066 = vmatpush.msra.mxu0 %v920
      %1067 = vmatpush.msra.mxu0 %v919
      %1068 = vmatpush.msra.mxu0 %v918
      %1069 = vmatpush.msra.mxu0 %v917
      %1070 = vmatpush.msra.mxu0 %v916
      %1071 = vmatpush.msra.mxu0 %v915
      %1072 = vmatpush.msra.mxu0 %v914
      %1073 = vmatpush.msra.mxu0 %v913
      %1074 = vmatmul.f32.gmra.mxu0 %v1026
      %v1075 = vpop.f32.mrf.mxu0
      %v1076 = vadd.f32 %v1042, %v1075
      %1077 = vmatmul.f32.gmra.mxu0 %v1027
      %v1078 = vpop.f32.mrf.mxu0
      %v1079 = vadd.f32 %v1043, %v1078
      %1080 = vmatmul.f32.gmra.mxu0 %v1028
      %v1081 = vpop.f32.mrf.mxu0
      %v1082 = vadd.f32 %v1044, %v1081
      %1083 = vmatmul.f32.gmra.mxu0 %v1029
      %v1084 = vpop.f32.mrf.mxu0
      %v1085 = vadd.f32 %v1045, %v1084
      %1086 = vmatmul.f32.gmra.mxu0 %v1030
      %v1087 = vpop.f32.mrf.mxu0
      %v1088 = vadd.f32 %v1046, %v1087
      %1089 = vmatmul.f32.gmra.mxu0 %v1031
      %v1090 = vpop.f32.mrf.mxu0
      %v1091 = vadd.f32 %v1047, %v1090
      %1092 = vmatmul.f32.gmra.mxu0 %v1032
      %v1093 = vpop.f32.mrf.mxu0
      %v1094 = vadd.f32 %v1048, %v1093
      %1095 = vmatmul.f32.gmra.mxu0 %v1033
      %v1096 = vpop.f32.mrf.mxu0
      %v1097 = vadd.f32 %v1049, %v1096
      %1098 = vmatmul.f32.gmra.mxu0 %v1034
      %v1099 = vpop.f32.mrf.mxu0
      %v1100 = vadd.f32 %v1050, %v1099
      %1101 = vmatmul.f32.gmra.mxu0 %v1035
      %v1102 = vpop.f32.mrf.mxu0
      %v1103 = vadd.f32 %v1051, %v1102
      %1104 = vmatmul.f32.gmra.mxu0 %v1036
      %v1105 = vpop.f32.mrf.mxu0
      %v1106 = vadd.f32 %v1052, %v1105
      %1107 = vmatmul.f32.gmra.mxu0 %v1037
      %v1108 = vpop.f32.mrf.mxu0
      %v1109 = vadd.f32 %v1053, %v1108
      %1110 = vmatmul.f32.gmra.mxu0 %v1038
      %v1111 = vpop.f32.mrf.mxu0
      %v1112 = vadd.f32 %v1054, %v1111
      %1113 = vmatmul.f32.gmra.mxu0 %v1039
      %v1114 = vpop.f32.mrf.mxu0
      %v1115 = vadd.f32 %v1055, %v1114
      %1116 = vmatmul.f32.gmra.mxu0 %v1040
      %v1117 = vpop.f32.mrf.mxu0
      %v1118 = vadd.f32 %v1056, %v1117
      %1119 = vmatmul.f32.gmra.mxu0 %v1041
      %v1120 = vpop.f32.mrf.mxu0
      %v1121 = vadd.f32 %v1057, %v1120
      %1122 = vdwg.mxu0
      %v1123 = vsub.f32 0.0, %v979
      %v1124 = vsub.f32 0.0, %v982
      %v1125 = vsub.f32 0.0, %v985
      %v1126 = vsub.f32 0.0, %v988
      %v1127 = vsub.f32 0.0, %v991
      %v1128 = vsub.f32 0.0, %v994
      %v1129 = vsub.f32 0.0, %v997
      %v1130 = vsub.f32 0.0, %v1000
      %v1131 = vsub.f32 0.0, %v1003
      %v1132 = vsub.f32 0.0, %v1006
      %v1133 = vsub.f32 0.0, %v1009
      %v1134 = vsub.f32 0.0, %v1012
      %v1135 = vsub.f32 0.0, %v1015
      %v1136 = vsub.f32 0.0, %v1018
      %v1137 = vsub.f32 0.0, %v1021
      %v1138 = vsub.f32 0.0, %v1024
      %v1139 = vmul.f32 %v1123, 1.442695
      %v1140 = vpow.pop %v1139
      %v1141 = vmul.f32 %v1124, 1.442695
      %v1142 = vpow.pop %v1141
      %v1143 = vmul.f32 %v1125, 1.442695
      %v1144 = vpow.pop %v1143
      %v1145 = vmul.f32 %v1126, 1.442695
      %v1146 = vpow.pop %v1145
      %v1147 = vmul.f32 %v1127, 1.442695
      %v1148 = vpow.pop %v1147
      %v1149 = vmul.f32 %v1128, 1.442695
      %v1150 = vpow.pop %v1149
      %v1151 = vmul.f32 %v1129, 1.442695
      %v1152 = vpow.pop %v1151
      %v1153 = vmul.f32 %v1130, 1.442695
      %v1154 = vpow.pop %v1153
      %v1155 = vmul.f32 %v1131, 1.442695
      %v1156 = vpow.pop %v1155
      %v1157 = vmul.f32 %v1132, 1.442695
      %v1158 = vpow.pop %v1157
      %v1159 = vmul.f32 %v1133, 1.442695
      %v1160 = vpow.pop %v1159
      %v1161 = vmul.f32 %v1134, 1.442695
      %v1162 = vpow.pop %v1161
      %v1163 = vmul.f32 %v1135, 1.442695
      %v1164 = vpow.pop %v1163
      %v1165 = vmul.f32 %v1136, 1.442695
      %v1166 = vpow.pop %v1165
      %v1167 = vmul.f32 %v1137, 1.442695
      %v1168 = vpow.pop %v1167
      %v1169 = vmul.f32 %v1138, 1.442695
      %v1170 = vpow.pop %v1169
      %v1171 = vadd.f32 %v1140, 1.0
      %v1172 = vadd.f32 %v1142, 1.0
      %v1173 = vadd.f32 %v1144, 1.0
      %v1174 = vadd.f32 %v1146, 1.0
      %v1175 = vadd.f32 %v1148, 1.0
      %v1176 = vadd.f32 %v1150, 1.0
      %v1177 = vadd.f32 %v1152, 1.0
      %v1178 = vadd.f32 %v1154, 1.0
      %v1179 = vadd.f32 %v1156, 1.0
      %v1180 = vadd.f32 %v1158, 1.0
      %v1181 = vadd.f32 %v1160, 1.0
      %v1182 = vadd.f32 %v1162, 1.0
      %v1183 = vadd.f32 %v1164, 1.0
      %v1184 = vadd.f32 %v1166, 1.0
      %v1185 = vadd.f32 %v1168, 1.0
      %v1186 = vadd.f32 %v1170, 1.0
      %v1187 = vrcp.pop %v1171
      %v1188 = vmul.f32 %v1171, %v1187
      %v1189 = vsub.f32 1.0, %v1188
      %v1190 = vmul.f32 %v1187, %v1189
      %v1191 = vadd.f32 %v1187, %v1190
      %vm1192 = vweird.f32 %v1171
      %vm1193 = vweird.f32 %v1187
      %vm1194 = vmor %vm1192, %vm1193
      %v1195 = vsel %vm1194, %v1187, %v1191
      %v1196 = vand.u32 2147483647, %v1171
      %vm1197 = vcmp.eq.f32.partialorder %v1196, 8.507059e+37
      %v1198 = vand.u32 %v1171, 2147483648
      %v1199 = vor.u32 1.1754944e-38, %v1198
      %v1200 = vsel %vm1197, %v1199, %v1195
      %v1201 = vmul.f32 1.0, %v1200
      %v1202 = vrcp.pop %v1172
      %v1203 = vmul.f32 %v1172, %v1202
      %v1204 = vsub.f32 1.0, %v1203
      %v1205 = vmul.f32 %v1202, %v1204
      %v1206 = vadd.f32 %v1202, %v1205
      %vm1207 = vweird.f32 %v1172
      %vm1208 = vweird.f32 %v1202
      %vm1209 = vmor %vm1207, %vm1208
      %v1210 = vsel %vm1209, %v1202, %v1206
      %v1211 = vand.u32 2147483647, %v1172
      %vm1212 = vcmp.eq.f32.partialorder %v1211, 8.507059e+37
      %v1213 = vand.u32 %v1172, 2147483648
      %v1214 = vor.u32 1.1754944e-38, %v1213
      %v1215 = vsel %vm1212, %v1214, %v1210
      %v1216 = vmul.f32 1.0, %v1215
      %v1217 = vrcp.pop %v1173
      %v1218 = vmul.f32 %v1173, %v1217
      %v1219 = vsub.f32 1.0, %v1218
      %v1220 = vmul.f32 %v1217, %v1219
      %v1221 = vadd.f32 %v1217, %v1220
      %vm1222 = vweird.f32 %v1173
      %vm1223 = vweird.f32 %v1217
      %vm1224 = vmor %vm1222, %vm1223
      %v1225 = vsel %vm1224, %v1217, %v1221
      %v1226 = vand.u32 2147483647, %v1173
      %vm1227 = vcmp.eq.f32.partialorder %v1226, 8.507059e+37
      %v1228 = vand.u32 %v1173, 2147483648
      %v1229 = vor.u32 1.1754944e-38, %v1228
      %v1230 = vsel %vm1227, %v1229, %v1225
      %v1231 = vmul.f32 1.0, %v1230
      %v1232 = vrcp.pop %v1174
      %v1233 = vmul.f32 %v1174, %v1232
      %v1234 = vsub.f32 1.0, %v1233
      %v1235 = vmul.f32 %v1232, %v1234
      %v1236 = vadd.f32 %v1232, %v1235
      %vm1237 = vweird.f32 %v1174
      %vm1238 = vweird.f32 %v1232
      %vm1239 = vmor %vm1237, %vm1238
      %v1240 = vsel %vm1239, %v1232, %v1236
      %v1241 = vand.u32 2147483647, %v1174
      %vm1242 = vcmp.eq.f32.partialorder %v1241, 8.507059e+37
      %v1243 = vand.u32 %v1174, 2147483648
      %v1244 = vor.u32 1.1754944e-38, %v1243
      %v1245 = vsel %vm1242, %v1244, %v1240
      %v1246 = vmul.f32 1.0, %v1245
      %v1247 = vrcp.pop %v1175
      %v1248 = vmul.f32 %v1175, %v1247
      %v1249 = vsub.f32 1.0, %v1248
      %v1250 = vmul.f32 %v1247, %v1249
      %v1251 = vadd.f32 %v1247, %v1250
      %vm1252 = vweird.f32 %v1175
      %vm1253 = vweird.f32 %v1247
      %vm1254 = vmor %vm1252, %vm1253
      %v1255 = vsel %vm1254, %v1247, %v1251
      %v1256 = vand.u32 2147483647, %v1175
      %vm1257 = vcmp.eq.f32.partialorder %v1256, 8.507059e+37
      %v1258 = vand.u32 %v1175, 2147483648
      %v1259 = vor.u32 1.1754944e-38, %v1258
      %v1260 = vsel %vm1257, %v1259, %v1255
      %v1261 = vmul.f32 1.0, %v1260
      %v1262 = vrcp.pop %v1176
      %v1263 = vmul.f32 %v1176, %v1262
      %v1264 = vsub.f32 1.0, %v1263
      %v1265 = vmul.f32 %v1262, %v1264
      %v1266 = vadd.f32 %v1262, %v1265
      %vm1267 = vweird.f32 %v1176
      %vm1268 = vweird.f32 %v1262
      %vm1269 = vmor %vm1267, %vm1268
      %v1270 = vsel %vm1269, %v1262, %v1266
      %v1271 = vand.u32 2147483647, %v1176
      %vm1272 = vcmp.eq.f32.partialorder %v1271, 8.507059e+37
      %v1273 = vand.u32 %v1176, 2147483648
      %v1274 = vor.u32 1.1754944e-38, %v1273
      %v1275 = vsel %vm1272, %v1274, %v1270
      %v1276 = vmul.f32 1.0, %v1275
      %v1277 = vrcp.pop %v1177
      %v1278 = vmul.f32 %v1177, %v1277
      %v1279 = vsub.f32 1.0, %v1278
      %v1280 = vmul.f32 %v1277, %v1279
      %v1281 = vadd.f32 %v1277, %v1280
      %vm1282 = vweird.f32 %v1177
      %vm1283 = vweird.f32 %v1277
      %vm1284 = vmor %vm1282, %vm1283
      %v1285 = vsel %vm1284, %v1277, %v1281
      %v1286 = vand.u32 2147483647, %v1177
      %vm1287 = vcmp.eq.f32.partialorder %v1286, 8.507059e+37
      %v1288 = vand.u32 %v1177, 2147483648
      %v1289 = vor.u32 1.1754944e-38, %v1288
      %v1290 = vsel %vm1287, %v1289, %v1285
      %v1291 = vmul.f32 1.0, %v1290
      %v1292 = vrcp.pop %v1178
      %v1293 = vmul.f32 %v1178, %v1292
      %v1294 = vsub.f32 1.0, %v1293
      %v1295 = vmul.f32 %v1292, %v1294
      %v1296 = vadd.f32 %v1292, %v1295
      %vm1297 = vweird.f32 %v1178
      %vm1298 = vweird.f32 %v1292
      %vm1299 = vmor %vm1297, %vm1298
      %v1300 = vsel %vm1299, %v1292, %v1296
      %v1301 = vand.u32 2147483647, %v1178
      %vm1302 = vcmp.eq.f32.partialorder %v1301, 8.507059e+37
      %v1303 = vand.u32 %v1178, 2147483648
      %v1304 = vor.u32 1.1754944e-38, %v1303
      %v1305 = vsel %vm1302, %v1304, %v1300
      %v1306 = vmul.f32 1.0, %v1305
      %v1307 = vrcp.pop %v1179
      %v1308 = vmul.f32 %v1179, %v1307
      %v1309 = vsub.f32 1.0, %v1308
      %v1310 = vmul.f32 %v1307, %v1309
      %v1311 = vadd.f32 %v1307, %v1310
      %vm1312 = vweird.f32 %v1179
      %vm1313 = vweird.f32 %v1307
      %vm1314 = vmor %vm1312, %vm1313
      %v1315 = vsel %vm1314, %v1307, %v1311
      %v1316 = vand.u32 2147483647, %v1179
      %vm1317 = vcmp.eq.f32.partialorder %v1316, 8.507059e+37
      %v1318 = vand.u32 %v1179, 2147483648
      %v1319 = vor.u32 1.1754944e-38, %v1318
      %v1320 = vsel %vm1317, %v1319, %v1315
      %v1321 = vmul.f32 1.0, %v1320
      %v1322 = vrcp.pop %v1180
      %v1323 = vmul.f32 %v1180, %v1322
      %v1324 = vsub.f32 1.0, %v1323
      %v1325 = vmul.f32 %v1322, %v1324
      %v1326 = vadd.f32 %v1322, %v1325
      %vm1327 = vweird.f32 %v1180
      %vm1328 = vweird.f32 %v1322
      %vm1329 = vmor %vm1327, %vm1328
      %v1330 = vsel %vm1329, %v1322, %v1326
      %v1331 = vand.u32 2147483647, %v1180
      %vm1332 = vcmp.eq.f32.partialorder %v1331, 8.507059e+37
      %v1333 = vand.u32 %v1180, 2147483648
      %v1334 = vor.u32 1.1754944e-38, %v1333
      %v1335 = vsel %vm1332, %v1334, %v1330
      %v1336 = vmul.f32 1.0, %v1335
      %v1337 = vrcp.pop %v1181
      %v1338 = vmul.f32 %v1181, %v1337
      %v1339 = vsub.f32 1.0, %v1338
      %v1340 = vmul.f32 %v1337, %v1339
      %v1341 = vadd.f32 %v1337, %v1340
      %vm1342 = vweird.f32 %v1181
      %vm1343 = vweird.f32 %v1337
      %vm1344 = vmor %vm1342, %vm1343
      %v1345 = vsel %vm1344, %v1337, %v1341
      %v1346 = vand.u32 2147483647, %v1181
      %vm1347 = vcmp.eq.f32.partialorder %v1346, 8.507059e+37
      %v1348 = vand.u32 %v1181, 2147483648
      %v1349 = vor.u32 1.1754944e-38, %v1348
      %v1350 = vsel %vm1347, %v1349, %v1345
      %v1351 = vmul.f32 1.0, %v1350
      %v1352 = vrcp.pop %v1182
      %v1353 = vmul.f32 %v1182, %v1352
      %v1354 = vsub.f32 1.0, %v1353
      %v1355 = vmul.f32 %v1352, %v1354
      %v1356 = vadd.f32 %v1352, %v1355
      %vm1357 = vweird.f32 %v1182
      %vm1358 = vweird.f32 %v1352
      %vm1359 = vmor %vm1357, %vm1358
      %v1360 = vsel %vm1359, %v1352, %v1356
      %v1361 = vand.u32 2147483647, %v1182
      %vm1362 = vcmp.eq.f32.partialorder %v1361, 8.507059e+37
      %v1363 = vand.u32 %v1182, 2147483648
      %v1364 = vor.u32 1.1754944e-38, %v1363
      %v1365 = vsel %vm1362, %v1364, %v1360
      %v1366 = vmul.f32 1.0, %v1365
      %v1367 = vrcp.pop %v1183
      %v1368 = vmul.f32 %v1183, %v1367
      %v1369 = vsub.f32 1.0, %v1368
      %v1370 = vmul.f32 %v1367, %v1369
      %v1371 = vadd.f32 %v1367, %v1370
      %vm1372 = vweird.f32 %v1183
      %vm1373 = vweird.f32 %v1367
      %vm1374 = vmor %vm1372, %vm1373
      %v1375 = vsel %vm1374, %v1367, %v1371
      %v1376 = vand.u32 2147483647, %v1183
      %vm1377 = vcmp.eq.f32.partialorder %v1376, 8.507059e+37
      %v1378 = vand.u32 %v1183, 2147483648
      %v1379 = vor.u32 1.1754944e-38, %v1378
      %v1380 = vsel %vm1377, %v1379, %v1375
      %v1381 = vmul.f32 1.0, %v1380
      %v1382 = vrcp.pop %v1184
      %v1383 = vmul.f32 %v1184, %v1382
      %v1384 = vsub.f32 1.0, %v1383
      %v1385 = vmul.f32 %v1382, %v1384
      %v1386 = vadd.f32 %v1382, %v1385
      %vm1387 = vweird.f32 %v1184
      %vm1388 = vweird.f32 %v1382
      %vm1389 = vmor %vm1387, %vm1388
      %v1390 = vsel %vm1389, %v1382, %v1386
      %v1391 = vand.u32 2147483647, %v1184
      %vm1392 = vcmp.eq.f32.partialorder %v1391, 8.507059e+37
      %v1393 = vand.u32 %v1184, 2147483648
      %v1394 = vor.u32 1.1754944e-38, %v1393
      %v1395 = vsel %vm1392, %v1394, %v1390
      %v1396 = vmul.f32 1.0, %v1395
      %v1397 = vrcp.pop %v1185
      %v1398 = vmul.f32 %v1185, %v1397
      %v1399 = vsub.f32 1.0, %v1398
      %v1400 = vmul.f32 %v1397, %v1399
      %v1401 = vadd.f32 %v1397, %v1400
      %vm1402 = vweird.f32 %v1185
      %vm1403 = vweird.f32 %v1397
      %vm1404 = vmor %vm1402, %vm1403
      %v1405 = vsel %vm1404, %v1397, %v1401
      %v1406 = vand.u32 2147483647, %v1185
      %vm1407 = vcmp.eq.f32.partialorder %v1406, 8.507059e+37
      %v1408 = vand.u32 %v1185, 2147483648
      %v1409 = vor.u32 1.1754944e-38, %v1408
      %v1410 = vsel %vm1407, %v1409, %v1405
      %v1411 = vmul.f32 1.0, %v1410
      %v1412 = vrcp.pop %v1186
      %v1413 = vmul.f32 %v1186, %v1412
      %v1414 = vsub.f32 1.0, %v1413
      %v1415 = vmul.f32 %v1412, %v1414
      %v1416 = vadd.f32 %v1412, %v1415
      %vm1417 = vweird.f32 %v1186
      %vm1418 = vweird.f32 %v1412
      %vm1419 = vmor %vm1417, %vm1418
      %v1420 = vsel %vm1419, %v1412, %v1416
      %v1421 = vand.u32 2147483647, %v1186
      %vm1422 = vcmp.eq.f32.partialorder %v1421, 8.507059e+37
      %v1423 = vand.u32 %v1186, 2147483648
      %v1424 = vor.u32 1.1754944e-38, %v1423
      %v1425 = vsel %vm1422, %v1424, %v1420
      %v1426 = vmul.f32 1.0, %v1425
      %v1427 = vsub.f32 0.0, %v1076
      %v1428 = vsub.f32 0.0, %v1079
      %v1429 = vsub.f32 0.0, %v1082
      %v1430 = vsub.f32 0.0, %v1085
      %v1431 = vsub.f32 0.0, %v1088
      %v1432 = vsub.f32 0.0, %v1091
      %v1433 = vsub.f32 0.0, %v1094
      %v1434 = vsub.f32 0.0, %v1097
      %v1435 = vsub.f32 0.0, %v1100
      %v1436 = vsub.f32 0.0, %v1103
      %v1437 = vsub.f32 0.0, %v1106
      %v1438 = vsub.f32 0.0, %v1109
      %v1439 = vsub.f32 0.0, %v1112
      %v1440 = vsub.f32 0.0, %v1115
      %v1441 = vsub.f32 0.0, %v1118
      %v1442 = vsub.f32 0.0, %v1121
      %v1443 = vmul.f32 %v1427, 1.442695
      %v1444 = vpow.pop %v1443
      %v1445 = vmul.f32 %v1428, 1.442695
      %v1446 = vpow.pop %v1445
      %v1447 = vmul.f32 %v1429, 1.442695
      %v1448 = vpow.pop %v1447
      %v1449 = vmul.f32 %v1430, 1.442695
      %v1450 = vpow.pop %v1449
      %v1451 = vmul.f32 %v1431, 1.442695
      %v1452 = vpow.pop %v1451
      %v1453 = vmul.f32 %v1432, 1.442695
      %v1454 = vpow.pop %v1453
      %v1455 = vmul.f32 %v1433, 1.442695
      %v1456 = vpow.pop %v1455
      %v1457 = vmul.f32 %v1434, 1.442695
      %v1458 = vpow.pop %v1457
      %v1459 = vmul.f32 %v1435, 1.442695
      %v1460 = vpow.pop %v1459
      %v1461 = vmul.f32 %v1436, 1.442695
      %v1462 = vpow.pop %v1461
      %v1463 = vmul.f32 %v1437, 1.442695
      %v1464 = vpow.pop %v1463
      %v1465 = vmul.f32 %v1438, 1.442695
      %v1466 = vpow.pop %v1465
      %v1467 = vmul.f32 %v1439, 1.442695
      %v1468 = vpow.pop %v1467
      %v1469 = vmul.f32 %v1440, 1.442695
      %v1470 = vpow.pop %v1469
      %v1471 = vmul.f32 %v1441, 1.442695
      %v1472 = vpow.pop %v1471
      %v1473 = vmul.f32 %v1442, 1.442695
      %v1474 = vpow.pop %v1473
      %v1475 = vadd.f32 %v1444, 1.0
      %v1476 = vadd.f32 %v1446, 1.0
      %v1477 = vadd.f32 %v1448, 1.0
      %v1478 = vadd.f32 %v1450, 1.0
      %v1479 = vadd.f32 %v1452, 1.0
      %v1480 = vadd.f32 %v1454, 1.0
      %v1481 = vadd.f32 %v1456, 1.0
      %v1482 = vadd.f32 %v1458, 1.0
      %v1483 = vadd.f32 %v1460, 1.0
      %v1484 = vadd.f32 %v1462, 1.0
      %v1485 = vadd.f32 %v1464, 1.0
      %v1486 = vadd.f32 %v1466, 1.0
      %v1487 = vadd.f32 %v1468, 1.0
      %v1488 = vadd.f32 %v1470, 1.0
      %v1489 = vadd.f32 %v1472, 1.0
      %v1490 = vadd.f32 %v1474, 1.0
      %v1491 = vrcp.pop %v1475
      %v1492 = vmul.f32 %v1475, %v1491
      %v1493 = vsub.f32 1.0, %v1492
      %v1494 = vmul.f32 %v1491, %v1493
      %v1495 = vadd.f32 %v1491, %v1494
      %vm1496 = vweird.f32 %v1475
      %vm1497 = vweird.f32 %v1491
      %vm1498 = vmor %vm1496, %vm1497
      %v1499 = vsel %vm1498, %v1491, %v1495
      %v1500 = vand.u32 2147483647, %v1475
      %vm1501 = vcmp.eq.f32.partialorder %v1500, 8.507059e+37
      %v1502 = vand.u32 %v1475, 2147483648
      %v1503 = vor.u32 1.1754944e-38, %v1502
      %v1504 = vsel %vm1501, %v1503, %v1499
      %v1505 = vmul.f32 1.0, %v1504
      %v1506 = vrcp.pop %v1476
      %v1507 = vmul.f32 %v1476, %v1506
      %v1508 = vsub.f32 1.0, %v1507
      %v1509 = vmul.f32 %v1506, %v1508
      %v1510 = vadd.f32 %v1506, %v1509
      %vm1511 = vweird.f32 %v1476
      %vm1512 = vweird.f32 %v1506
      %vm1513 = vmor %vm1511, %vm1512
      %v1514 = vsel %vm1513, %v1506, %v1510
      %v1515 = vand.u32 2147483647, %v1476
      %vm1516 = vcmp.eq.f32.partialorder %v1515, 8.507059e+37
      %v1517 = vand.u32 %v1476, 2147483648
      %v1518 = vor.u32 1.1754944e-38, %v1517
      %v1519 = vsel %vm1516, %v1518, %v1514
      %v1520 = vmul.f32 1.0, %v1519
      %v1521 = vrcp.pop %v1477
      %v1522 = vmul.f32 %v1477, %v1521
      %v1523 = vsub.f32 1.0, %v1522
      %v1524 = vmul.f32 %v1521, %v1523
      %v1525 = vadd.f32 %v1521, %v1524
      %vm1526 = vweird.f32 %v1477
      %vm1527 = vweird.f32 %v1521
      %vm1528 = vmor %vm1526, %vm1527
      %v1529 = vsel %vm1528, %v1521, %v1525
      %v1530 = vand.u32 2147483647, %v1477
      %vm1531 = vcmp.eq.f32.partialorder %v1530, 8.507059e+37
      %v1532 = vand.u32 %v1477, 2147483648
      %v1533 = vor.u32 1.1754944e-38, %v1532
      %v1534 = vsel %vm1531, %v1533, %v1529
      %v1535 = vmul.f32 1.0, %v1534
      %v1536 = vrcp.pop %v1478
      %v1537 = vmul.f32 %v1478, %v1536
      %v1538 = vsub.f32 1.0, %v1537
      %v1539 = vmul.f32 %v1536, %v1538
      %v1540 = vadd.f32 %v1536, %v1539
      %vm1541 = vweird.f32 %v1478
      %vm1542 = vweird.f32 %v1536
      %vm1543 = vmor %vm1541, %vm1542
      %v1544 = vsel %vm1543, %v1536, %v1540
      %v1545 = vand.u32 2147483647, %v1478
      %vm1546 = vcmp.eq.f32.partialorder %v1545, 8.507059e+37
      %v1547 = vand.u32 %v1478, 2147483648
      %v1548 = vor.u32 1.1754944e-38, %v1547
      %v1549 = vsel %vm1546, %v1548, %v1544
      %v1550 = vmul.f32 1.0, %v1549
      %v1551 = vrcp.pop %v1479
      %v1552 = vmul.f32 %v1479, %v1551
      %v1553 = vsub.f32 1.0, %v1552
      %v1554 = vmul.f32 %v1551, %v1553
      %v1555 = vadd.f32 %v1551, %v1554
      %vm1556 = vweird.f32 %v1479
      %vm1557 = vweird.f32 %v1551
      %vm1558 = vmor %vm1556, %vm1557
      %v1559 = vsel %vm1558, %v1551, %v1555
      %v1560 = vand.u32 2147483647, %v1479
      %vm1561 = vcmp.eq.f32.partialorder %v1560, 8.507059e+37
      %v1562 = vand.u32 %v1479, 2147483648
      %v1563 = vor.u32 1.1754944e-38, %v1562
      %v1564 = vsel %vm1561, %v1563, %v1559
      %v1565 = vmul.f32 1.0, %v1564
      %v1566 = vrcp.pop %v1480
      %v1567 = vmul.f32 %v1480, %v1566
      %v1568 = vsub.f32 1.0, %v1567
      %v1569 = vmul.f32 %v1566, %v1568
      %v1570 = vadd.f32 %v1566, %v1569
      %vm1571 = vweird.f32 %v1480
      %vm1572 = vweird.f32 %v1566
      %vm1573 = vmor %vm1571, %vm1572
      %v1574 = vsel %vm1573, %v1566, %v1570
      %v1575 = vand.u32 2147483647, %v1480
      %vm1576 = vcmp.eq.f32.partialorder %v1575, 8.507059e+37
      %v1577 = vand.u32 %v1480, 2147483648
      %v1578 = vor.u32 1.1754944e-38, %v1577
      %v1579 = vsel %vm1576, %v1578, %v1574
      %v1580 = vmul.f32 1.0, %v1579
      %v1581 = vrcp.pop %v1481
      %v1582 = vmul.f32 %v1481, %v1581
      %v1583 = vsub.f32 1.0, %v1582
      %v1584 = vmul.f32 %v1581, %v1583
      %v1585 = vadd.f32 %v1581, %v1584
      %vm1586 = vweird.f32 %v1481
      %vm1587 = vweird.f32 %v1581
      %vm1588 = vmor %vm1586, %vm1587
      %v1589 = vsel %vm1588, %v1581, %v1585
      %v1590 = vand.u32 2147483647, %v1481
      %vm1591 = vcmp.eq.f32.partialorder %v1590, 8.507059e+37
      %v1592 = vand.u32 %v1481, 2147483648
      %v1593 = vor.u32 1.1754944e-38, %v1592
      %v1594 = vsel %vm1591, %v1593, %v1589
      %v1595 = vmul.f32 1.0, %v1594
      %v1596 = vrcp.pop %v1482
      %v1597 = vmul.f32 %v1482, %v1596
      %v1598 = vsub.f32 1.0, %v1597
      %v1599 = vmul.f32 %v1596, %v1598
      %v1600 = vadd.f32 %v1596, %v1599
      %vm1601 = vweird.f32 %v1482
      %vm1602 = vweird.f32 %v1596
      %vm1603 = vmor %vm1601, %vm1602
      %v1604 = vsel %vm1603, %v1596, %v1600
      %v1605 = vand.u32 2147483647, %v1482
      %vm1606 = vcmp.eq.f32.partialorder %v1605, 8.507059e+37
      %v1607 = vand.u32 %v1482, 2147483648
      %v1608 = vor.u32 1.1754944e-38, %v1607
      %v1609 = vsel %vm1606, %v1608, %v1604
      %v1610 = vmul.f32 1.0, %v1609
      %v1611 = vrcp.pop %v1483
      %v1612 = vmul.f32 %v1483, %v1611
      %v1613 = vsub.f32 1.0, %v1612
      %v1614 = vmul.f32 %v1611, %v1613
      %v1615 = vadd.f32 %v1611, %v1614
      %vm1616 = vweird.f32 %v1483
      %vm1617 = vweird.f32 %v1611
      %vm1618 = vmor %vm1616, %vm1617
      %v1619 = vsel %vm1618, %v1611, %v1615
      %v1620 = vand.u32 2147483647, %v1483
      %vm1621 = vcmp.eq.f32.partialorder %v1620, 8.507059e+37
      %v1622 = vand.u32 %v1483, 2147483648
      %v1623 = vor.u32 1.1754944e-38, %v1622
      %v1624 = vsel %vm1621, %v1623, %v1619
      %v1625 = vmul.f32 1.0, %v1624
      %v1626 = vrcp.pop %v1484
      %v1627 = vmul.f32 %v1484, %v1626
      %v1628 = vsub.f32 1.0, %v1627
      %v1629 = vmul.f32 %v1626, %v1628
      %v1630 = vadd.f32 %v1626, %v1629
      %vm1631 = vweird.f32 %v1484
      %vm1632 = vweird.f32 %v1626
      %vm1633 = vmor %vm1631, %vm1632
      %v1634 = vsel %vm1633, %v1626, %v1630
      %v1635 = vand.u32 2147483647, %v1484
      %vm1636 = vcmp.eq.f32.partialorder %v1635, 8.507059e+37
      %v1637 = vand.u32 %v1484, 2147483648
      %v1638 = vor.u32 1.1754944e-38, %v1637
      %v1639 = vsel %vm1636, %v1638, %v1634
      %v1640 = vmul.f32 1.0, %v1639
      %v1641 = vrcp.pop %v1485
      %v1642 = vmul.f32 %v1485, %v1641
      %v1643 = vsub.f32 1.0, %v1642
      %v1644 = vmul.f32 %v1641, %v1643
      %v1645 = vadd.f32 %v1641, %v1644
      %vm1646 = vweird.f32 %v1485
      %vm1647 = vweird.f32 %v1641
      %vm1648 = vmor %vm1646, %vm1647
      %v1649 = vsel %vm1648, %v1641, %v1645
      %v1650 = vand.u32 2147483647, %v1485
      %vm1651 = vcmp.eq.f32.partialorder %v1650, 8.507059e+37
      %v1652 = vand.u32 %v1485, 2147483648
      %v1653 = vor.u32 1.1754944e-38, %v1652
      %v1654 = vsel %vm1651, %v1653, %v1649
      %v1655 = vmul.f32 1.0, %v1654
      %v1656 = vrcp.pop %v1486
      %v1657 = vmul.f32 %v1486, %v1656
      %v1658 = vsub.f32 1.0, %v1657
      %v1659 = vmul.f32 %v1656, %v1658
      %v1660 = vadd.f32 %v1656, %v1659
      %vm1661 = vweird.f32 %v1486
      %vm1662 = vweird.f32 %v1656
      %vm1663 = vmor %vm1661, %vm1662
      %v1664 = vsel %vm1663, %v1656, %v1660
      %v1665 = vand.u32 2147483647, %v1486
      %vm1666 = vcmp.eq.f32.partialorder %v1665, 8.507059e+37
      %v1667 = vand.u32 %v1486, 2147483648
      %v1668 = vor.u32 1.1754944e-38, %v1667
      %v1669 = vsel %vm1666, %v1668, %v1664
      %v1670 = vmul.f32 1.0, %v1669
      %v1671 = vrcp.pop %v1487
      %v1672 = vmul.f32 %v1487, %v1671
      %v1673 = vsub.f32 1.0, %v1672
      %v1674 = vmul.f32 %v1671, %v1673
      %v1675 = vadd.f32 %v1671, %v1674
      %vm1676 = vweird.f32 %v1487
      %vm1677 = vweird.f32 %v1671
      %vm1678 = vmor %vm1676, %vm1677
      %v1679 = vsel %vm1678, %v1671, %v1675
      %v1680 = vand.u32 2147483647, %v1487
      %vm1681 = vcmp.eq.f32.partialorder %v1680, 8.507059e+37
      %v1682 = vand.u32 %v1487, 2147483648
      %v1683 = vor.u32 1.1754944e-38, %v1682
      %v1684 = vsel %vm1681, %v1683, %v1679
      %v1685 = vmul.f32 1.0, %v1684
      %v1686 = vrcp.pop %v1488
      %v1687 = vmul.f32 %v1488, %v1686
      %v1688 = vsub.f32 1.0, %v1687
      %v1689 = vmul.f32 %v1686, %v1688
      %v1690 = vadd.f32 %v1686, %v1689
      %vm1691 = vweird.f32 %v1488
      %vm1692 = vweird.f32 %v1686
      %vm1693 = vmor %vm1691, %vm1692
      %v1694 = vsel %vm1693, %v1686, %v1690
      %v1695 = vand.u32 2147483647, %v1488
      %vm1696 = vcmp.eq.f32.partialorder %v1695, 8.507059e+37
      %v1697 = vand.u32 %v1488, 2147483648
      %v1698 = vor.u32 1.1754944e-38, %v1697
      %v1699 = vsel %vm1696, %v1698, %v1694
      %v1700 = vmul.f32 1.0, %v1699
      %v1701 = vrcp.pop %v1489
      %v1702 = vmul.f32 %v1489, %v1701
      %v1703 = vsub.f32 1.0, %v1702
      %v1704 = vmul.f32 %v1701, %v1703
      %v1705 = vadd.f32 %v1701, %v1704
      %vm1706 = vweird.f32 %v1489
      %vm1707 = vweird.f32 %v1701
      %vm1708 = vmor %vm1706, %vm1707
      %v1709 = vsel %vm1708, %v1701, %v1705
      %v1710 = vand.u32 2147483647, %v1489
      %vm1711 = vcmp.eq.f32.partialorder %v1710, 8.507059e+37
      %v1712 = vand.u32 %v1489, 2147483648
      %v1713 = vor.u32 1.1754944e-38, %v1712
      %v1714 = vsel %vm1711, %v1713, %v1709
      %v1715 = vmul.f32 1.0, %v1714
      %v1716 = vrcp.pop %v1490
      %v1717 = vmul.f32 %v1490, %v1716
      %v1718 = vsub.f32 1.0, %v1717
      %v1719 = vmul.f32 %v1716, %v1718
      %v1720 = vadd.f32 %v1716, %v1719
      %vm1721 = vweird.f32 %v1490
      %vm1722 = vweird.f32 %v1716
      %vm1723 = vmor %vm1721, %vm1722
      %v1724 = vsel %vm1723, %v1716, %v1720
      %v1725 = vand.u32 2147483647, %v1490
      %vm1726 = vcmp.eq.f32.partialorder %v1725, 8.507059e+37
      %v1727 = vand.u32 %v1490, 2147483648
      %v1728 = vor.u32 1.1754944e-38, %v1727
      %v1729 = vsel %vm1726, %v1728, %v1724
      %v1730 = vmul.f32 1.0, %v1729
      %1732 = vset.pattern.permute.xlu0 0
      %1733 = vperm.xlu0 %1732, %v1505
      %v1734 = vpop.permute.xlu0 %1733
      %1737 = vset.pattern.permute.xlu0 0
      %1738 = vperm.xlu0 %1737, %v1520
      %v1739 = vpop.permute.xlu0 %1738
      %1742 = vset.pattern.permute.xlu0 0
      %1743 = vperm.xlu0 %1742, %v1535
      %v1744 = vpop.permute.xlu0 %1743
      %1747 = vset.pattern.permute.xlu0 0
      %1748 = vperm.xlu0 %1747, %v1550
      %v1749 = vpop.permute.xlu0 %1748
      %1752 = vset.pattern.permute.xlu0 0
      %1753 = vperm.xlu0 %1752, %v1565
      %v1754 = vpop.permute.xlu0 %1753
      %1757 = vset.pattern.permute.xlu0 0
      %1758 = vperm.xlu0 %1757, %v1580
      %v1759 = vpop.permute.xlu0 %1758
      %1762 = vset.pattern.permute.xlu0 0
      %1763 = vperm.xlu0 %1762, %v1595
      %v1764 = vpop.permute.xlu0 %1763
      %1767 = vset.pattern.permute.xlu0 0
      %1768 = vperm.xlu0 %1767, %v1610
      %v1769 = vpop.permute.xlu0 %1768
      %1772 = vset.pattern.permute.xlu0 0
      %1773 = vperm.xlu0 %1772, %v1625
      %v1774 = vpop.permute.xlu0 %1773
      %1777 = vset.pattern.permute.xlu0 0
      %1778 = vperm.xlu0 %1777, %v1640
      %v1779 = vpop.permute.xlu0 %1778
      %1782 = vset.pattern.permute.xlu0 0
      %1783 = vperm.xlu0 %1782, %v1655
      %v1784 = vpop.permute.xlu0 %1783
      %1787 = vset.pattern.permute.xlu0 0
      %1788 = vperm.xlu0 %1787, %v1670
      %v1789 = vpop.permute.xlu0 %1788
      %1792 = vset.pattern.permute.xlu0 0
      %1793 = vperm.xlu0 %1792, %v1685
      %v1794 = vpop.permute.xlu0 %1793
      %1797 = vset.pattern.permute.xlu0 0
      %1798 = vperm.xlu0 %1797, %v1700
      %v1799 = vpop.permute.xlu0 %1798
      %1802 = vset.pattern.permute.xlu0 0
      %1803 = vperm.xlu0 %1802, %v1715
      %v1804 = vpop.permute.xlu0 %1803
      %1807 = vset.pattern.permute.xlu0 0
      %1808 = vperm.xlu0 %1807, %v1730
      %v1809 = vpop.permute.xlu0 %1808
      %v1811 = vmul.f32 %v353, %v1734
      %v1812 = vmul.f32 %v354, %v1734
      %v1813 = vmul.f32 %v355, %v1734
      %v1814 = vmul.f32 %v356, %v1734
      %v1815 = vmul.f32 %v357, %v1734
      %v1816 = vmul.f32 %v358, %v1734
      %v1817 = vmul.f32 %v359, %v1734
      %v1818 = vmul.f32 %v360, %v1734
      %v1819 = vmul.f32 %v361, %v1739
      %v1820 = vmul.f32 %v362, %v1739
      %v1821 = vmul.f32 %v363, %v1739
      %v1822 = vmul.f32 %v364, %v1739
      %v1823 = vmul.f32 %v365, %v1739
      %v1824 = vmul.f32 %v366, %v1739
      %v1825 = vmul.f32 %v367, %v1739
      %v1826 = vmul.f32 %v368, %v1739
      %v1827 = vmul.f32 %v369, %v1744
      %v1828 = vmul.f32 %v370, %v1744
      %v1829 = vmul.f32 %v371, %v1744
      %v1830 = vmul.f32 %v372, %v1744
      %v1831 = vmul.f32 %v373, %v1744
      %v1832 = vmul.f32 %v374, %v1744
      %v1833 = vmul.f32 %v375, %v1744
      %v1834 = vmul.f32 %v376, %v1744
      %v1835 = vmul.f32 %v377, %v1749
      %v1836 = vmul.f32 %v378, %v1749
      %v1837 = vmul.f32 %v379, %v1749
      %v1838 = vmul.f32 %v380, %v1749
      %v1839 = vmul.f32 %v381, %v1749
      %v1840 = vmul.f32 %v382, %v1749
      %v1841 = vmul.f32 %v383, %v1749
      %v1842 = vmul.f32 %v384, %v1749
      %v1843 = vmul.f32 %v385, %v1754
      %v1844 = vmul.f32 %v386, %v1754
      %v1845 = vmul.f32 %v387, %v1754
      %v1846 = vmul.f32 %v388, %v1754
      %v1847 = vmul.f32 %v389, %v1754
      %v1848 = vmul.f32 %v390, %v1754
      %v1849 = vmul.f32 %v391, %v1754
      %v1850 = vmul.f32 %v392, %v1754
      %v1851 = vmul.f32 %v393, %v1759
      %v1852 = vmul.f32 %v394, %v1759
      %v1853 = vmul.f32 %v395, %v1759
      %v1854 = vmul.f32 %v396, %v1759
      %v1855 = vmul.f32 %v397, %v1759
      %v1856 = vmul.f32 %v398, %v1759
      %v1857 = vmul.f32 %v399, %v1759
      %v1858 = vmul.f32 %v400, %v1759
      %v1859 = vmul.f32 %v401, %v1764
      %v1860 = vmul.f32 %v402, %v1764
      %v1861 = vmul.f32 %v403, %v1764
      %v1862 = vmul.f32 %v404, %v1764
      %v1863 = vmul.f32 %v405, %v1764
      %v1864 = vmul.f32 %v406, %v1764
      %v1865 = vmul.f32 %v407, %v1764
      %v1866 = vmul.f32 %v408, %v1764
      %v1867 = vmul.f32 %v409, %v1769
      %v1868 = vmul.f32 %v410, %v1769
      %v1869 = vmul.f32 %v411, %v1769
      %v1870 = vmul.f32 %v412, %v1769
      %v1871 = vmul.f32 %v413, %v1769
      %v1872 = vmul.f32 %v414, %v1769
      %v1873 = vmul.f32 %v415, %v1769
      %v1874 = vmul.f32 %v416, %v1769
      %v1875 = vmul.f32 %v417, %v1774
      %v1876 = vmul.f32 %v418, %v1774
      %v1877 = vmul.f32 %v419, %v1774
      %v1878 = vmul.f32 %v420, %v1774
      %v1879 = vmul.f32 %v421, %v1774
      %v1880 = vmul.f32 %v422, %v1774
      %v1881 = vmul.f32 %v423, %v1774
      %v1882 = vmul.f32 %v424, %v1774
      %v1883 = vmul.f32 %v425, %v1779
      %v1884 = vmul.f32 %v426, %v1779
      %v1885 = vmul.f32 %v427, %v1779
      %v1886 = vmul.f32 %v428, %v1779
      %v1887 = vmul.f32 %v429, %v1779
      %v1888 = vmul.f32 %v430, %v1779
      %v1889 = vmul.f32 %v431, %v1779
      %v1890 = vmul.f32 %v432, %v1779
      %v1891 = vmul.f32 %v433, %v1784
      %v1892 = vmul.f32 %v434, %v1784
      %v1893 = vmul.f32 %v435, %v1784
      %v1894 = vmul.f32 %v436, %v1784
      %v1895 = vmul.f32 %v437, %v1784
      %v1896 = vmul.f32 %v438, %v1784
      %v1897 = vmul.f32 %v439, %v1784
      %v1898 = vmul.f32 %v440, %v1784
      %v1899 = vmul.f32 %v441, %v1789
      %v1900 = vmul.f32 %v442, %v1789
      %v1901 = vmul.f32 %v443, %v1789
      %v1902 = vmul.f32 %v444, %v1789
      %v1903 = vmul.f32 %v445, %v1789
      %v1904 = vmul.f32 %v446, %v1789
      %v1905 = vmul.f32 %v447, %v1789
      %v1906 = vmul.f32 %v448, %v1789
      %v1907 = vmul.f32 %v449, %v1794
      %v1908 = vmul.f32 %v450, %v1794
      %v1909 = vmul.f32 %v451, %v1794
      %v1910 = vmul.f32 %v452, %v1794
      %v1911 = vmul.f32 %v453, %v1794
      %v1912 = vmul.f32 %v454, %v1794
      %v1913 = vmul.f32 %v455, %v1794
      %v1914 = vmul.f32 %v456, %v1794
      %v1915 = vmul.f32 %v457, %v1799
      %v1916 = vmul.f32 %v458, %v1799
      %v1917 = vmul.f32 %v459, %v1799
      %v1918 = vmul.f32 %v460, %v1799
      %v1919 = vmul.f32 %v461, %v1799
      %v1920 = vmul.f32 %v462, %v1799
      %v1921 = vmul.f32 %v463, %v1799
      %v1922 = vmul.f32 %v464, %v1799
      %v1923 = vmul.f32 %v465, %v1804
      %v1924 = vmul.f32 %v466, %v1804
      %v1925 = vmul.f32 %v467, %v1804
      %v1926 = vmul.f32 %v468, %v1804
      %v1927 = vmul.f32 %v469, %v1804
      %v1928 = vmul.f32 %v470, %v1804
      %v1929 = vmul.f32 %v471, %v1804
      %v1930 = vmul.f32 %v472, %v1804
      %v1931 = vmul.f32 %v473, %v1809
      %v1932 = vmul.f32 %v474, %v1809
      %v1933 = vmul.f32 %v475, %v1809
      %v1934 = vmul.f32 %v476, %v1809
      %v1935 = vmul.f32 %v477, %v1809
      %v1936 = vmul.f32 %v478, %v1809
      %v1937 = vmul.f32 %v479, %v1809
      %v1938 = vmul.f32 %v480, %v1809
      %v1939 = vpack.c.bf16 %v1819, %v1811
      %v1940 = vpack.c.bf16 %v1820, %v1812
      %v1941 = vpack.c.bf16 %v1821, %v1813
      %v1942 = vpack.c.bf16 %v1822, %v1814
      %v1943 = vpack.c.bf16 %v1823, %v1815
      %v1944 = vpack.c.bf16 %v1824, %v1816
      %v1945 = vpack.c.bf16 %v1825, %v1817
      %v1946 = vpack.c.bf16 %v1826, %v1818
      %v1947 = vpack.c.bf16 %v1835, %v1827
      %v1948 = vpack.c.bf16 %v1836, %v1828
      %v1949 = vpack.c.bf16 %v1837, %v1829
      %v1950 = vpack.c.bf16 %v1838, %v1830
      %v1951 = vpack.c.bf16 %v1839, %v1831
      %v1952 = vpack.c.bf16 %v1840, %v1832
      %v1953 = vpack.c.bf16 %v1841, %v1833
      %v1954 = vpack.c.bf16 %v1842, %v1834
      %v1955 = vpack.c.bf16 %v1851, %v1843
      %v1956 = vpack.c.bf16 %v1852, %v1844
      %v1957 = vpack.c.bf16 %v1853, %v1845
      %v1958 = vpack.c.bf16 %v1854, %v1846
      %v1959 = vpack.c.bf16 %v1855, %v1847
      %v1960 = vpack.c.bf16 %v1856, %v1848
      %v1961 = vpack.c.bf16 %v1857, %v1849
      %v1962 = vpack.c.bf16 %v1858, %v1850
      %v1963 = vpack.c.bf16 %v1867, %v1859
      %v1964 = vpack.c.bf16 %v1868, %v1860
      %v1965 = vpack.c.bf16 %v1869, %v1861
      %v1966 = vpack.c.bf16 %v1870, %v1862
      %v1967 = vpack.c.bf16 %v1871, %v1863
      %v1968 = vpack.c.bf16 %v1872, %v1864
      %v1969 = vpack.c.bf16 %v1873, %v1865
      %v1970 = vpack.c.bf16 %v1874, %v1866
      %v1971 = vpack.c.bf16 %v1883, %v1875
      %v1972 = vpack.c.bf16 %v1884, %v1876
      %v1973 = vpack.c.bf16 %v1885, %v1877
      %v1974 = vpack.c.bf16 %v1886, %v1878
      %v1975 = vpack.c.bf16 %v1887, %v1879
      %v1976 = vpack.c.bf16 %v1888, %v1880
      %v1977 = vpack.c.bf16 %v1889, %v1881
      %v1978 = vpack.c.bf16 %v1890, %v1882
      %v1979 = vpack.c.bf16 %v1899, %v1891
      %v1980 = vpack.c.bf16 %v1900, %v1892
      %v1981 = vpack.c.bf16 %v1901, %v1893
      %v1982 = vpack.c.bf16 %v1902, %v1894
      %v1983 = vpack.c.bf16 %v1903, %v1895
      %v1984 = vpack.c.bf16 %v1904, %v1896
      %v1985 = vpack.c.bf16 %v1905, %v1897
      %v1986 = vpack.c.bf16 %v1906, %v1898
      %v1987 = vpack.c.bf16 %v1915, %v1907
      %v1988 = vpack.c.bf16 %v1916, %v1908
      %v1989 = vpack.c.bf16 %v1917, %v1909
      %v1990 = vpack.c.bf16 %v1918, %v1910
      %v1991 = vpack.c.bf16 %v1919, %v1911
      %v1992 = vpack.c.bf16 %v1920, %v1912
      %v1993 = vpack.c.bf16 %v1921, %v1913
      %v1994 = vpack.c.bf16 %v1922, %v1914
      %v1995 = vpack.c.bf16 %v1931, %v1923
      %v1996 = vpack.c.bf16 %v1932, %v1924
      %v1997 = vpack.c.bf16 %v1933, %v1925
      %v1998 = vpack.c.bf16 %v1934, %v1926
      %v1999 = vpack.c.bf16 %v1935, %v1927
      %v2000 = vpack.c.bf16 %v1936, %v1928
      %v2001 = vpack.c.bf16 %v1937, %v1929
      %v2002 = vpack.c.bf16 %v1938, %v1930
      %2004 = vset.pattern.permute.xlu0 0
      %2005 = vperm.xlu0 %2004, %v1201
      %v2006 = vpop.permute.xlu0 %2005
      %2009 = vset.pattern.permute.xlu0 0
      %2010 = vperm.xlu0 %2009, %v1216
      %v2011 = vpop.permute.xlu0 %2010
      %2014 = vset.pattern.permute.xlu0 0
      %2015 = vperm.xlu0 %2014, %v1231
      %v2016 = vpop.permute.xlu0 %2015
      %2019 = vset.pattern.permute.xlu0 0
      %2020 = vperm.xlu0 %2019, %v1246
      %v2021 = vpop.permute.xlu0 %2020
      %2024 = vset.pattern.permute.xlu0 0
      %2025 = vperm.xlu0 %2024, %v1261
      %v2026 = vpop.permute.xlu0 %2025
      %2029 = vset.pattern.permute.xlu0 0
      %2030 = vperm.xlu0 %2029, %v1276
      %v2031 = vpop.permute.xlu0 %2030
      %2034 = vset.pattern.permute.xlu0 0
      %2035 = vperm.xlu0 %2034, %v1291
      %v2036 = vpop.permute.xlu0 %2035
      %2039 = vset.pattern.permute.xlu0 0
      %2040 = vperm.xlu0 %2039, %v1306
      %v2041 = vpop.permute.xlu0 %2040
      %2044 = vset.pattern.permute.xlu0 0
      %2045 = vperm.xlu0 %2044, %v1321
      %v2046 = vpop.permute.xlu0 %2045
      %2049 = vset.pattern.permute.xlu0 0
      %2050 = vperm.xlu0 %2049, %v1336
      %v2051 = vpop.permute.xlu0 %2050
      %2054 = vset.pattern.permute.xlu0 0
      %2055 = vperm.xlu0 %2054, %v1351
      %v2056 = vpop.permute.xlu0 %2055
      %2059 = vset.pattern.permute.xlu0 0
      %2060 = vperm.xlu0 %2059, %v1366
      %v2061 = vpop.permute.xlu0 %2060
      %2064 = vset.pattern.permute.xlu0 0
      %2065 = vperm.xlu0 %2064, %v1381
      %v2066 = vpop.permute.xlu0 %2065
      %2069 = vset.pattern.permute.xlu0 0
      %2070 = vperm.xlu0 %2069, %v1396
      %v2071 = vpop.permute.xlu0 %2070
      %2074 = vset.pattern.permute.xlu0 0
      %2075 = vperm.xlu0 %2074, %v1411
      %v2076 = vpop.permute.xlu0 %2075
      %2079 = vset.pattern.permute.xlu0 0
      %2080 = vperm.xlu0 %2079, %v1426
      %v2081 = vpop.permute.xlu0 %2080
      %v2083 = vmul.f32 %v481, %v2006
      %v2084 = vmul.f32 %v482, %v2006
      %v2085 = vmul.f32 %v483, %v2006
      %v2086 = vmul.f32 %v484, %v2006
      %v2087 = vmul.f32 %v485, %v2006
      %v2088 = vmul.f32 %v486, %v2006
      %v2089 = vmul.f32 %v487, %v2006
      %v2090 = vmul.f32 %v488, %v2006
      %v2091 = vmul.f32 %v489, %v2011
      %v2092 = vmul.f32 %v490, %v2011
      %v2093 = vmul.f32 %v491, %v2011
      %v2094 = vmul.f32 %v492, %v2011
      %v2095 = vmul.f32 %v493, %v2011
      %v2096 = vmul.f32 %v494, %v2011
      %v2097 = vmul.f32 %v495, %v2011
      %v2098 = vmul.f32 %v496, %v2011
      %v2099 = vmul.f32 %v497, %v2016
      %v2100 = vmul.f32 %v498, %v2016
      %v2101 = vmul.f32 %v499, %v2016
      %v2102 = vmul.f32 %v500, %v2016
      %v2103 = vmul.f32 %v501, %v2016
      %v2104 = vmul.f32 %v502, %v2016
      %v2105 = vmul.f32 %v503, %v2016
      %v2106 = vmul.f32 %v504, %v2016
      %v2107 = vmul.f32 %v505, %v2021
      %v2108 = vmul.f32 %v506, %v2021
      %v2109 = vmul.f32 %v507, %v2021
      %v2110 = vmul.f32 %v508, %v2021
      %v2111 = vmul.f32 %v509, %v2021
      %v2112 = vmul.f32 %v510, %v2021
      %v2113 = vmul.f32 %v511, %v2021
      %v2114 = vmul.f32 %v512, %v2021
      %v2115 = vmul.f32 %v513, %v2026
      %v2116 = vmul.f32 %v514, %v2026
      %v2117 = vmul.f32 %v515, %v2026
      %v2118 = vmul.f32 %v516, %v2026
      %v2119 = vmul.f32 %v517, %v2026
      %v2120 = vmul.f32 %v518, %v2026
      %v2121 = vmul.f32 %v519, %v2026
      %v2122 = vmul.f32 %v520, %v2026
      %v2123 = vmul.f32 %v521, %v2031
      %v2124 = vmul.f32 %v522, %v2031
      %v2125 = vmul.f32 %v523, %v2031
      %v2126 = vmul.f32 %v524, %v2031
      %v2127 = vmul.f32 %v525, %v2031
      %v2128 = vmul.f32 %v526, %v2031
      %v2129 = vmul.f32 %v527, %v2031
      %v2130 = vmul.f32 %v528, %v2031
      %v2131 = vmul.f32 %v529, %v2036
      %v2132 = vmul.f32 %v530, %v2036
      %v2133 = vmul.f32 %v531, %v2036
      %v2134 = vmul.f32 %v532, %v2036
      %v2135 = vmul.f32 %v533, %v2036
      %v2136 = vmul.f32 %v534, %v2036
      %v2137 = vmul.f32 %v535, %v2036
      %v2138 = vmul.f32 %v536, %v2036
      %v2139 = vmul.f32 %v537, %v2041
      %v2140 = vmul.f32 %v538, %v2041
      %v2141 = vmul.f32 %v539, %v2041
      %v2142 = vmul.f32 %v540, %v2041
      %v2143 = vmul.f32 %v541, %v2041
      %v2144 = vmul.f32 %v542, %v2041
      %v2145 = vmul.f32 %v543, %v2041
      %v2146 = vmul.f32 %v544, %v2041
      %v2147 = vmul.f32 %v545, %v2046
      %v2148 = vmul.f32 %v546, %v2046
      %v2149 = vmul.f32 %v547, %v2046
      %v2150 = vmul.f32 %v548, %v2046
      %v2151 = vmul.f32 %v549, %v2046
      %v2152 = vmul.f32 %v550, %v2046
      %v2153 = vmul.f32 %v551, %v2046
      %v2154 = vmul.f32 %v552, %v2046
      %v2155 = vmul.f32 %v553, %v2051
      %v2156 = vmul.f32 %v554, %v2051
      %v2157 = vmul.f32 %v555, %v2051
      %v2158 = vmul.f32 %v556, %v2051
      %v2159 = vmul.f32 %v557, %v2051
      %v2160 = vmul.f32 %v558, %v2051
      %v2161 = vmul.f32 %v559, %v2051
      %v2162 = vmul.f32 %v560, %v2051
      %v2163 = vmul.f32 %v561, %v2056
      %v2164 = vmul.f32 %v562, %v2056
      %v2165 = vmul.f32 %v563, %v2056
      %v2166 = vmul.f32 %v564, %v2056
      %v2167 = vmul.f32 %v565, %v2056
      %v2168 = vmul.f32 %v566, %v2056
      %v2169 = vmul.f32 %v567, %v2056
      %v2170 = vmul.f32 %v568, %v2056
      %v2171 = vmul.f32 %v569, %v2061
      %v2172 = vmul.f32 %v570, %v2061
      %v2173 = vmul.f32 %v571, %v2061
      %v2174 = vmul.f32 %v572, %v2061
      %v2175 = vmul.f32 %v573, %v2061
      %v2176 = vmul.f32 %v574, %v2061
      %v2177 = vmul.f32 %v575, %v2061
      %v2178 = vmul.f32 %v576, %v2061
      %v2179 = vmul.f32 %v577, %v2066
      %v2180 = vmul.f32 %v578, %v2066
      %v2181 = vmul.f32 %v579, %v2066
      %v2182 = vmul.f32 %v580, %v2066
      %v2183 = vmul.f32 %v581, %v2066
      %v2184 = vmul.f32 %v582, %v2066
      %v2185 = vmul.f32 %v583, %v2066
      %v2186 = vmul.f32 %v584, %v2066
      %v2187 = vmul.f32 %v585, %v2071
      %v2188 = vmul.f32 %v586, %v2071
      %v2189 = vmul.f32 %v587, %v2071
      %v2190 = vmul.f32 %v588, %v2071
      %v2191 = vmul.f32 %v589, %v2071
      %v2192 = vmul.f32 %v590, %v2071
      %v2193 = vmul.f32 %v591, %v2071
      %v2194 = vmul.f32 %v592, %v2071
      %v2195 = vmul.f32 %v593, %v2076
      %v2196 = vmul.f32 %v594, %v2076
      %v2197 = vmul.f32 %v595, %v2076
      %v2198 = vmul.f32 %v596, %v2076
      %v2199 = vmul.f32 %v597, %v2076
      %v2200 = vmul.f32 %v598, %v2076
      %v2201 = vmul.f32 %v599, %v2076
      %v2202 = vmul.f32 %v600, %v2076
      %v2203 = vmul.f32 %v601, %v2081
      %v2204 = vmul.f32 %v602, %v2081
      %v2205 = vmul.f32 %v603, %v2081
      %v2206 = vmul.f32 %v604, %v2081
      %v2207 = vmul.f32 %v605, %v2081
      %v2208 = vmul.f32 %v606, %v2081
      %v2209 = vmul.f32 %v607, %v2081
      %v2210 = vmul.f32 %v608, %v2081
      %v2211 = vpack.c.bf16 %v2091, %v2083
      %v2212 = vpack.c.bf16 %v2092, %v2084
      %v2213 = vpack.c.bf16 %v2093, %v2085
      %v2214 = vpack.c.bf16 %v2094, %v2086
      %v2215 = vpack.c.bf16 %v2095, %v2087
      %v2216 = vpack.c.bf16 %v2096, %v2088
      %v2217 = vpack.c.bf16 %v2097, %v2089
      %v2218 = vpack.c.bf16 %v2098, %v2090
      %v2219 = vpack.c.bf16 %v2107, %v2099
      %v2220 = vpack.c.bf16 %v2108, %v2100
      %v2221 = vpack.c.bf16 %v2109, %v2101
      %v2222 = vpack.c.bf16 %v2110, %v2102
      %v2223 = vpack.c.bf16 %v2111, %v2103
      %v2224 = vpack.c.bf16 %v2112, %v2104
      %v2225 = vpack.c.bf16 %v2113, %v2105
      %v2226 = vpack.c.bf16 %v2114, %v2106
      %v2227 = vpack.c.bf16 %v2123, %v2115
      %v2228 = vpack.c.bf16 %v2124, %v2116
      %v2229 = vpack.c.bf16 %v2125, %v2117
      %v2230 = vpack.c.bf16 %v2126, %v2118
      %v2231 = vpack.c.bf16 %v2127, %v2119
      %v2232 = vpack.c.bf16 %v2128, %v2120
      %v2233 = vpack.c.bf16 %v2129, %v2121
      %v2234 = vpack.c.bf16 %v2130, %v2122
      %v2235 = vpack.c.bf16 %v2139, %v2131
      %v2236 = vpack.c.bf16 %v2140, %v2132
      %v2237 = vpack.c.bf16 %v2141, %v2133
      %v2238 = vpack.c.bf16 %v2142, %v2134
      %v2239 = vpack.c.bf16 %v2143, %v2135
      %v2240 = vpack.c.bf16 %v2144, %v2136
      %v2241 = vpack.c.bf16 %v2145, %v2137
      %v2242 = vpack.c.bf16 %v2146, %v2138
      %v2243 = vpack.c.bf16 %v2155, %v2147
      %v2244 = vpack.c.bf16 %v2156, %v2148
      %v2245 = vpack.c.bf16 %v2157, %v2149
      %v2246 = vpack.c.bf16 %v2158, %v2150
      %v2247 = vpack.c.bf16 %v2159, %v2151
      %v2248 = vpack.c.bf16 %v2160, %v2152
      %v2249 = vpack.c.bf16 %v2161, %v2153
      %v2250 = vpack.c.bf16 %v2162, %v2154
      %v2251 = vpack.c.bf16 %v2171, %v2163
      %v2252 = vpack.c.bf16 %v2172, %v2164
      %v2253 = vpack.c.bf16 %v2173, %v2165
      %v2254 = vpack.c.bf16 %v2174, %v2166
      %v2255 = vpack.c.bf16 %v2175, %v2167
      %v2256 = vpack.c.bf16 %v2176, %v2168
      %v2257 = vpack.c.bf16 %v2177, %v2169
      %v2258 = vpack.c.bf16 %v2178, %v2170
      %v2259 = vpack.c.bf16 %v2187, %v2179
      %v2260 = vpack.c.bf16 %v2188, %v2180
      %v2261 = vpack.c.bf16 %v2189, %v2181
      %v2262 = vpack.c.bf16 %v2190, %v2182
      %v2263 = vpack.c.bf16 %v2191, %v2183
      %v2264 = vpack.c.bf16 %v2192, %v2184
      %v2265 = vpack.c.bf16 %v2193, %v2185
      %v2266 = vpack.c.bf16 %v2194, %v2186
      %v2267 = vpack.c.bf16 %v2203, %v2195
      %v2268 = vpack.c.bf16 %v2204, %v2196
      %v2269 = vpack.c.bf16 %v2205, %v2197
      %v2270 = vpack.c.bf16 %v2206, %v2198
      %v2271 = vpack.c.bf16 %v2207, %v2199
      %v2272 = vpack.c.bf16 %v2208, %v2200
      %v2273 = vpack.c.bf16 %v2209, %v2201
      %v2274 = vpack.c.bf16 %v2210, %v2202
      %v2275 = vld [vmem:[%s6] sm:$0xf]
      %v2276 = vld [vmem:[%s6 + $0x4] sm:$0xf]
      %v2277 = vld [vmem:[%s6 + $0x8] sm:$0xf]
      %v2278 = vld [vmem:[%s6 + $0xc] sm:$0xf]
      %v2279 = vld [vmem:[%s6 + $0x10] sm:$0xf]
      %v2280 = vld [vmem:[%s6 + $0x14] sm:$0xf]
      %v2281 = vld [vmem:[%s6 + $0x18] sm:$0xf]
      %v2282 = vld [vmem:[%s6 + $0x1c] sm:$0xf]
      %v2283 = vld [vmem:[%s6 + $0x20] sm:$0xf]
      %v2284 = vld [vmem:[%s6 + $0x24] sm:$0xf]
      %v2285 = vld [vmem:[%s6 + $0x28] sm:$0xf]
      %v2286 = vld [vmem:[%s6 + $0x2c] sm:$0xf]
      %v2287 = vld [vmem:[%s6 + $0x30] sm:$0xf]
      %v2288 = vld [vmem:[%s6 + $0x34] sm:$0xf]
      %v2289 = vld [vmem:[%s6 + $0x38] sm:$0xf]
      %v2290 = vld [vmem:[%s6 + $0x3c] sm:$0xf]
      %v2291 = vld [vmem:[%s7] sm:$0xf]
      %v2292 = vld [vmem:[%s7 + $0x4] sm:$0xf]
      %v2293 = vld [vmem:[%s7 + $0x8] sm:$0xf]
      %v2294 = vld [vmem:[%s7 + $0xc] sm:$0xf]
      %v2295 = vld [vmem:[%s7 + $0x10] sm:$0xf]
      %v2296 = vld [vmem:[%s7 + $0x14] sm:$0xf]
      %v2297 = vld [vmem:[%s7 + $0x18] sm:$0xf]
      %v2298 = vld [vmem:[%s7 + $0x1c] sm:$0xf]
      %v2299 = vld [vmem:[%s7 + $0x20] sm:$0xf]
      %v2300 = vld [vmem:[%s7 + $0x24] sm:$0xf]
      %v2301 = vld [vmem:[%s7 + $0x28] sm:$0xf]
      %v2302 = vld [vmem:[%s7 + $0x2c] sm:$0xf]
      %v2303 = vld [vmem:[%s7 + $0x30] sm:$0xf]
      %v2304 = vld [vmem:[%s7 + $0x34] sm:$0xf]
      %v2305 = vld [vmem:[%s7 + $0x38] sm:$0xf]
      %v2306 = vld [vmem:[%s7 + $0x3c] sm:$0xf]
      %v2323 = vunpack.c.l.b16 %v2291
      %v2324 = vunpack.c.l.b16 %v2292
      %v2325 = vunpack.c.l.b16 %v2293
      %v2326 = vunpack.c.l.b16 %v2294
      %v2327 = vunpack.c.l.b16 %v2295
      %v2328 = vunpack.c.l.b16 %v2296
      %v2329 = vunpack.c.l.b16 %v2297
      %v2330 = vunpack.c.l.b16 %v2298
      %v2331 = vunpack.c.l.b16 %v2299
      %v2332 = vunpack.c.l.b16 %v2300
      %v2333 = vunpack.c.l.b16 %v2301
      %v2334 = vunpack.c.l.b16 %v2302
      %v2335 = vunpack.c.l.b16 %v2303
      %v2336 = vunpack.c.l.b16 %v2304
      %v2337 = vunpack.c.l.b16 %v2305
      %v2338 = vunpack.c.l.b16 %v2306
      %v2339 = vpack.c.b16 %v2324, %v2323
      %v2340 = vpack.c.b16 %v2326, %v2325
      %v2341 = vpack.c.b16 %v2328, %v2327
      %v2342 = vpack.c.b16 %v2330, %v2329
      %v2343 = vpack.c.b16 %v2332, %v2331
      %v2344 = vpack.c.b16 %v2334, %v2333
      %v2345 = vpack.c.b16 %v2336, %v2335
      %v2346 = vpack.c.b16 %v2338, %v2337
      %2355 = vmatpush.bf16.msra.mxu0 %v2267
      %2356 = vmatpush.bf16.msra.mxu0 %v2259
      %2357 = vmatpush.bf16.msra.mxu0 %v2251
      %2358 = vmatpush.bf16.msra.mxu0 %v2243
      %2359 = vmatpush.bf16.msra.mxu0 %v2235
      %2360 = vmatpush.bf16.msra.mxu0 %v2227
      %2361 = vmatpush.bf16.msra.mxu0 %v2219
      %2362 = vmatpush.bf16.msra.mxu0 %v2211
      %2363 = vmatmul.bf16.gmra.mxu0 %v2339
      %v2364 = vpop.f32.mrf.mxu0
      %v2365 = vadd.f32 0.0, %v2364
      %v2366 = vpop.f32.mrf.mxu0
      %v2367 = vadd.f32 0.0, %v2366
      %2368 = vmatmul.bf16.gmra.mxu0 %v2340
      %v2369 = vpop.f32.mrf.mxu0
      %v2370 = vadd.f32 0.0, %v2369
      %v2371 = vpop.f32.mrf.mxu0
      %v2372 = vadd.f32 0.0, %v2371
      %2373 = vmatmul.bf16.gmra.mxu0 %v2341
      %v2374 = vpop.f32.mrf.mxu0
      %v2375 = vadd.f32 0.0, %v2374
      %v2376 = vpop.f32.mrf.mxu0
      %v2377 = vadd.f32 0.0, %v2376
      %2378 = vmatmul.bf16.gmra.mxu0 %v2342
      %v2379 = vpop.f32.mrf.mxu0
      %v2380 = vadd.f32 0.0, %v2379
      %v2381 = vpop.f32.mrf.mxu0
      %v2382 = vadd.f32 0.0, %v2381
      %2383 = vmatmul.bf16.gmra.mxu0 %v2343
      %v2384 = vpop.f32.mrf.mxu0
      %v2385 = vadd.f32 0.0, %v2384
      %v2386 = vpop.f32.mrf.mxu0
      %v2387 = vadd.f32 0.0, %v2386
      %2388 = vmatmul.bf16.gmra.mxu0 %v2344
      %v2389 = vpop.f32.mrf.mxu0
      %v2390 = vadd.f32 0.0, %v2389
      %v2391 = vpop.f32.mrf.mxu0
      %v2392 = vadd.f32 0.0, %v2391
      %2393 = vmatmul.bf16.gmra.mxu0 %v2345
      %v2394 = vpop.f32.mrf.mxu0
      %v2395 = vadd.f32 0.0, %v2394
      %v2396 = vpop.f32.mrf.mxu0
      %v2397 = vadd.f32 0.0, %v2396
      %2398 = vmatmul.bf16.gmra.mxu0 %v2346
      %v2399 = vpop.f32.mrf.mxu0
      %v2400 = vadd.f32 0.0, %v2399
      %v2401 = vpop.f32.mrf.mxu0
      %v2402 = vadd.f32 0.0, %v2401
      %2403 = vdwg.mxu0
      %2404 = vmatpush.bf16.msra.mxu0 %v2268
      %2405 = vmatpush.bf16.msra.mxu0 %v2260
      %2406 = vmatpush.bf16.msra.mxu0 %v2252
      %2407 = vmatpush.bf16.msra.mxu0 %v2244
      %2408 = vmatpush.bf16.msra.mxu0 %v2236
      %2409 = vmatpush.bf16.msra.mxu0 %v2228
      %2410 = vmatpush.bf16.msra.mxu0 %v2220
      %2411 = vmatpush.bf16.msra.mxu0 %v2212
      %2412 = vmatmul.bf16.gmra.mxu0 %v2339
      %v2413 = vpop.f32.mrf.mxu0
      %v2414 = vadd.f32 0.0, %v2413
      %v2415 = vpop.f32.mrf.mxu0
      %v2416 = vadd.f32 0.0, %v2415
      %2417 = vmatmul.bf16.gmra.mxu0 %v2340
      %v2418 = vpop.f32.mrf.mxu0
      %v2419 = vadd.f32 0.0, %v2418
      %v2420 = vpop.f32.mrf.mxu0
      %v2421 = vadd.f32 0.0, %v2420
      %2422 = vmatmul.bf16.gmra.mxu0 %v2341
      %v2423 = vpop.f32.mrf.mxu0
      %v2424 = vadd.f32 0.0, %v2423
      %v2425 = vpop.f32.mrf.mxu0
      %v2426 = vadd.f32 0.0, %v2425
      %2427 = vmatmul.bf16.gmra.mxu0 %v2342
      %v2428 = vpop.f32.mrf.mxu0
      %v2429 = vadd.f32 0.0, %v2428
      %v2430 = vpop.f32.mrf.mxu0
      %v2431 = vadd.f32 0.0, %v2430
      %2432 = vmatmul.bf16.gmra.mxu0 %v2343
      %v2433 = vpop.f32.mrf.mxu0
      %v2434 = vadd.f32 0.0, %v2433
      %v2435 = vpop.f32.mrf.mxu0
      %v2436 = vadd.f32 0.0, %v2435
      %2437 = vmatmul.bf16.gmra.mxu0 %v2344
      %v2438 = vpop.f32.mrf.mxu0
      %v2439 = vadd.f32 0.0, %v2438
      %v2440 = vpop.f32.mrf.mxu0
      %v2441 = vadd.f32 0.0, %v2440
      %2442 = vmatmul.bf16.gmra.mxu0 %v2345
      %v2443 = vpop.f32.mrf.mxu0
      %v2444 = vadd.f32 0.0, %v2443
      %v2445 = vpop.f32.mrf.mxu0
      %v2446 = vadd.f32 0.0, %v2445
      %2447 = vmatmul.bf16.gmra.mxu0 %v2346
      %v2448 = vpop.f32.mrf.mxu0
      %v2449 = vadd.f32 0.0, %v2448
      %v2450 = vpop.f32.mrf.mxu0
      %v2451 = vadd.f32 0.0, %v2450
      %2452 = vdwg.mxu0
      %2453 = vmatpush.bf16.msra.mxu0 %v2269
      %2454 = vmatpush.bf16.msra.mxu0 %v2261
      %2455 = vmatpush.bf16.msra.mxu0 %v2253
      %2456 = vmatpush.bf16.msra.mxu0 %v2245
      %2457 = vmatpush.bf16.msra.mxu0 %v2237
      %2458 = vmatpush.bf16.msra.mxu0 %v2229
      %2459 = vmatpush.bf16.msra.mxu0 %v2221
      %2460 = vmatpush.bf16.msra.mxu0 %v2213
      %2461 = vmatmul.bf16.gmra.mxu0 %v2339
      %v2462 = vpop.f32.mrf.mxu0
      %v2463 = vadd.f32 0.0, %v2462
      %v2464 = vpop.f32.mrf.mxu0
      %v2465 = vadd.f32 0.0, %v2464
      %2466 = vmatmul.bf16.gmra.mxu0 %v2340
      %v2467 = vpop.f32.mrf.mxu0
      %v2468 = vadd.f32 0.0, %v2467
      %v2469 = vpop.f32.mrf.mxu0
      %v2470 = vadd.f32 0.0, %v2469
      %2471 = vmatmul.bf16.gmra.mxu0 %v2341
      %v2472 = vpop.f32.mrf.mxu0
      %v2473 = vadd.f32 0.0, %v2472
      %v2474 = vpop.f32.mrf.mxu0
      %v2475 = vadd.f32 0.0, %v2474
      %2476 = vmatmul.bf16.gmra.mxu0 %v2342
      %v2477 = vpop.f32.mrf.mxu0
      %v2478 = vadd.f32 0.0, %v2477
      %v2479 = vpop.f32.mrf.mxu0
      %v2480 = vadd.f32 0.0, %v2479
      %2481 = vmatmul.bf16.gmra.mxu0 %v2343
      %v2482 = vpop.f32.mrf.mxu0
      %v2483 = vadd.f32 0.0, %v2482
      %v2484 = vpop.f32.mrf.mxu0
      %v2485 = vadd.f32 0.0, %v2484
      %2486 = vmatmul.bf16.gmra.mxu0 %v2344
      %v2487 = vpop.f32.mrf.mxu0
      %v2488 = vadd.f32 0.0, %v2487
      %v2489 = vpop.f32.mrf.mxu0
      %v2490 = vadd.f32 0.0, %v2489
      %2491 = vmatmul.bf16.gmra.mxu0 %v2345
      %v2492 = vpop.f32.mrf.mxu0
      %v2493 = vadd.f32 0.0, %v2492
      %v2494 = vpop.f32.mrf.mxu0
      %v2495 = vadd.f32 0.0, %v2494
      %2496 = vmatmul.bf16.gmra.mxu0 %v2346
      %v2497 = vpop.f32.mrf.mxu0
      %v2498 = vadd.f32 0.0, %v2497
      %v2499 = vpop.f32.mrf.mxu0
      %v2500 = vadd.f32 0.0, %v2499
      %2501 = vdwg.mxu0
      %2502 = vmatpush.bf16.msra.mxu0 %v2270
      %2503 = vmatpush.bf16.msra.mxu0 %v2262
      %2504 = vmatpush.bf16.msra.mxu0 %v2254
      %2505 = vmatpush.bf16.msra.mxu0 %v2246
      %2506 = vmatpush.bf16.msra.mxu0 %v2238
      %2507 = vmatpush.bf16.msra.mxu0 %v2230
      %2508 = vmatpush.bf16.msra.mxu0 %v2222
      %2509 = vmatpush.bf16.msra.mxu0 %v2214
      %2510 = vmatmul.bf16.gmra.mxu0 %v2339
      %v2511 = vpop.f32.mrf.mxu0
      %v2512 = vadd.f32 0.0, %v2511
      %v2513 = vpop.f32.mrf.mxu0
      %v2514 = vadd.f32 0.0, %v2513
      %2515 = vmatmul.bf16.gmra.mxu0 %v2340
      %v2516 = vpop.f32.mrf.mxu0
      %v2517 = vadd.f32 0.0, %v2516
      %v2518 = vpop.f32.mrf.mxu0
      %v2519 = vadd.f32 0.0, %v2518
      %2520 = vmatmul.bf16.gmra.mxu0 %v2341
      %v2521 = vpop.f32.mrf.mxu0
      %v2522 = vadd.f32 0.0, %v2521
      %v2523 = vpop.f32.mrf.mxu0
      %v2524 = vadd.f32 0.0, %v2523
      %2525 = vmatmul.bf16.gmra.mxu0 %v2342
      %v2526 = vpop.f32.mrf.mxu0
      %v2527 = vadd.f32 0.0, %v2526
      %v2528 = vpop.f32.mrf.mxu0
      %v2529 = vadd.f32 0.0, %v2528
      %2530 = vmatmul.bf16.gmra.mxu0 %v2343
      %v2531 = vpop.f32.mrf.mxu0
      %v2532 = vadd.f32 0.0, %v2531
      %v2533 = vpop.f32.mrf.mxu0
      %v2534 = vadd.f32 0.0, %v2533
      %2535 = vmatmul.bf16.gmra.mxu0 %v2344
      %v2536 = vpop.f32.mrf.mxu0
      %v2537 = vadd.f32 0.0, %v2536
      %v2538 = vpop.f32.mrf.mxu0
      %v2539 = vadd.f32 0.0, %v2538
      %2540 = vmatmul.bf16.gmra.mxu0 %v2345
      %v2541 = vpop.f32.mrf.mxu0
      %v2542 = vadd.f32 0.0, %v2541
      %v2543 = vpop.f32.mrf.mxu0
      %v2544 = vadd.f32 0.0, %v2543
      %2545 = vmatmul.bf16.gmra.mxu0 %v2346
      %v2546 = vpop.f32.mrf.mxu0
      %v2547 = vadd.f32 0.0, %v2546
      %v2548 = vpop.f32.mrf.mxu0
      %v2549 = vadd.f32 0.0, %v2548
      %2550 = vdwg.mxu0
      %2551 = vmatpush.bf16.msra.mxu0 %v2271
      %2552 = vmatpush.bf16.msra.mxu0 %v2263
      %2553 = vmatpush.bf16.msra.mxu0 %v2255
      %2554 = vmatpush.bf16.msra.mxu0 %v2247
      %2555 = vmatpush.bf16.msra.mxu0 %v2239
      %2556 = vmatpush.bf16.msra.mxu0 %v2231
      %2557 = vmatpush.bf16.msra.mxu0 %v2223
      %2558 = vmatpush.bf16.msra.mxu0 %v2215
      %2559 = vmatmul.bf16.gmra.mxu0 %v2339
      %v2560 = vpop.f32.mrf.mxu0
      %v2561 = vadd.f32 0.0, %v2560
      %v2562 = vpop.f32.mrf.mxu0
      %v2563 = vadd.f32 0.0, %v2562
      %2564 = vmatmul.bf16.gmra.mxu0 %v2340
      %v2565 = vpop.f32.mrf.mxu0
      %v2566 = vadd.f32 0.0, %v2565
      %v2567 = vpop.f32.mrf.mxu0
      %v2568 = vadd.f32 0.0, %v2567
      %2569 = vmatmul.bf16.gmra.mxu0 %v2341
      %v2570 = vpop.f32.mrf.mxu0
      %v2571 = vadd.f32 0.0, %v2570
      %v2572 = vpop.f32.mrf.mxu0
      %v2573 = vadd.f32 0.0, %v2572
      %2574 = vmatmul.bf16.gmra.mxu0 %v2342
      %v2575 = vpop.f32.mrf.mxu0
      %v2576 = vadd.f32 0.0, %v2575
      %v2577 = vpop.f32.mrf.mxu0
      %v2578 = vadd.f32 0.0, %v2577
      %2579 = vmatmul.bf16.gmra.mxu0 %v2343
      %v2580 = vpop.f32.mrf.mxu0
      %v2581 = vadd.f32 0.0, %v2580
      %v2582 = vpop.f32.mrf.mxu0
      %v2583 = vadd.f32 0.0, %v2582
      %2584 = vmatmul.bf16.gmra.mxu0 %v2344
      %v2585 = vpop.f32.mrf.mxu0
      %v2586 = vadd.f32 0.0, %v2585
      %v2587 = vpop.f32.mrf.mxu0
      %v2588 = vadd.f32 0.0, %v2587
      %2589 = vmatmul.bf16.gmra.mxu0 %v2345
      %v2590 = vpop.f32.mrf.mxu0
      %v2591 = vadd.f32 0.0, %v2590
      %v2592 = vpop.f32.mrf.mxu0
      %v2593 = vadd.f32 0.0, %v2592
      %2594 = vmatmul.bf16.gmra.mxu0 %v2346
      %v2595 = vpop.f32.mrf.mxu0
      %v2596 = vadd.f32 0.0, %v2595
      %v2597 = vpop.f32.mrf.mxu0
      %v2598 = vadd.f32 0.0, %v2597
      %2599 = vdwg.mxu0
      %2600 = vmatpush.bf16.msra.mxu0 %v2272
      %2601 = vmatpush.bf16.msra.mxu0 %v2264
      %2602 = vmatpush.bf16.msra.mxu0 %v2256
      %2603 = vmatpush.bf16.msra.mxu0 %v2248
      %2604 = vmatpush.bf16.msra.mxu0 %v2240
      %2605 = vmatpush.bf16.msra.mxu0 %v2232
      %2606 = vmatpush.bf16.msra.mxu0 %v2224
      %2607 = vmatpush.bf16.msra.mxu0 %v2216
      %2608 = vmatmul.bf16.gmra.mxu0 %v2339
      %v2609 = vpop.f32.mrf.mxu0
      %v2610 = vadd.f32 0.0, %v2609
      %v2611 = vpop.f32.mrf.mxu0
      %v2612 = vadd.f32 0.0, %v2611
      %2613 = vmatmul.bf16.gmra.mxu0 %v2340
      %v2614 = vpop.f32.mrf.mxu0
      %v2615 = vadd.f32 0.0, %v2614
      %v2616 = vpop.f32.mrf.mxu0
      %v2617 = vadd.f32 0.0, %v2616
      %2618 = vmatmul.bf16.gmra.mxu0 %v2341
      %v2619 = vpop.f32.mrf.mxu0
      %v2620 = vadd.f32 0.0, %v2619
      %v2621 = vpop.f32.mrf.mxu0
      %v2622 = vadd.f32 0.0, %v2621
      %2623 = vmatmul.bf16.gmra.mxu0 %v2342
      %v2624 = vpop.f32.mrf.mxu0
      %v2625 = vadd.f32 0.0, %v2624
      %v2626 = vpop.f32.mrf.mxu0
      %v2627 = vadd.f32 0.0, %v2626
      %2628 = vmatmul.bf16.gmra.mxu0 %v2343
      %v2629 = vpop.f32.mrf.mxu0
      %v2630 = vadd.f32 0.0, %v2629
      %v2631 = vpop.f32.mrf.mxu0
      %v2632 = vadd.f32 0.0, %v2631
      %2633 = vmatmul.bf16.gmra.mxu0 %v2344
      %v2634 = vpop.f32.mrf.mxu0
      %v2635 = vadd.f32 0.0, %v2634
      %v2636 = vpop.f32.mrf.mxu0
      %v2637 = vadd.f32 0.0, %v2636
      %2638 = vmatmul.bf16.gmra.mxu0 %v2345
      %v2639 = vpop.f32.mrf.mxu0
      %v2640 = vadd.f32 0.0, %v2639
      %v2641 = vpop.f32.mrf.mxu0
      %v2642 = vadd.f32 0.0, %v2641
      %2643 = vmatmul.bf16.gmra.mxu0 %v2346
      %v2644 = vpop.f32.mrf.mxu0
      %v2645 = vadd.f32 0.0, %v2644
      %v2646 = vpop.f32.mrf.mxu0
      %v2647 = vadd.f32 0.0, %v2646
      %2648 = vdwg.mxu0
      %2649 = vmatpush.bf16.msra.mxu0 %v2273
      %2650 = vmatpush.bf16.msra.mxu0 %v2265
      %2651 = vmatpush.bf16.msra.mxu0 %v2257
      %2652 = vmatpush.bf16.msra.mxu0 %v2249
      %2653 = vmatpush.bf16.msra.mxu0 %v2241
      %2654 = vmatpush.bf16.msra.mxu0 %v2233
      %2655 = vmatpush.bf16.msra.mxu0 %v2225
      %2656 = vmatpush.bf16.msra.mxu0 %v2217
      %2657 = vmatmul.bf16.gmra.mxu0 %v2339
      %v2658 = vpop.f32.mrf.mxu0
      %v2659 = vadd.f32 0.0, %v2658
      %v2660 = vpop.f32.mrf.mxu0
      %v2661 = vadd.f32 0.0, %v2660
      %2662 = vmatmul.bf16.gmra.mxu0 %v2340
      %v2663 = vpop.f32.mrf.mxu0
      %v2664 = vadd.f32 0.0, %v2663
      %v2665 = vpop.f32.mrf.mxu0
      %v2666 = vadd.f32 0.0, %v2665
      %2667 = vmatmul.bf16.gmra.mxu0 %v2341
      %v2668 = vpop.f32.mrf.mxu0
      %v2669 = vadd.f32 0.0, %v2668
      %v2670 = vpop.f32.mrf.mxu0
      %v2671 = vadd.f32 0.0, %v2670
      %2672 = vmatmul.bf16.gmra.mxu0 %v2342
      %v2673 = vpop.f32.mrf.mxu0
      %v2674 = vadd.f32 0.0, %v2673
      %v2675 = vpop.f32.mrf.mxu0
      %v2676 = vadd.f32 0.0, %v2675
      %2677 = vmatmul.bf16.gmra.mxu0 %v2343
      %v2678 = vpop.f32.mrf.mxu0
      %v2679 = vadd.f32 0.0, %v2678
      %v2680 = vpop.f32.mrf.mxu0
      %v2681 = vadd.f32 0.0, %v2680
      %2682 = vmatmul.bf16.gmra.mxu0 %v2344
      %v2683 = vpop.f32.mrf.mxu0
      %v2684 = vadd.f32 0.0, %v2683
      %v2685 = vpop.f32.mrf.mxu0
      %v2686 = vadd.f32 0.0, %v2685
      %2687 = vmatmul.bf16.gmra.mxu0 %v2345
      %v2688 = vpop.f32.mrf.mxu0
      %v2689 = vadd.f32 0.0, %v2688
      %v2690 = vpop.f32.mrf.mxu0
      %v2691 = vadd.f32 0.0, %v2690
      %2692 = vmatmul.bf16.gmra.mxu0 %v2346
      %v2693 = vpop.f32.mrf.mxu0
      %v2694 = vadd.f32 0.0, %v2693
      %v2695 = vpop.f32.mrf.mxu0
      %v2696 = vadd.f32 0.0, %v2695
      %2697 = vdwg.mxu0
      %2698 = vmatpush.bf16.msra.mxu0 %v2274
      %2699 = vmatpush.bf16.msra.mxu0 %v2266
      %2700 = vmatpush.bf16.msra.mxu0 %v2258
      %2701 = vmatpush.bf16.msra.mxu0 %v2250
      %2702 = vmatpush.bf16.msra.mxu0 %v2242
      %2703 = vmatpush.bf16.msra.mxu0 %v2234
      %2704 = vmatpush.bf16.msra.mxu0 %v2226
      %2705 = vmatpush.bf16.msra.mxu0 %v2218
      %2706 = vmatmul.bf16.gmra.mxu0 %v2339
      %v2707 = vpop.f32.mrf.mxu0
      %v2708 = vadd.f32 0.0, %v2707
      %v2709 = vpop.f32.mrf.mxu0
      %v2710 = vadd.f32 0.0, %v2709
      %2711 = vmatmul.bf16.gmra.mxu0 %v2340
      %v2712 = vpop.f32.mrf.mxu0
      %v2713 = vadd.f32 0.0, %v2712
      %v2714 = vpop.f32.mrf.mxu0
      %v2715 = vadd.f32 0.0, %v2714
      %2716 = vmatmul.bf16.gmra.mxu0 %v2341
      %v2717 = vpop.f32.mrf.mxu0
      %v2718 = vadd.f32 0.0, %v2717
      %v2719 = vpop.f32.mrf.mxu0
      %v2720 = vadd.f32 0.0, %v2719
      %2721 = vmatmul.bf16.gmra.mxu0 %v2342
      %v2722 = vpop.f32.mrf.mxu0
      %v2723 = vadd.f32 0.0, %v2722
      %v2724 = vpop.f32.mrf.mxu0
      %v2725 = vadd.f32 0.0, %v2724
      %2726 = vmatmul.bf16.gmra.mxu0 %v2343
      %v2727 = vpop.f32.mrf.mxu0
      %v2728 = vadd.f32 0.0, %v2727
      %v2729 = vpop.f32.mrf.mxu0
      %v2730 = vadd.f32 0.0, %v2729
      %2731 = vmatmul.bf16.gmra.mxu0 %v2344
      %v2732 = vpop.f32.mrf.mxu0
      %v2733 = vadd.f32 0.0, %v2732
      %v2734 = vpop.f32.mrf.mxu0
      %v2735 = vadd.f32 0.0, %v2734
      %2736 = vmatmul.bf16.gmra.mxu0 %v2345
      %v2737 = vpop.f32.mrf.mxu0
      %v2738 = vadd.f32 0.0, %v2737
      %v2739 = vpop.f32.mrf.mxu0
      %v2740 = vadd.f32 0.0, %v2739
      %2741 = vmatmul.bf16.gmra.mxu0 %v2346
      %v2742 = vpop.f32.mrf.mxu0
      %v2743 = vadd.f32 0.0, %v2742
      %v2744 = vpop.f32.mrf.mxu0
      %v2745 = vadd.f32 0.0, %v2744
      %2746 = vdwg.mxu0
      %v2763 = vunpack.c.l.b16 %v2275
      %v2764 = vunpack.c.l.b16 %v2276
      %v2765 = vunpack.c.l.b16 %v2277
      %v2766 = vunpack.c.l.b16 %v2278
      %v2767 = vunpack.c.l.b16 %v2279
      %v2768 = vunpack.c.l.b16 %v2280
      %v2769 = vunpack.c.l.b16 %v2281
      %v2770 = vunpack.c.l.b16 %v2282
      %v2771 = vunpack.c.l.b16 %v2283
      %v2772 = vunpack.c.l.b16 %v2284
      %v2773 = vunpack.c.l.b16 %v2285
      %v2774 = vunpack.c.l.b16 %v2286
      %v2775 = vunpack.c.l.b16 %v2287
      %v2776 = vunpack.c.l.b16 %v2288
      %v2777 = vunpack.c.l.b16 %v2289
      %v2778 = vunpack.c.l.b16 %v2290
      %v2779 = vpack.c.b16 %v2764, %v2763
      %v2780 = vpack.c.b16 %v2766, %v2765
      %v2781 = vpack.c.b16 %v2768, %v2767
      %v2782 = vpack.c.b16 %v2770, %v2769
      %v2783 = vpack.c.b16 %v2772, %v2771
      %v2784 = vpack.c.b16 %v2774, %v2773
      %v2785 = vpack.c.b16 %v2776, %v2775
      %v2786 = vpack.c.b16 %v2778, %v2777
      %2795 = vmatpush.bf16.msra.mxu0 %v1995
      %2796 = vmatpush.bf16.msra.mxu0 %v1987
      %2797 = vmatpush.bf16.msra.mxu0 %v1979
      %2798 = vmatpush.bf16.msra.mxu0 %v1971
      %2799 = vmatpush.bf16.msra.mxu0 %v1963
      %2800 = vmatpush.bf16.msra.mxu0 %v1955
      %2801 = vmatpush.bf16.msra.mxu0 %v1947
      %2802 = vmatpush.bf16.msra.mxu0 %v1939
      %2803 = vmatmul.bf16.gmra.mxu0 %v2779
      %v2804 = vpop.f32.mrf.mxu0
      %v2805 = vadd.f32 %v2365, %v2804
      %v2806 = vpop.f32.mrf.mxu0
      %v2807 = vadd.f32 %v2367, %v2806
      %2808 = vmatmul.bf16.gmra.mxu0 %v2780
      %v2809 = vpop.f32.mrf.mxu0
      %v2810 = vadd.f32 %v2370, %v2809
      %v2811 = vpop.f32.mrf.mxu0
      %v2812 = vadd.f32 %v2372, %v2811
      %2813 = vmatmul.bf16.gmra.mxu0 %v2781
      %v2814 = vpop.f32.mrf.mxu0
      %v2815 = vadd.f32 %v2375, %v2814
      %v2816 = vpop.f32.mrf.mxu0
      %v2817 = vadd.f32 %v2377, %v2816
      %2818 = vmatmul.bf16.gmra.mxu0 %v2782
      %v2819 = vpop.f32.mrf.mxu0
      %v2820 = vadd.f32 %v2380, %v2819
      %v2821 = vpop.f32.mrf.mxu0
      %v2822 = vadd.f32 %v2382, %v2821
      %2823 = vmatmul.bf16.gmra.mxu0 %v2783
      %v2824 = vpop.f32.mrf.mxu0
      %v2825 = vadd.f32 %v2385, %v2824
      %v2826 = vpop.f32.mrf.mxu0
      %v2827 = vadd.f32 %v2387, %v2826
      %2828 = vmatmul.bf16.gmra.mxu0 %v2784
      %v2829 = vpop.f32.mrf.mxu0
      %v2830 = vadd.f32 %v2390, %v2829
      %v2831 = vpop.f32.mrf.mxu0
      %v2832 = vadd.f32 %v2392, %v2831
      %2833 = vmatmul.bf16.gmra.mxu0 %v2785
      %v2834 = vpop.f32.mrf.mxu0
      %v2835 = vadd.f32 %v2395, %v2834
      %v2836 = vpop.f32.mrf.mxu0
      %v2837 = vadd.f32 %v2397, %v2836
      %2838 = vmatmul.bf16.gmra.mxu0 %v2786
      %v2839 = vpop.f32.mrf.mxu0
      %v2840 = vadd.f32 %v2400, %v2839
      %v2841 = vpop.f32.mrf.mxu0
      %v2842 = vadd.f32 %v2402, %v2841
      %2843 = vdwg.mxu0
      %2844 = vmatpush.bf16.msra.mxu0 %v1996
      %2845 = vmatpush.bf16.msra.mxu0 %v1988
      %2846 = vmatpush.bf16.msra.mxu0 %v1980
      %2847 = vmatpush.bf16.msra.mxu0 %v1972
      %2848 = vmatpush.bf16.msra.mxu0 %v1964
      %2849 = vmatpush.bf16.msra.mxu0 %v1956
      %2850 = vmatpush.bf16.msra.mxu0 %v1948
      %2851 = vmatpush.bf16.msra.mxu0 %v1940
      %2852 = vmatmul.bf16.gmra.mxu0 %v2779
      %v2853 = vpop.f32.mrf.mxu0
      %v2854 = vadd.f32 %v2414, %v2853
      %v2855 = vpop.f32.mrf.mxu0
      %v2856 = vadd.f32 %v2416, %v2855
      %2857 = vmatmul.bf16.gmra.mxu0 %v2780
      %v2858 = vpop.f32.mrf.mxu0
      %v2859 = vadd.f32 %v2419, %v2858
      %v2860 = vpop.f32.mrf.mxu0
      %v2861 = vadd.f32 %v2421, %v2860
      %2862 = vmatmul.bf16.gmra.mxu0 %v2781
      %v2863 = vpop.f32.mrf.mxu0
      %v2864 = vadd.f32 %v2424, %v2863
      %v2865 = vpop.f32.mrf.mxu0
      %v2866 = vadd.f32 %v2426, %v2865
      %2867 = vmatmul.bf16.gmra.mxu0 %v2782
      %v2868 = vpop.f32.mrf.mxu0
      %v2869 = vadd.f32 %v2429, %v2868
      %v2870 = vpop.f32.mrf.mxu0
      %v2871 = vadd.f32 %v2431, %v2870
      %2872 = vmatmul.bf16.gmra.mxu0 %v2783
      %v2873 = vpop.f32.mrf.mxu0
      %v2874 = vadd.f32 %v2434, %v2873
      %v2875 = vpop.f32.mrf.mxu0
      %v2876 = vadd.f32 %v2436, %v2875
      %2877 = vmatmul.bf16.gmra.mxu0 %v2784
      %v2878 = vpop.f32.mrf.mxu0
      %v2879 = vadd.f32 %v2439, %v2878
      %v2880 = vpop.f32.mrf.mxu0
      %v2881 = vadd.f32 %v2441, %v2880
      %2882 = vmatmul.bf16.gmra.mxu0 %v2785
      %v2883 = vpop.f32.mrf.mxu0
      %v2884 = vadd.f32 %v2444, %v2883
      %v2885 = vpop.f32.mrf.mxu0
      %v2886 = vadd.f32 %v2446, %v2885
      %2887 = vmatmul.bf16.gmra.mxu0 %v2786
      %v2888 = vpop.f32.mrf.mxu0
      %v2889 = vadd.f32 %v2449, %v2888
      %v2890 = vpop.f32.mrf.mxu0
      %v2891 = vadd.f32 %v2451, %v2890
      %2892 = vdwg.mxu0
      %2893 = vmatpush.bf16.msra.mxu0 %v1997
      %2894 = vmatpush.bf16.msra.mxu0 %v1989
      %2895 = vmatpush.bf16.msra.mxu0 %v1981
      %2896 = vmatpush.bf16.msra.mxu0 %v1973
      %2897 = vmatpush.bf16.msra.mxu0 %v1965
      %2898 = vmatpush.bf16.msra.mxu0 %v1957
      %2899 = vmatpush.bf16.msra.mxu0 %v1949
      %2900 = vmatpush.bf16.msra.mxu0 %v1941
      %2901 = vmatmul.bf16.gmra.mxu0 %v2779
      %v2902 = vpop.f32.mrf.mxu0
      %v2903 = vadd.f32 %v2463, %v2902
      %v2904 = vpop.f32.mrf.mxu0
      %v2905 = vadd.f32 %v2465, %v2904
      %2906 = vmatmul.bf16.gmra.mxu0 %v2780
      %v2907 = vpop.f32.mrf.mxu0
      %v2908 = vadd.f32 %v2468, %v2907
      %v2909 = vpop.f32.mrf.mxu0
      %v2910 = vadd.f32 %v2470, %v2909
      %2911 = vmatmul.bf16.gmra.mxu0 %v2781
      %v2912 = vpop.f32.mrf.mxu0
      %v2913 = vadd.f32 %v2473, %v2912
      %v2914 = vpop.f32.mrf.mxu0
      %v2915 = vadd.f32 %v2475, %v2914
      %2916 = vmatmul.bf16.gmra.mxu0 %v2782
      %v2917 = vpop.f32.mrf.mxu0
      %v2918 = vadd.f32 %v2478, %v2917
      %v2919 = vpop.f32.mrf.mxu0
      %v2920 = vadd.f32 %v2480, %v2919
      %2921 = vmatmul.bf16.gmra.mxu0 %v2783
      %v2922 = vpop.f32.mrf.mxu0
      %v2923 = vadd.f32 %v2483, %v2922
      %v2924 = vpop.f32.mrf.mxu0
      %v2925 = vadd.f32 %v2485, %v2924
      %2926 = vmatmul.bf16.gmra.mxu0 %v2784
      %v2927 = vpop.f32.mrf.mxu0
      %v2928 = vadd.f32 %v2488, %v2927
      %v2929 = vpop.f32.mrf.mxu0
      %v2930 = vadd.f32 %v2490, %v2929
      %2931 = vmatmul.bf16.gmra.mxu0 %v2785
      %v2932 = vpop.f32.mrf.mxu0
      %v2933 = vadd.f32 %v2493, %v2932
      %v2934 = vpop.f32.mrf.mxu0
      %v2935 = vadd.f32 %v2495, %v2934
      %2936 = vmatmul.bf16.gmra.mxu0 %v2786
      %v2937 = vpop.f32.mrf.mxu0
      %v2938 = vadd.f32 %v2498, %v2937
      %v2939 = vpop.f32.mrf.mxu0
      %v2940 = vadd.f32 %v2500, %v2939
      %2941 = vdwg.mxu0
      %2942 = vmatpush.bf16.msra.mxu0 %v1998
      %2943 = vmatpush.bf16.msra.mxu0 %v1990
      %2944 = vmatpush.bf16.msra.mxu0 %v1982
      %2945 = vmatpush.bf16.msra.mxu0 %v1974
      %2946 = vmatpush.bf16.msra.mxu0 %v1966
      %2947 = vmatpush.bf16.msra.mxu0 %v1958
      %2948 = vmatpush.bf16.msra.mxu0 %v1950
      %2949 = vmatpush.bf16.msra.mxu0 %v1942
      %2950 = vmatmul.bf16.gmra.mxu0 %v2779
      %v2951 = vpop.f32.mrf.mxu0
      %v2952 = vadd.f32 %v2512, %v2951
      %v2953 = vpop.f32.mrf.mxu0
      %v2954 = vadd.f32 %v2514, %v2953
      %2955 = vmatmul.bf16.gmra.mxu0 %v2780
      %v2956 = vpop.f32.mrf.mxu0
      %v2957 = vadd.f32 %v2517, %v2956
      %v2958 = vpop.f32.mrf.mxu0
      %v2959 = vadd.f32 %v2519, %v2958
      %2960 = vmatmul.bf16.gmra.mxu0 %v2781
      %v2961 = vpop.f32.mrf.mxu0
      %v2962 = vadd.f32 %v2522, %v2961
      %v2963 = vpop.f32.mrf.mxu0
      %v2964 = vadd.f32 %v2524, %v2963
      %2965 = vmatmul.bf16.gmra.mxu0 %v2782
      %v2966 = vpop.f32.mrf.mxu0
      %v2967 = vadd.f32 %v2527, %v2966
      %v2968 = vpop.f32.mrf.mxu0
      %v2969 = vadd.f32 %v2529, %v2968
      %2970 = vmatmul.bf16.gmra.mxu0 %v2783
      %v2971 = vpop.f32.mrf.mxu0
      %v2972 = vadd.f32 %v2532, %v2971
      %v2973 = vpop.f32.mrf.mxu0
      %v2974 = vadd.f32 %v2534, %v2973
      %2975 = vmatmul.bf16.gmra.mxu0 %v2784
      %v2976 = vpop.f32.mrf.mxu0
      %v2977 = vadd.f32 %v2537, %v2976
      %v2978 = vpop.f32.mrf.mxu0
      %v2979 = vadd.f32 %v2539, %v2978
      %2980 = vmatmul.bf16.gmra.mxu0 %v2785
      %v2981 = vpop.f32.mrf.mxu0
      %v2982 = vadd.f32 %v2542, %v2981
      %v2983 = vpop.f32.mrf.mxu0
      %v2984 = vadd.f32 %v2544, %v2983
      %2985 = vmatmul.bf16.gmra.mxu0 %v2786
      %v2986 = vpop.f32.mrf.mxu0
      %v2987 = vadd.f32 %v2547, %v2986
      %v2988 = vpop.f32.mrf.mxu0
      %v2989 = vadd.f32 %v2549, %v2988
      %2990 = vdwg.mxu0
      %2991 = vmatpush.bf16.msra.mxu0 %v1999
      %2992 = vmatpush.bf16.msra.mxu0 %v1991
      %2993 = vmatpush.bf16.msra.mxu0 %v1983
      %2994 = vmatpush.bf16.msra.mxu0 %v1975
      %2995 = vmatpush.bf16.msra.mxu0 %v1967
      %2996 = vmatpush.bf16.msra.mxu0 %v1959
      %2997 = vmatpush.bf16.msra.mxu0 %v1951
      %2998 = vmatpush.bf16.msra.mxu0 %v1943
      %2999 = vmatmul.bf16.gmra.mxu0 %v2779
      %v3000 = vpop.f32.mrf.mxu0
      %v3001 = vadd.f32 %v2561, %v3000
      %v3002 = vpop.f32.mrf.mxu0
      %v3003 = vadd.f32 %v2563, %v3002
      %3004 = vmatmul.bf16.gmra.mxu0 %v2780
      %v3005 = vpop.f32.mrf.mxu0
      %v3006 = vadd.f32 %v2566, %v3005
      %v3007 = vpop.f32.mrf.mxu0
      %v3008 = vadd.f32 %v2568, %v3007
      %3009 = vmatmul.bf16.gmra.mxu0 %v2781
      %v3010 = vpop.f32.mrf.mxu0
      %v3011 = vadd.f32 %v2571, %v3010
      %v3012 = vpop.f32.mrf.mxu0
      %v3013 = vadd.f32 %v2573, %v3012
      %3014 = vmatmul.bf16.gmra.mxu0 %v2782
      %v3015 = vpop.f32.mrf.mxu0
      %v3016 = vadd.f32 %v2576, %v3015
      %v3017 = vpop.f32.mrf.mxu0
      %v3018 = vadd.f32 %v2578, %v3017
      %3019 = vmatmul.bf16.gmra.mxu0 %v2783
      %v3020 = vpop.f32.mrf.mxu0
      %v3021 = vadd.f32 %v2581, %v3020
      %v3022 = vpop.f32.mrf.mxu0
      %v3023 = vadd.f32 %v2583, %v3022
      %3024 = vmatmul.bf16.gmra.mxu0 %v2784
      %v3025 = vpop.f32.mrf.mxu0
      %v3026 = vadd.f32 %v2586, %v3025
      %v3027 = vpop.f32.mrf.mxu0
      %v3028 = vadd.f32 %v2588, %v3027
      %3029 = vmatmul.bf16.gmra.mxu0 %v2785
      %v3030 = vpop.f32.mrf.mxu0
      %v3031 = vadd.f32 %v2591, %v3030
      %v3032 = vpop.f32.mrf.mxu0
      %v3033 = vadd.f32 %v2593, %v3032
      %3034 = vmatmul.bf16.gmra.mxu0 %v2786
      %v3035 = vpop.f32.mrf.mxu0
      %v3036 = vadd.f32 %v2596, %v3035
      %v3037 = vpop.f32.mrf.mxu0
      %v3038 = vadd.f32 %v2598, %v3037
      %3039 = vdwg.mxu0
      %3040 = vmatpush.bf16.msra.mxu0 %v2000
      %3041 = vmatpush.bf16.msra.mxu0 %v1992
      %3042 = vmatpush.bf16.msra.mxu0 %v1984
      %3043 = vmatpush.bf16.msra.mxu0 %v1976
      %3044 = vmatpush.bf16.msra.mxu0 %v1968
      %3045 = vmatpush.bf16.msra.mxu0 %v1960
      %3046 = vmatpush.bf16.msra.mxu0 %v1952
      %3047 = vmatpush.bf16.msra.mxu0 %v1944
      %3048 = vmatmul.bf16.gmra.mxu0 %v2779
      %v3049 = vpop.f32.mrf.mxu0
      %v3050 = vadd.f32 %v2610, %v3049
      %v3051 = vpop.f32.mrf.mxu0
      %v3052 = vadd.f32 %v2612, %v3051
      %3053 = vmatmul.bf16.gmra.mxu0 %v2780
      %v3054 = vpop.f32.mrf.mxu0
      %v3055 = vadd.f32 %v2615, %v3054
      %v3056 = vpop.f32.mrf.mxu0
      %v3057 = vadd.f32 %v2617, %v3056
      %3058 = vmatmul.bf16.gmra.mxu0 %v2781
      %v3059 = vpop.f32.mrf.mxu0
      %v3060 = vadd.f32 %v2620, %v3059
      %v3061 = vpop.f32.mrf.mxu0
      %v3062 = vadd.f32 %v2622, %v3061
      %3063 = vmatmul.bf16.gmra.mxu0 %v2782
      %v3064 = vpop.f32.mrf.mxu0
      %v3065 = vadd.f32 %v2625, %v3064
      %v3066 = vpop.f32.mrf.mxu0
      %v3067 = vadd.f32 %v2627, %v3066
      %3068 = vmatmul.bf16.gmra.mxu0 %v2783
      %v3069 = vpop.f32.mrf.mxu0
      %v3070 = vadd.f32 %v2630, %v3069
      %v3071 = vpop.f32.mrf.mxu0
      %v3072 = vadd.f32 %v2632, %v3071
      %3073 = vmatmul.bf16.gmra.mxu0 %v2784
      %v3074 = vpop.f32.mrf.mxu0
      %v3075 = vadd.f32 %v2635, %v3074
      %v3076 = vpop.f32.mrf.mxu0
      %v3077 = vadd.f32 %v2637, %v3076
      %3078 = vmatmul.bf16.gmra.mxu0 %v2785
      %v3079 = vpop.f32.mrf.mxu0
      %v3080 = vadd.f32 %v2640, %v3079
      %v3081 = vpop.f32.mrf.mxu0
      %v3082 = vadd.f32 %v2642, %v3081
      %3083 = vmatmul.bf16.gmra.mxu0 %v2786
      %v3084 = vpop.f32.mrf.mxu0
      %v3085 = vadd.f32 %v2645, %v3084
      %v3086 = vpop.f32.mrf.mxu0
      %v3087 = vadd.f32 %v2647, %v3086
      %3088 = vdwg.mxu0
      %3089 = vmatpush.bf16.msra.mxu0 %v2001
      %3090 = vmatpush.bf16.msra.mxu0 %v1993
      %3091 = vmatpush.bf16.msra.mxu0 %v1985
      %3092 = vmatpush.bf16.msra.mxu0 %v1977
      %3093 = vmatpush.bf16.msra.mxu0 %v1969
      %3094 = vmatpush.bf16.msra.mxu0 %v1961
      %3095 = vmatpush.bf16.msra.mxu0 %v1953
      %3096 = vmatpush.bf16.msra.mxu0 %v1945
      %3097 = vmatmul.bf16.gmra.mxu0 %v2779
      %v3098 = vpop.f32.mrf.mxu0
      %v3099 = vadd.f32 %v2659, %v3098
      %v3100 = vpop.f32.mrf.mxu0
      %v3101 = vadd.f32 %v2661, %v3100
      %3102 = vmatmul.bf16.gmra.mxu0 %v2780
      %v3103 = vpop.f32.mrf.mxu0
      %v3104 = vadd.f32 %v2664, %v3103
      %v3105 = vpop.f32.mrf.mxu0
      %v3106 = vadd.f32 %v2666, %v3105
      %3107 = vmatmul.bf16.gmra.mxu0 %v2781
      %v3108 = vpop.f32.mrf.mxu0
      %v3109 = vadd.f32 %v2669, %v3108
      %v3110 = vpop.f32.mrf.mxu0
      %v3111 = vadd.f32 %v2671, %v3110
      %3112 = vmatmul.bf16.gmra.mxu0 %v2782
      %v3113 = vpop.f32.mrf.mxu0
      %v3114 = vadd.f32 %v2674, %v3113
      %v3115 = vpop.f32.mrf.mxu0
      %v3116 = vadd.f32 %v2676, %v3115
      %3117 = vmatmul.bf16.gmra.mxu0 %v2783
      %v3118 = vpop.f32.mrf.mxu0
      %v3119 = vadd.f32 %v2679, %v3118
      %v3120 = vpop.f32.mrf.mxu0
      %v3121 = vadd.f32 %v2681, %v3120
      %3122 = vmatmul.bf16.gmra.mxu0 %v2784
      %v3123 = vpop.f32.mrf.mxu0
      %v3124 = vadd.f32 %v2684, %v3123
      %v3125 = vpop.f32.mrf.mxu0
      %v3126 = vadd.f32 %v2686, %v3125
      %3127 = vmatmul.bf16.gmra.mxu0 %v2785
      %v3128 = vpop.f32.mrf.mxu0
      %v3129 = vadd.f32 %v2689, %v3128
      %v3130 = vpop.f32.mrf.mxu0
      %v3131 = vadd.f32 %v2691, %v3130
      %3132 = vmatmul.bf16.gmra.mxu0 %v2786
      %v3133 = vpop.f32.mrf.mxu0
      %v3134 = vadd.f32 %v2694, %v3133
      %v3135 = vpop.f32.mrf.mxu0
      %v3136 = vadd.f32 %v2696, %v3135
      %3137 = vdwg.mxu0
      %3138 = vmatpush.bf16.msra.mxu0 %v2002
      %3139 = vmatpush.bf16.msra.mxu0 %v1994
      %3140 = vmatpush.bf16.msra.mxu0 %v1986
      %3141 = vmatpush.bf16.msra.mxu0 %v1978
      %3142 = vmatpush.bf16.msra.mxu0 %v1970
      %3143 = vmatpush.bf16.msra.mxu0 %v1962
      %3144 = vmatpush.bf16.msra.mxu0 %v1954
      %3145 = vmatpush.bf16.msra.mxu0 %v1946
      %3146 = vmatmul.bf16.gmra.mxu0 %v2779
      %v3147 = vpop.f32.mrf.mxu0
      %v3148 = vadd.f32 %v2708, %v3147
      %v3149 = vpop.f32.mrf.mxu0
      %v3150 = vadd.f32 %v2710, %v3149
      %3151 = vmatmul.bf16.gmra.mxu0 %v2780
      %v3152 = vpop.f32.mrf.mxu0
      %v3153 = vadd.f32 %v2713, %v3152
      %v3154 = vpop.f32.mrf.mxu0
      %v3155 = vadd.f32 %v2715, %v3154
      %3156 = vmatmul.bf16.gmra.mxu0 %v2781
      %v3157 = vpop.f32.mrf.mxu0
      %v3158 = vadd.f32 %v2718, %v3157
      %v3159 = vpop.f32.mrf.mxu0
      %v3160 = vadd.f32 %v2720, %v3159
      %3161 = vmatmul.bf16.gmra.mxu0 %v2782
      %v3162 = vpop.f32.mrf.mxu0
      %v3163 = vadd.f32 %v2723, %v3162
      %v3164 = vpop.f32.mrf.mxu0
      %v3165 = vadd.f32 %v2725, %v3164
      %3166 = vmatmul.bf16.gmra.mxu0 %v2783
      %v3167 = vpop.f32.mrf.mxu0
      %v3168 = vadd.f32 %v2728, %v3167
      %v3169 = vpop.f32.mrf.mxu0
      %v3170 = vadd.f32 %v2730, %v3169
      %3171 = vmatmul.bf16.gmra.mxu0 %v2784
      %v3172 = vpop.f32.mrf.mxu0
      %v3173 = vadd.f32 %v2733, %v3172
      %v3174 = vpop.f32.mrf.mxu0
      %v3175 = vadd.f32 %v2735, %v3174
      %3176 = vmatmul.bf16.gmra.mxu0 %v2785
      %v3177 = vpop.f32.mrf.mxu0
      %v3178 = vadd.f32 %v2738, %v3177
      %v3179 = vpop.f32.mrf.mxu0
      %v3180 = vadd.f32 %v2740, %v3179
      %3181 = vmatmul.bf16.gmra.mxu0 %v2786
      %v3182 = vpop.f32.mrf.mxu0
      %v3183 = vadd.f32 %v2743, %v3182
      %v3184 = vpop.f32.mrf.mxu0
      %v3185 = vadd.f32 %v2745, %v3184
      %3186 = vdwg.mxu0
      %v3187 = vld [vmem:[%s8] sm:$0xff]
      %v3188 = vld [vmem:[%s8 + $0x8] sm:$0xff]
      %v3189 = vld [vmem:[%s8 + $0x10] sm:$0xff]
      %v3190 = vld [vmem:[%s8 + $0x18] sm:$0xff]
      %v3191 = vld [vmem:[%s8 + $0x20] sm:$0xff]
      %v3192 = vld [vmem:[%s8 + $0x28] sm:$0xff]
      %v3193 = vld [vmem:[%s8 + $0x30] sm:$0xff]
      %v3194 = vld [vmem:[%s8 + $0x38] sm:$0xff]
      %v3195 = vld [vmem:[%s8 + $0x40] sm:$0xff]
      %v3196 = vld [vmem:[%s8 + $0x48] sm:$0xff]
      %v3197 = vld [vmem:[%s8 + $0x50] sm:$0xff]
      %v3198 = vld [vmem:[%s8 + $0x58] sm:$0xff]
      %v3199 = vld [vmem:[%s8 + $0x60] sm:$0xff]
      %v3200 = vld [vmem:[%s8 + $0x68] sm:$0xff]
      %v3201 = vld [vmem:[%s8 + $0x70] sm:$0xff]
      %v3202 = vld [vmem:[%s8 + $0x78] sm:$0xff]
      %3204 = vset.pattern.permute.xlu0 0
      %3205 = vperm.xlu0 %3204, %v3187
      %v3206 = vpop.permute.xlu0 %3205
      %3209 = vset.pattern.permute.xlu0 0
      %3210 = vperm.xlu0 %3209, %v3188
      %v3211 = vpop.permute.xlu0 %3210
      %3214 = vset.pattern.permute.xlu0 0
      %3215 = vperm.xlu0 %3214, %v3189
      %v3216 = vpop.permute.xlu0 %3215
      %3219 = vset.pattern.permute.xlu0 0
      %3220 = vperm.xlu0 %3219, %v3190
      %v3221 = vpop.permute.xlu0 %3220
      %3224 = vset.pattern.permute.xlu0 0
      %3225 = vperm.xlu0 %3224, %v3191
      %v3226 = vpop.permute.xlu0 %3225
      %3229 = vset.pattern.permute.xlu0 0
      %3230 = vperm.xlu0 %3229, %v3192
      %v3231 = vpop.permute.xlu0 %3230
      %3234 = vset.pattern.permute.xlu0 0
      %3235 = vperm.xlu0 %3234, %v3193
      %v3236 = vpop.permute.xlu0 %3235
      %3239 = vset.pattern.permute.xlu0 0
      %3240 = vperm.xlu0 %3239, %v3194
      %v3241 = vpop.permute.xlu0 %3240
      %3244 = vset.pattern.permute.xlu0 0
      %3245 = vperm.xlu0 %3244, %v3195
      %v3246 = vpop.permute.xlu0 %3245
      %3249 = vset.pattern.permute.xlu0 0
      %3250 = vperm.xlu0 %3249, %v3196
      %v3251 = vpop.permute.xlu0 %3250
      %3254 = vset.pattern.permute.xlu0 0
      %3255 = vperm.xlu0 %3254, %v3197
      %v3256 = vpop.permute.xlu0 %3255
      %3259 = vset.pattern.permute.xlu0 0
      %3260 = vperm.xlu0 %3259, %v3198
      %v3261 = vpop.permute.xlu0 %3260
      %3264 = vset.pattern.permute.xlu0 0
      %3265 = vperm.xlu0 %3264, %v3199
      %v3266 = vpop.permute.xlu0 %3265
      %3269 = vset.pattern.permute.xlu0 0
      %3270 = vperm.xlu0 %3269, %v3200
      %v3271 = vpop.permute.xlu0 %3270
      %3274 = vset.pattern.permute.xlu0 0
      %3275 = vperm.xlu0 %3274, %v3201
      %v3276 = vpop.permute.xlu0 %3275
      %3279 = vset.pattern.permute.xlu0 0
      %3280 = vperm.xlu0 %3279, %v3202
      %v3281 = vpop.permute.xlu0 %3280
      %v3283 = vadd.f32 %v2805, %v3206
      %v3284 = vadd.f32 %v2854, %v3206
      %v3285 = vadd.f32 %v2903, %v3206
      %v3286 = vadd.f32 %v2952, %v3206
      %v3287 = vadd.f32 %v3001, %v3206
      %v3288 = vadd.f32 %v3050, %v3206
      %v3289 = vadd.f32 %v3099, %v3206
      %v3290 = vadd.f32 %v3148, %v3206
      %v3291 = vadd.f32 %v2807, %v3211
      %v3292 = vadd.f32 %v2856, %v3211
      %v3293 = vadd.f32 %v2905, %v3211
      %v3294 = vadd.f32 %v2954, %v3211
      %v3295 = vadd.f32 %v3003, %v3211
      %v3296 = vadd.f32 %v3052, %v3211
      %v3297 = vadd.f32 %v3101, %v3211
      %v3298 = vadd.f32 %v3150, %v3211
      %v3299 = vadd.f32 %v2810, %v3216
      %v3300 = vadd.f32 %v2859, %v3216
      %v3301 = vadd.f32 %v2908, %v3216
      %v3302 = vadd.f32 %v2957, %v3216
      %v3303 = vadd.f32 %v3006, %v3216
      %v3304 = vadd.f32 %v3055, %v3216
      %v3305 = vadd.f32 %v3104, %v3216
      %v3306 = vadd.f32 %v3153, %v3216
      %v3307 = vadd.f32 %v2812, %v3221
      %v3308 = vadd.f32 %v2861, %v3221
      %v3309 = vadd.f32 %v2910, %v3221
      %v3310 = vadd.f32 %v2959, %v3221
      %v3311 = vadd.f32 %v3008, %v3221
      %v3312 = vadd.f32 %v3057, %v3221
      %v3313 = vadd.f32 %v3106, %v3221
      %v3314 = vadd.f32 %v3155, %v3221
      %v3315 = vadd.f32 %v2815, %v3226
      %v3316 = vadd.f32 %v2864, %v3226
      %v3317 = vadd.f32 %v2913, %v3226
      %v3318 = vadd.f32 %v2962, %v3226
      %v3319 = vadd.f32 %v3011, %v3226
      %v3320 = vadd.f32 %v3060, %v3226
      %v3321 = vadd.f32 %v3109, %v3226
      %v3322 = vadd.f32 %v3158, %v3226
      %v3323 = vadd.f32 %v2817, %v3231
      %v3324 = vadd.f32 %v2866, %v3231
      %v3325 = vadd.f32 %v2915, %v3231
      %v3326 = vadd.f32 %v2964, %v3231
      %v3327 = vadd.f32 %v3013, %v3231
      %v3328 = vadd.f32 %v3062, %v3231
      %v3329 = vadd.f32 %v3111, %v3231
      %v3330 = vadd.f32 %v3160, %v3231
      %v3331 = vadd.f32 %v2820, %v3236
      %v3332 = vadd.f32 %v2869, %v3236
      %v3333 = vadd.f32 %v2918, %v3236
      %v3334 = vadd.f32 %v2967, %v3236
      %v3335 = vadd.f32 %v3016, %v3236
      %v3336 = vadd.f32 %v3065, %v3236
      %v3337 = vadd.f32 %v3114, %v3236
      %v3338 = vadd.f32 %v3163, %v3236
      %v3339 = vadd.f32 %v2822, %v3241
      %v3340 = vadd.f32 %v2871, %v3241
      %v3341 = vadd.f32 %v2920, %v3241
      %v3342 = vadd.f32 %v2969, %v3241
      %v3343 = vadd.f32 %v3018, %v3241
      %v3344 = vadd.f32 %v3067, %v3241
      %v3345 = vadd.f32 %v3116, %v3241
      %v3346 = vadd.f32 %v3165, %v3241
      %v3347 = vadd.f32 %v2825, %v3246
      %v3348 = vadd.f32 %v2874, %v3246
      %v3349 = vadd.f32 %v2923, %v3246
      %v3350 = vadd.f32 %v2972, %v3246
      %v3351 = vadd.f32 %v3021, %v3246
      %v3352 = vadd.f32 %v3070, %v3246
      %v3353 = vadd.f32 %v3119, %v3246
      %v3354 = vadd.f32 %v3168, %v3246
      %v3355 = vadd.f32 %v2827, %v3251
      %v3356 = vadd.f32 %v2876, %v3251
      %v3357 = vadd.f32 %v2925, %v3251
      %v3358 = vadd.f32 %v2974, %v3251
      %v3359 = vadd.f32 %v3023, %v3251
      %v3360 = vadd.f32 %v3072, %v3251
      %v3361 = vadd.f32 %v3121, %v3251
      %v3362 = vadd.f32 %v3170, %v3251
      %v3363 = vadd.f32 %v2830, %v3256
      %v3364 = vadd.f32 %v2879, %v3256
      %v3365 = vadd.f32 %v2928, %v3256
      %v3366 = vadd.f32 %v2977, %v3256
      %v3367 = vadd.f32 %v3026, %v3256
      %v3368 = vadd.f32 %v3075, %v3256
      %v3369 = vadd.f32 %v3124, %v3256
      %v3370 = vadd.f32 %v3173, %v3256
      %v3371 = vadd.f32 %v2832, %v3261
      %v3372 = vadd.f32 %v2881, %v3261
      %v3373 = vadd.f32 %v2930, %v3261
      %v3374 = vadd.f32 %v2979, %v3261
      %v3375 = vadd.f32 %v3028, %v3261
      %v3376 = vadd.f32 %v3077, %v3261
      %v3377 = vadd.f32 %v3126, %v3261
      %v3378 = vadd.f32 %v3175, %v3261
      %v3379 = vadd.f32 %v2835, %v3266
      %v3380 = vadd.f32 %v2884, %v3266
      %v3381 = vadd.f32 %v2933, %v3266
      %v3382 = vadd.f32 %v2982, %v3266
      %v3383 = vadd.f32 %v3031, %v3266
      %v3384 = vadd.f32 %v3080, %v3266
      %v3385 = vadd.f32 %v3129, %v3266
      %v3386 = vadd.f32 %v3178, %v3266
      %v3387 = vadd.f32 %v2837, %v3271
      %v3388 = vadd.f32 %v2886, %v3271
      %v3389 = vadd.f32 %v2935, %v3271
      %v3390 = vadd.f32 %v2984, %v3271
      %v3391 = vadd.f32 %v3033, %v3271
      %v3392 = vadd.f32 %v3082, %v3271
      %v3393 = vadd.f32 %v3131, %v3271
      %v3394 = vadd.f32 %v3180, %v3271
      %v3395 = vadd.f32 %v2840, %v3276
      %v3396 = vadd.f32 %v2889, %v3276
      %v3397 = vadd.f32 %v2938, %v3276
      %v3398 = vadd.f32 %v2987, %v3276
      %v3399 = vadd.f32 %v3036, %v3276
      %v3400 = vadd.f32 %v3085, %v3276
      %v3401 = vadd.f32 %v3134, %v3276
      %v3402 = vadd.f32 %v3183, %v3276
      %v3403 = vadd.f32 %v2842, %v3281
      %v3404 = vadd.f32 %v2891, %v3281
      %v3405 = vadd.f32 %v2940, %v3281
      %v3406 = vadd.f32 %v2989, %v3281
      %v3407 = vadd.f32 %v3038, %v3281
      %v3408 = vadd.f32 %v3087, %v3281
      %v3409 = vadd.f32 %v3136, %v3281
      %v3410 = vadd.f32 %v3185, %v3281
      %3411 = vst [vmem:[%s352] sm:$0xff] %v3283
      %3412 = vst [vmem:[%s352 + $0x8] sm:$0xff] %v3284
      %3413 = vst [vmem:[%s352 + $0x10] sm:$0xff] %v3285
      %3414 = vst [vmem:[%s352 + $0x18] sm:$0xff] %v3286
      %3415 = vst [vmem:[%s352 + $0x20] sm:$0xff] %v3287
      %3416 = vst [vmem:[%s352 + $0x28] sm:$0xff] %v3288
      %3417 = vst [vmem:[%s352 + $0x30] sm:$0xff] %v3289
      %3418 = vst [vmem:[%s352 + $0x38] sm:$0xff] %v3290
      %3419 = vst [vmem:[%s352 + $0x40] sm:$0xff] %v3291
      %3420 = vst [vmem:[%s352 + $0x48] sm:$0xff] %v3292
      %3421 = vst [vmem:[%s352 + $0x50] sm:$0xff] %v3293
      %3422 = vst [vmem:[%s352 + $0x58] sm:$0xff] %v3294
      %3423 = vst [vmem:[%s352 + $0x60] sm:$0xff] %v3295
      %3424 = vst [vmem:[%s352 + $0x68] sm:$0xff] %v3296
      %3425 = vst [vmem:[%s352 + $0x70] sm:$0xff] %v3297
      %3426 = vst [vmem:[%s352 + $0x78] sm:$0xff] %v3298
      %3427 = vst [vmem:[%s352 + $0x80] sm:$0xff] %v3299
      %3428 = vst [vmem:[%s352 + $0x88] sm:$0xff] %v3300
      %3429 = vst [vmem:[%s352 + $0x90] sm:$0xff] %v3301
      %3430 = vst [vmem:[%s352 + $0x98] sm:$0xff] %v3302
      %3431 = vst [vmem:[%s352 + $0xa0] sm:$0xff] %v3303
      %3432 = vst [vmem:[%s352 + $0xa8] sm:$0xff] %v3304
      %3433 = vst [vmem:[%s352 + $0xb0] sm:$0xff] %v3305
      %3434 = vst [vmem:[%s352 + $0xb8] sm:$0xff] %v3306
      %3435 = vst [vmem:[%s352 + $0xc0] sm:$0xff] %v3307
      %3436 = vst [vmem:[%s352 + $0xc8] sm:$0xff] %v3308
      %3437 = vst [vmem:[%s352 + $0xd0] sm:$0xff] %v3309
      %3438 = vst [vmem:[%s352 + $0xd8] sm:$0xff] %v3310
      %3439 = vst [vmem:[%s352 + $0xe0] sm:$0xff] %v3311
      %3440 = vst [vmem:[%s352 + $0xe8] sm:$0xff] %v3312
      %3441 = vst [vmem:[%s352 + $0xf0] sm:$0xff] %v3313
      %3442 = vst [vmem:[%s352 + $0xf8] sm:$0xff] %v3314
      %3443 = vst [vmem:[%s352 + $0x100] sm:$0xff] %v3315
      %3444 = vst [vmem:[%s352 + $0x108] sm:$0xff] %v3316
      %3445 = vst [vmem:[%s352 + $0x110] sm:$0xff] %v3317
      %3446 = vst [vmem:[%s352 + $0x118] sm:$0xff] %v3318
      %3447 = vst [vmem:[%s352 + $0x120] sm:$0xff] %v3319
      %3448 = vst [vmem:[%s352 + $0x128] sm:$0xff] %v3320
      %3449 = vst [vmem:[%s352 + $0x130] sm:$0xff] %v3321
      %3450 = vst [vmem:[%s352 + $0x138] sm:$0xff] %v3322
      %3451 = vst [vmem:[%s352 + $0x140] sm:$0xff] %v3323
      %3452 = vst [vmem:[%s352 + $0x148] sm:$0xff] %v3324
      %3453 = vst [vmem:[%s352 + $0x150] sm:$0xff] %v3325
      %3454 = vst [vmem:[%s352 + $0x158] sm:$0xff] %v3326
      %3455 = vst [vmem:[%s352 + $0x160] sm:$0xff] %v3327
      %3456 = vst [vmem:[%s352 + $0x168] sm:$0xff] %v3328
      %3457 = vst [vmem:[%s352 + $0x170] sm:$0xff] %v3329
      %3458 = vst [vmem:[%s352 + $0x178] sm:$0xff] %v3330
      %3459 = vst [vmem:[%s352 + $0x180] sm:$0xff] %v3331
      %3460 = vst [vmem:[%s352 + $0x188] sm:$0xff] %v3332
      %3461 = vst [vmem:[%s352 + $0x190] sm:$0xff] %v3333
      %3462 = vst [vmem:[%s352 + $0x198] sm:$0xff] %v3334
      %3463 = vst [vmem:[%s352 + $0x1a0] sm:$0xff] %v3335
      %3464 = vst [vmem:[%s352 + $0x1a8] sm:$0xff] %v3336
      %3465 = vst [vmem:[%s352 + $0x1b0] sm:$0xff] %v3337
      %3466 = vst [vmem:[%s352 + $0x1b8] sm:$0xff] %v3338
      %3467 = vst [vmem:[%s352 + $0x1c0] sm:$0xff] %v3339
      %3468 = vst [vmem:[%s352 + $0x1c8] sm:$0xff] %v3340
      %3469 = vst [vmem:[%s352 + $0x1d0] sm:$0xff] %v3341
      %3470 = vst [vmem:[%s352 + $0x1d8] sm:$0xff] %v3342
      %3471 = vst [vmem:[%s352 + $0x1e0] sm:$0xff] %v3343
      %3472 = vst [vmem:[%s352 + $0x1e8] sm:$0xff] %v3344
      %3473 = vst [vmem:[%s352 + $0x1f0] sm:$0xff] %v3345
      %3474 = vst [vmem:[%s352 + $0x1f8] sm:$0xff] %v3346
      %3475 = vst [vmem:[%s352 + $0x200] sm:$0xff] %v3347
      %3476 = vst [vmem:[%s352 + $0x208] sm:$0xff] %v3348
      %3477 = vst [vmem:[%s352 + $0x210] sm:$0xff] %v3349
      %3478 = vst [vmem:[%s352 + $0x218] sm:$0xff] %v3350
      %3479 = vst [vmem:[%s352 + $0x220] sm:$0xff] %v3351
      %3480 = vst [vmem:[%s352 + $0x228] sm:$0xff] %v3352
      %3481 = vst [vmem:[%s352 + $0x230] sm:$0xff] %v3353
      %3482 = vst [vmem:[%s352 + $0x238] sm:$0xff] %v3354
      %3483 = vst [vmem:[%s352 + $0x240] sm:$0xff] %v3355
      %3484 = vst [vmem:[%s352 + $0x248] sm:$0xff] %v3356
      %3485 = vst [vmem:[%s352 + $0x250] sm:$0xff] %v3357
      %3486 = vst [vmem:[%s352 + $0x258] sm:$0xff] %v3358
      %3487 = vst [vmem:[%s352 + $0x260] sm:$0xff] %v3359
      %3488 = vst [vmem:[%s352 + $0x268] sm:$0xff] %v3360
      %3489 = vst [vmem:[%s352 + $0x270] sm:$0xff] %v3361
      %3490 = vst [vmem:[%s352 + $0x278] sm:$0xff] %v3362
      %3491 = vst [vmem:[%s352 + $0x280] sm:$0xff] %v3363
      %3492 = vst [vmem:[%s352 + $0x288] sm:$0xff] %v3364
      %3493 = vst [vmem:[%s352 + $0x290] sm:$0xff] %v3365
      %3494 = vst [vmem:[%s352 + $0x298] sm:$0xff] %v3366
      %3495 = vst [vmem:[%s352 + $0x2a0] sm:$0xff] %v3367
      %3496 = vst [vmem:[%s352 + $0x2a8] sm:$0xff] %v3368
      %3497 = vst [vmem:[%s352 + $0x2b0] sm:$0xff] %v3369
      %3498 = vst [vmem:[%s352 + $0x2b8] sm:$0xff] %v3370
      %3499 = vst [vmem:[%s352 + $0x2c0] sm:$0xff] %v3371
      %3500 = vst [vmem:[%s352 + $0x2c8] sm:$0xff] %v3372
      %3501 = vst [vmem:[%s352 + $0x2d0] sm:$0xff] %v3373
      %3502 = vst [vmem:[%s352 + $0x2d8] sm:$0xff] %v3374
      %3503 = vst [vmem:[%s352 + $0x2e0] sm:$0xff] %v3375
      %3504 = vst [vmem:[%s352 + $0x2e8] sm:$0xff] %v3376
      %3505 = vst [vmem:[%s352 + $0x2f0] sm:$0xff] %v3377
      %3506 = vst [vmem:[%s352 + $0x2f8] sm:$0xff] %v3378
      %3507 = vst [vmem:[%s352 + $0x300] sm:$0xff] %v3379
      %3508 = vst [vmem:[%s352 + $0x308] sm:$0xff] %v3380
      %3509 = vst [vmem:[%s352 + $0x310] sm:$0xff] %v3381
      %3510 = vst [vmem:[%s352 + $0x318] sm:$0xff] %v3382
      %3511 = vst [vmem:[%s352 + $0x320] sm:$0xff] %v3383
      %3512 = vst [vmem:[%s352 + $0x328] sm:$0xff] %v3384
      %3513 = vst [vmem:[%s352 + $0x330] sm:$0xff] %v3385
      %3514 = vst [vmem:[%s352 + $0x338] sm:$0xff] %v3386
      %3515 = vst [vmem:[%s352 + $0x340] sm:$0xff] %v3387
      %3516 = vst [vmem:[%s352 + $0x348] sm:$0xff] %v3388
      %3517 = vst [vmem:[%s352 + $0x350] sm:$0xff] %v3389
      %3518 = vst [vmem:[%s352 + $0x358] sm:$0xff] %v3390
      %3519 = vst [vmem:[%s352 + $0x360] sm:$0xff] %v3391
      %3520 = vst [vmem:[%s352 + $0x368] sm:$0xff] %v3392
      %3521 = vst [vmem:[%s352 + $0x370] sm:$0xff] %v3393
      %3522 = vst [vmem:[%s352 + $0x378] sm:$0xff] %v3394
      %3523 = vst [vmem:[%s352 + $0x380] sm:$0xff] %v3395
      %3524 = vst [vmem:[%s352 + $0x388] sm:$0xff] %v3396
      %3525 = vst [vmem:[%s352 + $0x390] sm:$0xff] %v3397
      %3526 = vst [vmem:[%s352 + $0x398] sm:$0xff] %v3398
      %3527 = vst [vmem:[%s352 + $0x3a0] sm:$0xff] %v3399
      %3528 = vst [vmem:[%s352 + $0x3a8] sm:$0xff] %v3400
      %3529 = vst [vmem:[%s352 + $0x3b0] sm:$0xff] %v3401
      %3530 = vst [vmem:[%s352 + $0x3b8] sm:$0xff] %v3402
      %3531 = vst [vmem:[%s352 + $0x3c0] sm:$0xff] %v3403
      %3532 = vst [vmem:[%s352 + $0x3c8] sm:$0xff] %v3404
      %3533 = vst [vmem:[%s352 + $0x3d0] sm:$0xff] %v3405
      %3534 = vst [vmem:[%s352 + $0x3d8] sm:$0xff] %v3406
      %3535 = vst [vmem:[%s352 + $0x3e0] sm:$0xff] %v3407
      %3536 = vst [vmem:[%s352 + $0x3e8] sm:$0xff] %v3408
      %3537 = vst [vmem:[%s352 + $0x3f0] sm:$0xff] %v3409
      %3538 = vst [vmem:[%s352 + $0x3f8] sm:$0xff] %v3410
      %p3539 = scmp.lt.s32.totalorder %s20, 1
      %s3540 = scalar_select %p3539, %s20, 1
      %s3541 = smul.addr %s3540, 128
      %s3542 = smul.addr %s3541, 8
      %s3543 = scalar_lea.vmem %s9, %s3542
      // Predicated region
      $region57: #{cross_attention_pallas.1} parent=55 // pred_check
        %p3544 = pneg %p237
      $region58: #{cross_attention_pallas.1} parent=55 // pred_check_branch
        %3546 = sbr.rel (%p3544) target = $region60
      $region59: #{cross_attention_pallas.1} parent=55 // pred_region
        _
      $region60: #{cross_attention_pallas.1} parent=55 // pred_fallthru
        _
    $region56: #{cross_attention_pallas.1} parent=5 // pred_fallthru
      _
    %p3547 = scmp.le.s32.totalorder 2, %s15
    // Predicated region
    $region61: #{cross_attention_pallas.1} parent=5 // pred_check
      %p3548 = pneg %p3547
    $region62: #{cross_attention_pallas.1} parent=5 // pred_check_branch
      %3550 = sbr.rel (%p3548) target = $region64
    $region63: #{cross_attention_pallas.1} parent=5 // pred_region
      %s3551 = ssub.s32 %s15, 2
      // Predicated region
      $region65: #{cross_attention_pallas.1} parent=63 // pred_check
        %p3552 = pneg %p243
      $region66: #{cross_attention_pallas.1} parent=63 // pred_check_branch
        %3554 = sbr.rel (%p3552) target = $region68
      $region67: #{cross_attention_pallas.1} parent=63 // pred_region
        %p3555 = scmp.lt.s32.totalorder %s21, 1
        %s3556 = scalar_select %p3555, %s21, 1
        %s3557 = smul.addr %s3556, 128
        %s3558 = smul.addr %s3557, 8
        %s3559 = scalar_lea.vmem %s9, %s3558
      $region68: #{cross_attention_pallas.1} parent=63 // pred_fallthru
        _
    $region64: #{cross_attention_pallas.1} parent=5 // pred_fallthru
      _
  $region6: #{cross_attention_pallas.1} parent=0 // loop_footer
    %s19 = sadd.s32 1, %s15
  $region7: #{cross_attention_pallas.1} parent=0 // loop_footer_branch
    %14 = sbr.rel target = $region3
  $region8: #{cross_attention_pallas.1} parent=0 // loop_exit
    _

</llo_original>
